<compile_context>
chip_gen: v7x
topology: tpu7x:2x2x1
jax: 0.10.0
libtpu: 0.0.40
codegen_flags: <defaults>
</compile_context>

<pallas_src>
import functools

import jax
import jax.numpy as jnp
from jax.experimental import pallas as pl
from jax.experimental.pallas import tpu as pltpu

LRELU_SLOPE = 0.2  # assumption; original sub-module bodies are unavailable

# Tile-size caps (clamped down for small problems).
_TM_MAX = 256
_TN_MAX = 256
_TK_MAX = 512


def _round_up(x, m):
    return ((x + m - 1) // m) * m


# ----------------------------- Pallas kernel ------------------------------ #

def _matmul_bias_act_kernel(x_ref, w_ref, b_ref, o_ref, acc_ref, *, act, nk):
    k = pl.program_id(2)

    @pl.when(k == 0)
    def _init():
        acc_ref[...] = jnp.zeros_like(acc_ref)

    acc_ref[...] += jnp.dot(
        x_ref[...], w_ref[...], preferred_element_type=jnp.float32
    )

    @pl.when(k == nk - 1)
    def _finalize():
        acc = acc_ref[...] + b_ref[...]          # (1, TN) broadcasts over rows
        if act == "relu":
            acc = jnp.maximum(acc, 0.0)
        elif act == "lrelu":
            acc = jnp.where(acc > 0.0, acc, LRELU_SLOPE * acc)
        elif act == "tanh":
            acc = jnp.tanh(acc)
        o_ref[...] = acc.astype(o_ref.dtype)


def matmul_bias_act(x, w, b, act="none"):
    """y = act(x @ w + b). x:(M,K), w:(K,N) (already matmul layout), b:(N,).

    Tiled over (M, N, K) with a VMEM f32 accumulator; operands cast to bf16
    for the MXU. Inputs are zero-padded up to tile multiples so every block is
    (8,128)-aligned and the output store is lane-dense; result is sliced back.
    """
    M, K = x.shape
    K2, N = w.shape
    assert K == K2

    tm = min(_TM_MAX, _round_up(M, 8))
    tn = min(_TN_MAX, _round_up(N, 128))
    tk = min(_TK_MAX, _round_up(K, 128))
    Mp, Np, Kp = _round_up(M, tm), _round_up(N, tn), _round_up(K, tk)

    xp = x.astype(jnp.bfloat16)
    wp = w.astype(jnp.bfloat16)
    bp = b.astype(jnp.float32).reshape(1, N)
    if (Mp, Kp) != (M, K):
        xp = jnp.pad(xp, ((0, Mp - M), (0, Kp - K)))
    if (Kp, Np) != (K, N):
        wp = jnp.pad(wp, ((0, Kp - K), (0, Np - N)))
    if Np != N:
        bp = jnp.pad(bp, ((0, 0), (0, Np - N)))

    gm, gn, gk = Mp // tm, Np // tn, Kp // tk
    kern = functools.partial(_matmul_bias_act_kernel, act=act, nk=gk)

    out = pl.pallas_call(
        kern,
        out_shape=jax.ShapeDtypeStruct((Mp, Np), jnp.float32),
        grid_spec=pltpu.PrefetchScalarGridSpec(
            num_scalar_prefetch=0,
            grid=(gm, gn, gk),
            in_specs=[
                pl.BlockSpec((tm, tk), lambda i, j, k: (i, k)),
                pl.BlockSpec((tk, tn), lambda i, j, k: (k, j)),
                pl.BlockSpec((1, tn), lambda i, j, k: (0, j)),
            ],
            out_specs=pl.BlockSpec((tm, tn), lambda i, j, k: (i, j)),
            scratch_shapes=[pltpu.VMEM((tm, tn), jnp.float32)],
        ),
        compiler_params=pltpu.CompilerParams(
            dimension_semantics=("parallel", "parallel", "arbitrary"),
            vmem_limit_bytes=32 * 1024 * 1024,
        ),
        cost_estimate=pl.CostEstimate(
            flops=2 * Mp * Np * Kp,
            transcendentals=Mp * Np if act == "tanh" else 0,
            bytes_accessed=2 * (Mp * Kp + Kp * Np) + 4 * Mp * Np,
        ),
    )(xp, wp, bp)

    if (Mp, Np) != (M, N):
        out = out[:M, :N]
    return out


# --------------------- conv / deconv as matmul (NHWC) ---------------------- #

def conv2x2_s2(x, wm, b, act):
    """Conv2d(kernel=2, stride=2), NHWC. x:(B,H,W,Cin), wm:(4*Cin, Cout)."""
    B, H, W, Cin = x.shape
    Cout = wm.shape[1]
    oh, ow = H // 2, W // 2
    patches = x.reshape(B, oh, 2, ow, 2, Cin)
    patches = patches.transpose(0, 1, 3, 2, 4, 5).reshape(B * oh * ow, 4 * Cin)
    y = matmul_bias_act(patches, wm, b, act)
    return y.reshape(B, oh, ow, Cout)               # already channels-last


def deconv2x2_s2(x, wm, bm, act):
    """ConvTranspose2d(kernel=2, stride=2), NHWC.

    x:(B,H,W,Cin), wm:(Cin, 4*Cout) with columns ordered (kh, kw, Cout),
    bm:(4*Cout,) pre-expanded at init.
    """
    B, H, W, Cin = x.shape
    Cout = wm.shape[1] // 4
    xm = x.reshape(B * H * W, Cin)
    y = matmul_bias_act(xm, wm, bm, act)
    y = y.reshape(B, H, W, 2, 2, Cout).transpose(0, 1, 3, 2, 4, 5)
    return y.reshape(B, 2 * H, 2 * W, Cout)


# ------------------------------ sub-networks ------------------------------ #

def encoder(p, x):
    h = conv2x2_s2(x, p["e_w1"], p["e_b1"], "lrelu")
    h = conv2x2_s2(h, p["e_w2"], p["e_b2"], "lrelu")
    h = conv2x2_s2(h, p["e_w3"], p["e_b3"], "lrelu")
    h = h.reshape(h.shape[0], -1)                   # NHWC flatten (internal)
    return matmul_bias_act(h, p["e_fcw"], p["e_fcb"], "none")


def generator(p, z, dim, s):
    h = matmul_bias_act(z, p["g_fcw"], p["g_fcb"], "relu")
    h = h.reshape(z.shape[0], s // 8, s // 8, 4 * dim)   # NHWC feature map
    h = deconv2x2_s2(h, p["g_w1"], p["g_b1"], "relu")
    h = deconv2x2_s2(h, p["g_w2"], p["g_b2"], "relu")
    return deconv2x2_s2(h, p["g_w3"], p["g_b3"], "tanh")


def disc_extract_feature(p, x):
    h = conv2x2_s2(x, p["d_w1"], p["d_b1"], "lrelu")
    h = conv2x2_s2(h, p["d_w2"], p["d_b2"], "lrelu")
    h = conv2x2_s2(h, p["d_w3"], p["d_b3"], "lrelu")
    return h.reshape(h.shape[0], -1)


def fanogan_forward(p, x, dim, s):
    x_nhwc = jnp.transpose(x, (0, 2, 3, 1))               # one layout conversion
    code = encoder(p, x_nhwc)                              # netE(x)
    rec_nhwc = generator(p, code, dim, s)                  # netG(netE(x))
    d_input = jnp.concatenate([x_nhwc, rec_nhwc], axis=0)  # cat along batch
    feats = disc_extract_feature(p, d_input)               # netD.extract_feature
    B = x.shape[0]
    f_x, f_gx = feats[:B], feats[B:]                       # .chunk(2, 0)
    rec_image = jnp.transpose(rec_nhwc, (0, 3, 1, 2))      # back to NCHW
    return rec_image, f_x, f_gx


# --------------------------------- params ---------------------------------- #

def _conv_w_to_matmul(w):
    """(Cout,Cin,2,2) PyTorch conv weight -> (2*2*Cin, Cout), cols (kh,kw,ci)."""
    return jnp.transpose(w, (2, 3, 1, 0)).reshape(-1, w.shape[0])


def _deconv_w_to_matmul(w):
    """(Cin,Cout,2,2) PyTorch deconv weight -> (Cin, 2*2*Cout), cols (kh,kw,co)."""
    cin, cout = w.shape[0], w.shape[1]
    return jnp.transpose(w, (0, 2, 3, 1)).reshape(cin, 4 * cout)


def init_params(key, dim, nz, img_ch, s):
    """Deterministic init. Weights are converted to matmul layout ONCE here."""
    ks = jax.random.split(key, 16)
    sf = s // 8
    feat = 4 * dim * sf * sf

    def n(k, shape, scale=0.05):
        return scale * jax.random.normal(k, shape, dtype=jnp.float32)

    z = jnp.zeros
    p = {
        # Encoder (conv weights generated in PyTorch layout, stored matmul-ready)
        "e_w1": _conv_w_to_matmul(n(ks[0], (dim, img_ch, 2, 2))),
        "e_b1": z((dim,)),
        "e_w2": _conv_w_to_matmul(n(ks[1], (2 * dim, dim, 2, 2))),
        "e_b2": z((2 * dim,)),
        "e_w3": _conv_w_to_matmul(n(ks[2], (4 * dim, 2 * dim, 2, 2))),
        "e_b3": z((4 * dim,)),
        "e_fcw": n(ks[3], (nz, feat)).T,            # pre-transposed: (in, out)
        "e_fcb": z((nz,)),
        # Generator
        "g_fcw": n(ks[4], (feat, nz)).T,            # pre-transposed: (in, out)
        "g_fcb": z((feat,)),
        "g_w1": _deconv_w_to_matmul(n(ks[5], (4 * dim, 2 * dim, 2, 2))),
        "g_b1": jnp.tile(z((2 * dim,)), 4),         # bias pre-expanded at init
        "g_w2": _deconv_w_to_matmul(n(ks[6], (2 * dim, dim, 2, 2))),
        "g_b2": jnp.tile(z((dim,)), 4),
        "g_w3": _deconv_w_to_matmul(n(ks[7], (dim, img_ch, 2, 2))),
        "g_b3": jnp.tile(z((img_ch,)), 4),
        # Discriminator (feature extractor part)
        "d_w1": _conv_w_to_matmul(n(ks[8], (dim, img_ch, 2, 2))),
        "d_b1": z((dim,)),
        "d_w2": _conv_w_to_matmul(n(ks[9], (2 * dim, dim, 2, 2))),
        "d_b2": z((2 * dim,)),
        "d_w3": _conv_w_to_matmul(n(ks[10], (4 * dim, 2 * dim, 2, 2))),
        "d_b3": z((4 * dim,)),
    }
    return p


# ----------------------------------- main ----------------------------------- #

if __name__ == "__main__":
    B, IMG_CH, S = 2, 3, 16      # small stand-ins for (BATCH_SIZE, 3, DIM, DIM)
    DIM_SMALL, NZ = 8, 32        # small stand-ins for DIM=64, NOISE_SIZE=128

    key = jax.random.PRNGKey(0)
    kx, kp = jax.random.split(key)
    x = jax.random.normal(kx, (B, IMG_CH, S, S), dtype=jnp.float32)
    params = init_params(kp, DIM_SMALL, NZ, IMG_CH, S)

    fwd = jax.jit(functools.partial(fanogan_forward, dim=DIM_SMALL, s=S))
    rec_image, f_x, f_gx = fwd(params, x)
    jax.block_until_ready((rec_image, f_x, f_gx))

    assert rec_image.shape == (B, IMG_CH, S, S)
    feat_dim = 4 * DIM_SMALL * (S // 8) * (S // 8)
    assert f_x.shape == (B, feat_dim) and f_gx.shape == (B, feat_dim)
    assert bool(jnp.all(jnp.isfinite(rec_image)))
    print("KERNEL_OK")
</pallas_src>

<mosaic_0001>
module attributes {stable_mosaic.version = 11 : i64} {
  func.func @_matmul_bias_act_kernel(%arg0: i32, %arg1: i32, %arg2: i32, %arg3: memref<128x128xbf16, #tpu.memory_space<vmem>>, %arg4: memref<128x128xbf16, #tpu.memory_space<vmem>>, %arg5: memref<1x128xf32, #tpu.memory_space<vmem>>, %arg6: memref<128x128xf32, #tpu.memory_space<vmem>>, %arg7: memref<128x128xf32, #tpu.memory_space<vmem>>) attributes {dimension_semantics = [#tpu.dimension_semantics<parallel>, #tpu.dimension_semantics<parallel>, #tpu.dimension_semantics<arbitrary>], iteration_bounds = array<i64: 1, 1, 1>, scalar_prefetch = 0 : i64, scratch_operands = 1 : i64, tpu.core_type = #tpu.core_type<tc>, window_params = [{transform_indices = @transform_0, window_bounds = array<i64: 128, 128>}, {transform_indices = @transform_1, window_bounds = array<i64: 128, 128>}, {transform_indices = @transform_2, window_bounds = array<i64: 1, 128>}, {transform_indices = @transform_3, window_bounds = array<i64: 128, 128>}]} {
    %c0_i32 = arith.constant 0 : i32
    %0 = arith.cmpi eq, %arg2, %c0_i32 : i32
    %1 = arith.extui %0 : i1 to i32
    %c0_i32_0 = arith.constant 0 : i32
    %2 = arith.cmpi ne, %1, %c0_i32_0 : i32
    scf.if %2 {
      %cst_10 = arith.constant 0.000000e+00 : f32
      %12 = vector.broadcast %cst_10 : f32 to vector<128x128xf32>
      %c0_11 = arith.constant 0 : index
      %c0_12 = arith.constant 0 : index
      %13 = vector.load %arg7[%c0_11, %c0_12] : memref<128x128xf32, #tpu.memory_space<vmem>>, vector<128x128xf32>
      tpu.vector_store %arg7[%c0_11, %c0_12], %12 {strides = array<i32>} : memref<128x128xf32, #tpu.memory_space<vmem>>, vector<128x128xf32>,
    } else {
    }
    %c0 = arith.constant 0 : index
    %c0_1 = arith.constant 0 : index
    %3 = vector.load %arg7[%c0, %c0_1] : memref<128x128xf32, #tpu.memory_space<vmem>>, vector<128x128xf32>
    %c0_2 = arith.constant 0 : index
    %c0_3 = arith.constant 0 : index
    %4 = vector.load %arg3[%c0_2, %c0_3] : memref<128x128xbf16, #tpu.memory_space<vmem>>, vector<128x128xbf16>
    %c0_4 = arith.constant 0 : index
    %c0_5 = arith.constant 0 : index
    %5 = vector.load %arg4[%c0_4, %c0_5] : memref<128x128xbf16, #tpu.memory_space<vmem>>, vector<128x128xbf16>
    %cst = arith.constant dense<0.000000e+00> : vector<128x128xf32>
    %6 = tpu.matmul %4, %5, %cst {dimension_numbers = #tpu.dot_dimension_numbers<[1], [0], [0], [1], [0, 0, 1, 1], [], []>} : vector<128x128xbf16>, vector<128x128xbf16>, vector<128x128xf32> -> vector<128x128xf32>
    %7 = arith.addf %3, %6 : vector<128x128xf32>
    %c0_6 = arith.constant 0 : index
    %c0_7 = arith.constant 0 : index
    %8 = vector.load %arg7[%c0_6, %c0_7] : memref<128x128xf32, #tpu.memory_space<vmem>>, vector<128x128xf32>
    tpu.vector_store %arg7[%c0_6, %c0_7], %7 {strides = array<i32>} : memref<128x128xf32, #tpu.memory_space<vmem>>, vector<128x128xf32>,
    %c0_i32_8 = arith.constant 0 : i32
    %9 = arith.cmpi eq, %arg2, %c0_i32_8 : i32
    %10 = arith.extui %9 : i1 to i32
    %c0_i32_9 = arith.constant 0 : i32
    %11 = arith.cmpi ne, %10, %c0_i32_9 : i32
    scf.if %11 {
      %c0_10 = arith.constant 0 : index
      %c0_11 = arith.constant 0 : index
      %12 = vector.load %arg7[%c0_10, %c0_11] : memref<128x128xf32, #tpu.memory_space<vmem>>, vector<128x128xf32>
      %c0_12 = arith.constant 0 : index
      %c0_13 = arith.constant 0 : index
      %13 = vector.load %arg5[%c0_12, %c0_13] : memref<1x128xf32, #tpu.memory_space<vmem>>, vector<1x128xf32>
      %14 = vector.broadcast %13 : vector<1x128xf32> to vector<128x128xf32>
      %15 = arith.addf %12, %14 : vector<128x128xf32>
      %cst_14 = arith.constant 0.000000e+00 : f32
      %16 = vector.broadcast %cst_14 : f32 to vector<128x128xf32>
      %17 = arith.cmpf ogt, %15, %16 : vector<128x128xf32>
      %cst_15 = arith.constant 2.000000e-01 : f32
      %18 = vector.broadcast %cst_15 : f32 to vector<128x128xf32>
      %19 = arith.mulf %18, %15 : vector<128x128xf32>
      %20 = arith.select %17, %15, %19 : vector<128x128xi1>, vector<128x128xf32>
      %c0_16 = arith.constant 0 : index
      %c0_17 = arith.constant 0 : index
      %21 = vector.load %arg6[%c0_16, %c0_17] : memref<128x128xf32, #tpu.memory_space<vmem>>, vector<128x128xf32>
      tpu.vector_store %arg6[%c0_16, %c0_17], %20 {strides = array<i32>} : memref<128x128xf32, #tpu.memory_space<vmem>>, vector<128x128xf32>,
    } else {
    }
    return
  }
  func.func @transform_0(%arg0: i32, %arg1: i32, %arg2: i32) -> (i32, i32) {
    %c0_i32 = arith.constant 0 : i32
    return %arg0, %arg2 : i32, i32
  }
  func.func @transform_1(%arg0: i32, %arg1: i32, %arg2: i32) -> (i32, i32) {
    %c0_i32 = arith.constant 0 : i32
    return %arg2, %arg1 : i32, i32
  }
  func.func @transform_2(%arg0: i32, %arg1: i32, %arg2: i32) -> (i32, i32) {
    %c0_i32 = arith.constant 0 : i32
    %c0_i32_0 = arith.constant 0 : i32
    return %c0_i32, %arg1 : i32, i32
  }
  func.func @transform_3(%arg0: i32, %arg1: i32, %arg2: i32) -> (i32, i32) {
    %c0_i32 = arith.constant 0 : i32
    return %arg0, %arg1 : i32, i32
  }
}

module attributes {stable_mosaic.version = 11 : i64} {
  func.func @_matmul_bias_act_kernel(%arg0: i32, %arg1: i32, %arg2: i32, %arg3: memref<32x128xbf16, #tpu.memory_space<vmem>>, %arg4: memref<128x128xbf16, #tpu.memory_space<vmem>>, %arg5: memref<1x128xf32, #tpu.memory_space<vmem>>, %arg6: memref<32x128xf32, #tpu.memory_space<vmem>>, %arg7: memref<32x128xf32, #tpu.memory_space<vmem>>) attributes {dimension_semantics = [#tpu.dimension_semantics<parallel>, #tpu.dimension_semantics<parallel>, #tpu.dimension_semantics<arbitrary>], iteration_bounds = array<i64: 1, 1, 1>, scalar_prefetch = 0 : i64, scratch_operands = 1 : i64, tpu.core_type = #tpu.core_type<tc>, window_params = [{transform_indices = @transform_0, window_bounds = array<i64: 32, 128>}, {transform_indices = @transform_1, window_bounds = array<i64: 128, 128>}, {transform_indices = @transform_2, window_bounds = array<i64: 1, 128>}, {transform_indices = @transform_3, window_bounds = array<i64: 32, 128>}]} {
    %c0_i32 = arith.constant 0 : i32
    %0 = arith.cmpi eq, %arg2, %c0_i32 : i32
    %1 = arith.extui %0 : i1 to i32
    %c0_i32_0 = arith.constant 0 : i32
    %2 = arith.cmpi ne, %1, %c0_i32_0 : i32
    scf.if %2 {
      %cst_10 = arith.constant 0.000000e+00 : f32
      %12 = vector.broadcast %cst_10 : f32 to vector<32x128xf32>
      %c0_11 = arith.constant 0 : index
      %c0_12 = arith.constant 0 : index
      %13 = vector.load %arg7[%c0_11, %c0_12] : memref<32x128xf32, #tpu.memory_space<vmem>>, vector<32x128xf32>
      tpu.vector_store %arg7[%c0_11, %c0_12], %12 {strides = array<i32>} : memref<32x128xf32, #tpu.memory_space<vmem>>, vector<32x128xf32>,
    } else {
    }
    %c0 = arith.constant 0 : index
    %c0_1 = arith.constant 0 : index
    %3 = vector.load %arg7[%c0, %c0_1] : memref<32x128xf32, #tpu.memory_space<vmem>>, vector<32x128xf32>
    %c0_2 = arith.constant 0 : index
    %c0_3 = arith.constant 0 : index
    %4 = vector.load %arg3[%c0_2, %c0_3] : memref<32x128xbf16, #tpu.memory_space<vmem>>, vector<32x128xbf16>
    %c0_4 = arith.constant 0 : index
    %c0_5 = arith.constant 0 : index
    %5 = vector.load %arg4[%c0_4, %c0_5] : memref<128x128xbf16, #tpu.memory_space<vmem>>, vector<128x128xbf16>
    %cst = arith.constant dense<0.000000e+00> : vector<32x128xf32>
    %6 = tpu.matmul %4, %5, %cst {dimension_numbers = #tpu.dot_dimension_numbers<[1], [0], [0], [1], [0, 0, 1, 1], [], []>} : vector<32x128xbf16>, vector<128x128xbf16>, vector<32x128xf32> -> vector<32x128xf32>
    %7 = arith.addf %3, %6 : vector<32x128xf32>
    %c0_6 = arith.constant 0 : index
    %c0_7 = arith.constant 0 : index
    %8 = vector.load %arg7[%c0_6, %c0_7] : memref<32x128xf32, #tpu.memory_space<vmem>>, vector<32x128xf32>
    tpu.vector_store %arg7[%c0_6, %c0_7], %7 {strides = array<i32>} : memref<32x128xf32, #tpu.memory_space<vmem>>, vector<32x128xf32>,
    %c0_i32_8 = arith.constant 0 : i32
    %9 = arith.cmpi eq, %arg2, %c0_i32_8 : i32
    %10 = arith.extui %9 : i1 to i32
    %c0_i32_9 = arith.constant 0 : i32
    %11 = arith.cmpi ne, %10, %c0_i32_9 : i32
    scf.if %11 {
      %c0_10 = arith.constant 0 : index
      %c0_11 = arith.constant 0 : index
      %12 = vector.load %arg7[%c0_10, %c0_11] : memref<32x128xf32, #tpu.memory_space<vmem>>, vector<32x128xf32>
      %c0_12 = arith.constant 0 : index
      %c0_13 = arith.constant 0 : index
      %13 = vector.load %arg5[%c0_12, %c0_13] : memref<1x128xf32, #tpu.memory_space<vmem>>, vector<1x128xf32>
      %14 = vector.broadcast %13 : vector<1x128xf32> to vector<32x128xf32>
      %15 = arith.addf %12, %14 : vector<32x128xf32>
      %cst_14 = arith.constant 0.000000e+00 : f32
      %16 = vector.broadcast %cst_14 : f32 to vector<32x128xf32>
      %17 = arith.cmpf ogt, %15, %16 : vector<32x128xf32>
      %cst_15 = arith.constant 2.000000e-01 : f32
      %18 = vector.broadcast %cst_15 : f32 to vector<32x128xf32>
      %19 = arith.mulf %18, %15 : vector<32x128xf32>
      %20 = arith.select %17, %15, %19 : vector<32x128xi1>, vector<32x128xf32>
      %c0_16 = arith.constant 0 : index
      %c0_17 = arith.constant 0 : index
      %21 = vector.load %arg6[%c0_16, %c0_17] : memref<32x128xf32, #tpu.memory_space<vmem>>, vector<32x128xf32>
      tpu.vector_store %arg6[%c0_16, %c0_17], %20 {strides = array<i32>} : memref<32x128xf32, #tpu.memory_space<vmem>>, vector<32x128xf32>,
    } else {
    }
    return
  }
  func.func @transform_0(%arg0: i32, %arg1: i32, %arg2: i32) -> (i32, i32) {
    %c0_i32 = arith.constant 0 : i32
    return %arg0, %arg2 : i32, i32
  }
  func.func @transform_1(%arg0: i32, %arg1: i32, %arg2: i32) -> (i32, i32) {
    %c0_i32 = arith.constant 0 : i32
    return %arg2, %arg1 : i32, i32
  }
  func.func @transform_2(%arg0: i32, %arg1: i32, %arg2: i32) -> (i32, i32) {
    %c0_i32 = arith.constant 0 : i32
    %c0_i32_0 = arith.constant 0 : i32
    return %c0_i32, %arg1 : i32, i32
  }
  func.func @transform_3(%arg0: i32, %arg1: i32, %arg2: i32) -> (i32, i32) {
    %c0_i32 = arith.constant 0 : i32
    return %arg0, %arg1 : i32, i32
  }
}

module attributes {stable_mosaic.version = 11 : i64} {
  func.func @_matmul_bias_act_kernel(%arg0: i32, %arg1: i32, %arg2: i32, %arg3: memref<8x128xbf16, #tpu.memory_space<vmem>>, %arg4: memref<128x128xbf16, #tpu.memory_space<vmem>>, %arg5: memref<1x128xf32, #tpu.memory_space<vmem>>, %arg6: memref<8x128xf32, #tpu.memory_space<vmem>>, %arg7: memref<8x128xf32, #tpu.memory_space<vmem>>) attributes {dimension_semantics = [#tpu.dimension_semantics<parallel>, #tpu.dimension_semantics<parallel>, #tpu.dimension_semantics<arbitrary>], iteration_bounds = array<i64: 1, 1, 1>, scalar_prefetch = 0 : i64, scratch_operands = 1 : i64, tpu.core_type = #tpu.core_type<tc>, window_params = [{transform_indices = @transform_0, window_bounds = array<i64: 8, 128>}, {transform_indices = @transform_1, window_bounds = array<i64: 128, 128>}, {transform_indices = @transform_2, window_bounds = array<i64: 1, 128>}, {transform_indices = @transform_3, window_bounds = array<i64: 8, 128>}]} {
    %c0_i32 = arith.constant 0 : i32
    %0 = arith.cmpi eq, %arg2, %c0_i32 : i32
    %1 = arith.extui %0 : i1 to i32
    %c0_i32_0 = arith.constant 0 : i32
    %2 = arith.cmpi ne, %1, %c0_i32_0 : i32
    scf.if %2 {
      %cst_10 = arith.constant 0.000000e+00 : f32
      %12 = vector.broadcast %cst_10 : f32 to vector<8x128xf32>
      %c0_11 = arith.constant 0 : index
      %c0_12 = arith.constant 0 : index
      %13 = vector.load %arg7[%c0_11, %c0_12] : memref<8x128xf32, #tpu.memory_space<vmem>>, vector<8x128xf32>
      tpu.vector_store %arg7[%c0_11, %c0_12], %12 {strides = array<i32>} : memref<8x128xf32, #tpu.memory_space<vmem>>, vector<8x128xf32>,
    } else {
    }
    %c0 = arith.constant 0 : index
    %c0_1 = arith.constant 0 : index
    %3 = vector.load %arg7[%c0, %c0_1] : memref<8x128xf32, #tpu.memory_space<vmem>>, vector<8x128xf32>
    %c0_2 = arith.constant 0 : index
    %c0_3 = arith.constant 0 : index
    %4 = vector.load %arg3[%c0_2, %c0_3] : memref<8x128xbf16, #tpu.memory_space<vmem>>, vector<8x128xbf16>
    %c0_4 = arith.constant 0 : index
    %c0_5 = arith.constant 0 : index
    %5 = vector.load %arg4[%c0_4, %c0_5] : memref<128x128xbf16, #tpu.memory_space<vmem>>, vector<128x128xbf16>
    %cst = arith.constant dense<0.000000e+00> : vector<8x128xf32>
    %6 = tpu.matmul %4, %5, %cst {dimension_numbers = #tpu.dot_dimension_numbers<[1], [0], [0], [1], [0, 0, 1, 1], [], []>} : vector<8x128xbf16>, vector<128x128xbf16>, vector<8x128xf32> -> vector<8x128xf32>
    %7 = arith.addf %3, %6 : vector<8x128xf32>
    %c0_6 = arith.constant 0 : index
    %c0_7 = arith.constant 0 : index
    %8 = vector.load %arg7[%c0_6, %c0_7] : memref<8x128xf32, #tpu.memory_space<vmem>>, vector<8x128xf32>
    tpu.vector_store %arg7[%c0_6, %c0_7], %7 {strides = array<i32>} : memref<8x128xf32, #tpu.memory_space<vmem>>, vector<8x128xf32>,
    %c0_i32_8 = arith.constant 0 : i32
    %9 = arith.cmpi eq, %arg2, %c0_i32_8 : i32
    %10 = arith.extui %9 : i1 to i32
    %c0_i32_9 = arith.constant 0 : i32
    %11 = arith.cmpi ne, %10, %c0_i32_9 : i32
    scf.if %11 {
      %c0_10 = arith.constant 0 : index
      %c0_11 = arith.constant 0 : index
      %12 = vector.load %arg7[%c0_10, %c0_11] : memref<8x128xf32, #tpu.memory_space<vmem>>, vector<8x128xf32>
      %c0_12 = arith.constant 0 : index
      %c0_13 = arith.constant 0 : index
      %13 = vector.load %arg5[%c0_12, %c0_13] : memref<1x128xf32, #tpu.memory_space<vmem>>, vector<1x128xf32>
      %14 = vector.broadcast %13 : vector<1x128xf32> to vector<8x128xf32>
      %15 = arith.addf %12, %14 : vector<8x128xf32>
      %cst_14 = arith.constant 0.000000e+00 : f32
      %16 = vector.broadcast %cst_14 : f32 to vector<8x128xf32>
      %17 = arith.cmpf ogt, %15, %16 : vector<8x128xf32>
      %cst_15 = arith.constant 2.000000e-01 : f32
      %18 = vector.broadcast %cst_15 : f32 to vector<8x128xf32>
      %19 = arith.mulf %18, %15 : vector<8x128xf32>
      %20 = arith.select %17, %15, %19 : vector<8x128xi1>, vector<8x128xf32>
      %c0_16 = arith.constant 0 : index
      %c0_17 = arith.constant 0 : index
      %21 = vector.load %arg6[%c0_16, %c0_17] : memref<8x128xf32, #tpu.memory_space<vmem>>, vector<8x128xf32>
      tpu.vector_store %arg6[%c0_16, %c0_17], %20 {strides = array<i32>} : memref<8x128xf32, #tpu.memory_space<vmem>>, vector<8x128xf32>,
    } else {
    }
    return
  }
  func.func @transform_0(%arg0: i32, %arg1: i32, %arg2: i32) -> (i32, i32) {
    %c0_i32 = arith.constant 0 : i32
    return %arg0, %arg2 : i32, i32
  }
  func.func @transform_1(%arg0: i32, %arg1: i32, %arg2: i32) -> (i32, i32) {
    %c0_i32 = arith.constant 0 : i32
    return %arg2, %arg1 : i32, i32
  }
  func.func @transform_2(%arg0: i32, %arg1: i32, %arg2: i32) -> (i32, i32) {
    %c0_i32 = arith.constant 0 : i32
    %c0_i32_0 = arith.constant 0 : i32
    return %c0_i32, %arg1 : i32, i32
  }
  func.func @transform_3(%arg0: i32, %arg1: i32, %arg2: i32) -> (i32, i32) {
    %c0_i32 = arith.constant 0 : i32
    return %arg0, %arg1 : i32, i32
  }
}

module attributes {stable_mosaic.version = 11 : i64} {
  func.func @_matmul_bias_act_kernel(%arg0: i32, %arg1: i32, %arg2: i32, %arg3: memref<8x128xbf16, #tpu.memory_space<vmem>>, %arg4: memref<128x128xbf16, #tpu.memory_space<vmem>>, %arg5: memref<1x128xf32, #tpu.memory_space<vmem>>, %arg6: memref<8x128xf32, #tpu.memory_space<vmem>>, %arg7: memref<8x128xf32, #tpu.memory_space<vmem>>) attributes {dimension_semantics = [#tpu.dimension_semantics<parallel>, #tpu.dimension_semantics<parallel>, #tpu.dimension_semantics<arbitrary>], iteration_bounds = array<i64: 1, 1, 1>, scalar_prefetch = 0 : i64, scratch_operands = 1 : i64, tpu.core_type = #tpu.core_type<tc>, window_params = [{transform_indices = @transform_0, window_bounds = array<i64: 8, 128>}, {transform_indices = @transform_1, window_bounds = array<i64: 128, 128>}, {transform_indices = @transform_2, window_bounds = array<i64: 1, 128>}, {transform_indices = @transform_3, window_bounds = array<i64: 8, 128>}]} {
    %c0_i32 = arith.constant 0 : i32
    %0 = arith.cmpi eq, %arg2, %c0_i32 : i32
    %1 = arith.extui %0 : i1 to i32
    %c0_i32_0 = arith.constant 0 : i32
    %2 = arith.cmpi ne, %1, %c0_i32_0 : i32
    scf.if %2 {
      %cst_10 = arith.constant 0.000000e+00 : f32
      %12 = vector.broadcast %cst_10 : f32 to vector<8x128xf32>
      %c0_11 = arith.constant 0 : index
      %c0_12 = arith.constant 0 : index
      %13 = vector.load %arg7[%c0_11, %c0_12] : memref<8x128xf32, #tpu.memory_space<vmem>>, vector<8x128xf32>
      tpu.vector_store %arg7[%c0_11, %c0_12], %12 {strides = array<i32>} : memref<8x128xf32, #tpu.memory_space<vmem>>, vector<8x128xf32>,
    } else {
    }
    %c0 = arith.constant 0 : index
    %c0_1 = arith.constant 0 : index
    %3 = vector.load %arg7[%c0, %c0_1] : memref<8x128xf32, #tpu.memory_space<vmem>>, vector<8x128xf32>
    %c0_2 = arith.constant 0 : index
    %c0_3 = arith.constant 0 : index
    %4 = vector.load %arg3[%c0_2, %c0_3] : memref<8x128xbf16, #tpu.memory_space<vmem>>, vector<8x128xbf16>
    %c0_4 = arith.constant 0 : index
    %c0_5 = arith.constant 0 : index
    %5 = vector.load %arg4[%c0_4, %c0_5] : memref<128x128xbf16, #tpu.memory_space<vmem>>, vector<128x128xbf16>
    %cst = arith.constant dense<0.000000e+00> : vector<8x128xf32>
    %6 = tpu.matmul %4, %5, %cst {dimension_numbers = #tpu.dot_dimension_numbers<[1], [0], [0], [1], [0, 0, 1, 1], [], []>} : vector<8x128xbf16>, vector<128x128xbf16>, vector<8x128xf32> -> vector<8x128xf32>
    %7 = arith.addf %3, %6 : vector<8x128xf32>
    %c0_6 = arith.constant 0 : index
    %c0_7 = arith.constant 0 : index
    %8 = vector.load %arg7[%c0_6, %c0_7] : memref<8x128xf32, #tpu.memory_space<vmem>>, vector<8x128xf32>
    tpu.vector_store %arg7[%c0_6, %c0_7], %7 {strides = array<i32>} : memref<8x128xf32, #tpu.memory_space<vmem>>, vector<8x128xf32>,
    %c0_i32_8 = arith.constant 0 : i32
    %9 = arith.cmpi eq, %arg2, %c0_i32_8 : i32
    %10 = arith.extui %9 : i1 to i32
    %c0_i32_9 = arith.constant 0 : i32
    %11 = arith.cmpi ne, %10, %c0_i32_9 : i32
    scf.if %11 {
      %c0_10 = arith.constant 0 : index
      %c0_11 = arith.constant 0 : index
      %12 = vector.load %arg7[%c0_10, %c0_11] : memref<8x128xf32, #tpu.memory_space<vmem>>, vector<8x128xf32>
      %c0_12 = arith.constant 0 : index
      %c0_13 = arith.constant 0 : index
      %13 = vector.load %arg5[%c0_12, %c0_13] : memref<1x128xf32, #tpu.memory_space<vmem>>, vector<1x128xf32>
      %14 = vector.broadcast %13 : vector<1x128xf32> to vector<8x128xf32>
      %15 = arith.addf %12, %14 : vector<8x128xf32>
      %c0_14 = arith.constant 0 : index
      %c0_15 = arith.constant 0 : index
      %16 = vector.load %arg6[%c0_14, %c0_15] : memref<8x128xf32, #tpu.memory_space<vmem>>, vector<8x128xf32>
      tpu.vector_store %arg6[%c0_14, %c0_15], %15 {strides = array<i32>} : memref<8x128xf32, #tpu.memory_space<vmem>>, vector<8x128xf32>,
    } else {
    }
    return
  }
  func.func @transform_0(%arg0: i32, %arg1: i32, %arg2: i32) -> (i32, i32) {
    %c0_i32 = arith.constant 0 : i32
    return %arg0, %arg2 : i32, i32
  }
  func.func @transform_1(%arg0: i32, %arg1: i32, %arg2: i32) -> (i32, i32) {
    %c0_i32 = arith.constant 0 : i32
    return %arg2, %arg1 : i32, i32
  }
  func.func @transform_2(%arg0: i32, %arg1: i32, %arg2: i32) -> (i32, i32) {
    %c0_i32 = arith.constant 0 : i32
    %c0_i32_0 = arith.constant 0 : i32
    return %c0_i32, %arg1 : i32, i32
  }
  func.func @transform_3(%arg0: i32, %arg1: i32, %arg2: i32) -> (i32, i32) {
    %c0_i32 = arith.constant 0 : i32
    return %arg0, %arg1 : i32, i32
  }
}

module attributes {stable_mosaic.version = 11 : i64} {
  func.func @_matmul_bias_act_kernel(%arg0: i32, %arg1: i32, %arg2: i32, %arg3: memref<8x128xbf16, #tpu.memory_space<vmem>>, %arg4: memref<128x128xbf16, #tpu.memory_space<vmem>>, %arg5: memref<1x128xf32, #tpu.memory_space<vmem>>, %arg6: memref<8x128xf32, #tpu.memory_space<vmem>>, %arg7: memref<8x128xf32, #tpu.memory_space<vmem>>) attributes {dimension_semantics = [#tpu.dimension_semantics<parallel>, #tpu.dimension_semantics<parallel>, #tpu.dimension_semantics<arbitrary>], iteration_bounds = array<i64: 1, 1, 1>, scalar_prefetch = 0 : i64, scratch_operands = 1 : i64, tpu.core_type = #tpu.core_type<tc>, window_params = [{transform_indices = @transform_0, window_bounds = array<i64: 8, 128>}, {transform_indices = @transform_1, window_bounds = array<i64: 128, 128>}, {transform_indices = @transform_2, window_bounds = array<i64: 1, 128>}, {transform_indices = @transform_3, window_bounds = array<i64: 8, 128>}]} {
    %c0_i32 = arith.constant 0 : i32
    %0 = arith.cmpi eq, %arg2, %c0_i32 : i32
    %1 = arith.extui %0 : i1 to i32
    %c0_i32_0 = arith.constant 0 : i32
    %2 = arith.cmpi ne, %1, %c0_i32_0 : i32
    scf.if %2 {
      %cst_10 = arith.constant 0.000000e+00 : f32
      %12 = vector.broadcast %cst_10 : f32 to vector<8x128xf32>
      %c0_11 = arith.constant 0 : index
      %c0_12 = arith.constant 0 : index
      %13 = vector.load %arg7[%c0_11, %c0_12] : memref<8x128xf32, #tpu.memory_space<vmem>>, vector<8x128xf32>
      tpu.vector_store %arg7[%c0_11, %c0_12], %12 {strides = array<i32>} : memref<8x128xf32, #tpu.memory_space<vmem>>, vector<8x128xf32>,
    } else {
    }
    %c0 = arith.constant 0 : index
    %c0_1 = arith.constant 0 : index
    %3 = vector.load %arg7[%c0, %c0_1] : memref<8x128xf32, #tpu.memory_space<vmem>>, vector<8x128xf32>
    %c0_2 = arith.constant 0 : index
    %c0_3 = arith.constant 0 : index
    %4 = vector.load %arg3[%c0_2, %c0_3] : memref<8x128xbf16, #tpu.memory_space<vmem>>, vector<8x128xbf16>
    %c0_4 = arith.constant 0 : index
    %c0_5 = arith.constant 0 : index
    %5 = vector.load %arg4[%c0_4, %c0_5] : memref<128x128xbf16, #tpu.memory_space<vmem>>, vector<128x128xbf16>
    %cst = arith.constant dense<0.000000e+00> : vector<8x128xf32>
    %6 = tpu.matmul %4, %5, %cst {dimension_numbers = #tpu.dot_dimension_numbers<[1], [0], [0], [1], [0, 0, 1, 1], [], []>} : vector<8x128xbf16>, vector<128x128xbf16>, vector<8x128xf32> -> vector<8x128xf32>
    %7 = arith.addf %3, %6 : vector<8x128xf32>
    %c0_6 = arith.constant 0 : index
    %c0_7 = arith.constant 0 : index
    %8 = vector.load %arg7[%c0_6, %c0_7] : memref<8x128xf32, #tpu.memory_space<vmem>>, vector<8x128xf32>
    tpu.vector_store %arg7[%c0_6, %c0_7], %7 {strides = array<i32>} : memref<8x128xf32, #tpu.memory_space<vmem>>, vector<8x128xf32>,
    %c0_i32_8 = arith.constant 0 : i32
    %9 = arith.cmpi eq, %arg2, %c0_i32_8 : i32
    %10 = arith.extui %9 : i1 to i32
    %c0_i32_9 = arith.constant 0 : i32
    %11 = arith.cmpi ne, %10, %c0_i32_9 : i32
    scf.if %11 {
      %c0_10 = arith.constant 0 : index
      %c0_11 = arith.constant 0 : index
      %12 = vector.load %arg7[%c0_10, %c0_11] : memref<8x128xf32, #tpu.memory_space<vmem>>, vector<8x128xf32>
      %c0_12 = arith.constant 0 : index
      %c0_13 = arith.constant 0 : index
      %13 = vector.load %arg5[%c0_12, %c0_13] : memref<1x128xf32, #tpu.memory_space<vmem>>, vector<1x128xf32>
      %14 = vector.broadcast %13 : vector<1x128xf32> to vector<8x128xf32>
      %15 = arith.addf %12, %14 : vector<8x128xf32>
      %cst_14 = arith.constant 0.000000e+00 : f32
      %16 = vector.broadcast %cst_14 : f32 to vector<8x128xf32>
      %17 = arith.maximumf %15, %16 : vector<8x128xf32>
      %c0_15 = arith.constant 0 : index
      %c0_16 = arith.constant 0 : index
      %18 = vector.load %arg6[%c0_15, %c0_16] : memref<8x128xf32, #tpu.memory_space<vmem>>, vector<8x128xf32>
      tpu.vector_store %arg6[%c0_15, %c0_16], %17 {strides = array<i32>} : memref<8x128xf32, #tpu.memory_space<vmem>>, vector<8x128xf32>,
    } else {
    }
    return
  }
  func.func @transform_0(%arg0: i32, %arg1: i32, %arg2: i32) -> (i32, i32) {
    %c0_i32 = arith.constant 0 : i32
    return %arg0, %arg2 : i32, i32
  }
  func.func @transform_1(%arg0: i32, %arg1: i32, %arg2: i32) -> (i32, i32) {
    %c0_i32 = arith.constant 0 : i32
    return %arg2, %arg1 : i32, i32
  }
  func.func @transform_2(%arg0: i32, %arg1: i32, %arg2: i32) -> (i32, i32) {
    %c0_i32 = arith.constant 0 : i32
    %c0_i32_0 = arith.constant 0 : i32
    return %c0_i32, %arg1 : i32, i32
  }
  func.func @transform_3(%arg0: i32, %arg1: i32, %arg2: i32) -> (i32, i32) {
    %c0_i32 = arith.constant 0 : i32
    return %arg0, %arg1 : i32, i32
  }
}

module attributes {stable_mosaic.version = 11 : i64} {
  func.func @_matmul_bias_act_kernel(%arg0: i32, %arg1: i32, %arg2: i32, %arg3: memref<32x128xbf16, #tpu.memory_space<vmem>>, %arg4: memref<128x128xbf16, #tpu.memory_space<vmem>>, %arg5: memref<1x128xf32, #tpu.memory_space<vmem>>, %arg6: memref<32x128xf32, #tpu.memory_space<vmem>>, %arg7: memref<32x128xf32, #tpu.memory_space<vmem>>) attributes {dimension_semantics = [#tpu.dimension_semantics<parallel>, #tpu.dimension_semantics<parallel>, #tpu.dimension_semantics<arbitrary>], iteration_bounds = array<i64: 1, 1, 1>, scalar_prefetch = 0 : i64, scratch_operands = 1 : i64, tpu.core_type = #tpu.core_type<tc>, window_params = [{transform_indices = @transform_0, window_bounds = array<i64: 32, 128>}, {transform_indices = @transform_1, window_bounds = array<i64: 128, 128>}, {transform_indices = @transform_2, window_bounds = array<i64: 1, 128>}, {transform_indices = @transform_3, window_bounds = array<i64: 32, 128>}]} {
    %c0_i32 = arith.constant 0 : i32
    %0 = arith.cmpi eq, %arg2, %c0_i32 : i32
    %1 = arith.extui %0 : i1 to i32
    %c0_i32_0 = arith.constant 0 : i32
    %2 = arith.cmpi ne, %1, %c0_i32_0 : i32
    scf.if %2 {
      %cst_10 = arith.constant 0.000000e+00 : f32
      %12 = vector.broadcast %cst_10 : f32 to vector<32x128xf32>
      %c0_11 = arith.constant 0 : index
      %c0_12 = arith.constant 0 : index
      %13 = vector.load %arg7[%c0_11, %c0_12] : memref<32x128xf32, #tpu.memory_space<vmem>>, vector<32x128xf32>
      tpu.vector_store %arg7[%c0_11, %c0_12], %12 {strides = array<i32>} : memref<32x128xf32, #tpu.memory_space<vmem>>, vector<32x128xf32>,
    } else {
    }
    %c0 = arith.constant 0 : index
    %c0_1 = arith.constant 0 : index
    %3 = vector.load %arg7[%c0, %c0_1] : memref<32x128xf32, #tpu.memory_space<vmem>>, vector<32x128xf32>
    %c0_2 = arith.constant 0 : index
    %c0_3 = arith.constant 0 : index
    %4 = vector.load %arg3[%c0_2, %c0_3] : memref<32x128xbf16, #tpu.memory_space<vmem>>, vector<32x128xbf16>
    %c0_4 = arith.constant 0 : index
    %c0_5 = arith.constant 0 : index
    %5 = vector.load %arg4[%c0_4, %c0_5] : memref<128x128xbf16, #tpu.memory_space<vmem>>, vector<128x128xbf16>
    %cst = arith.constant dense<0.000000e+00> : vector<32x128xf32>
    %6 = tpu.matmul %4, %5, %cst {dimension_numbers = #tpu.dot_dimension_numbers<[1], [0], [0], [1], [0, 0, 1, 1], [], []>} : vector<32x128xbf16>, vector<128x128xbf16>, vector<32x128xf32> -> vector<32x128xf32>
    %7 = arith.addf %3, %6 : vector<32x128xf32>
    %c0_6 = arith.constant 0 : index
    %c0_7 = arith.constant 0 : index
    %8 = vector.load %arg7[%c0_6, %c0_7] : memref<32x128xf32, #tpu.memory_space<vmem>>, vector<32x128xf32>
    tpu.vector_store %arg7[%c0_6, %c0_7], %7 {strides = array<i32>} : memref<32x128xf32, #tpu.memory_space<vmem>>, vector<32x128xf32>,
    %c0_i32_8 = arith.constant 0 : i32
    %9 = arith.cmpi eq, %arg2, %c0_i32_8 : i32
    %10 = arith.extui %9 : i1 to i32
    %c0_i32_9 = arith.constant 0 : i32
    %11 = arith.cmpi ne, %10, %c0_i32_9 : i32
    scf.if %11 {
      %c0_10 = arith.constant 0 : index
      %c0_11 = arith.constant 0 : index
      %12 = vector.load %arg7[%c0_10, %c0_11] : memref<32x128xf32, #tpu.memory_space<vmem>>, vector<32x128xf32>
      %c0_12 = arith.constant 0 : index
      %c0_13 = arith.constant 0 : index
      %13 = vector.load %arg5[%c0_12, %c0_13] : memref<1x128xf32, #tpu.memory_space<vmem>>, vector<1x128xf32>
      %14 = vector.broadcast %13 : vector<1x128xf32> to vector<32x128xf32>
      %15 = arith.addf %12, %14 : vector<32x128xf32>
      %cst_14 = arith.constant 0.000000e+00 : f32
      %16 = vector.broadcast %cst_14 : f32 to vector<32x128xf32>
      %17 = arith.maximumf %15, %16 : vector<32x128xf32>
      %c0_15 = arith.constant 0 : index
      %c0_16 = arith.constant 0 : index
      %18 = vector.load %arg6[%c0_15, %c0_16] : memref<32x128xf32, #tpu.memory_space<vmem>>, vector<32x128xf32>
      tpu.vector_store %arg6[%c0_15, %c0_16], %17 {strides = array<i32>} : memref<32x128xf32, #tpu.memory_space<vmem>>, vector<32x128xf32>,
    } else {
    }
    return
  }
  func.func @transform_0(%arg0: i32, %arg1: i32, %arg2: i32) -> (i32, i32) {
    %c0_i32 = arith.constant 0 : i32
    return %arg0, %arg2 : i32, i32
  }
  func.func @transform_1(%arg0: i32, %arg1: i32, %arg2: i32) -> (i32, i32) {
    %c0_i32 = arith.constant 0 : i32
    return %arg2, %arg1 : i32, i32
  }
  func.func @transform_2(%arg0: i32, %arg1: i32, %arg2: i32) -> (i32, i32) {
    %c0_i32 = arith.constant 0 : i32
    %c0_i32_0 = arith.constant 0 : i32
    return %c0_i32, %arg1 : i32, i32
  }
  func.func @transform_3(%arg0: i32, %arg1: i32, %arg2: i32) -> (i32, i32) {
    %c0_i32 = arith.constant 0 : i32
    return %arg0, %arg1 : i32, i32
  }
}

module attributes {stable_mosaic.version = 11 : i64} {
  func.func @_matmul_bias_act_kernel(%arg0: i32, %arg1: i32, %arg2: i32, %arg3: memref<128x128xbf16, #tpu.memory_space<vmem>>, %arg4: memref<128x128xbf16, #tpu.memory_space<vmem>>, %arg5: memref<1x128xf32, #tpu.memory_space<vmem>>, %arg6: memref<128x128xf32, #tpu.memory_space<vmem>>, %arg7: memref<128x128xf32, #tpu.memory_space<vmem>>) attributes {dimension_semantics = [#tpu.dimension_semantics<parallel>, #tpu.dimension_semantics<parallel>, #tpu.dimension_semantics<arbitrary>], iteration_bounds = array<i64: 1, 1, 1>, scalar_prefetch = 0 : i64, scratch_operands = 1 : i64, tpu.core_type = #tpu.core_type<tc>, window_params = [{transform_indices = @transform_0, window_bounds = array<i64: 128, 128>}, {transform_indices = @transform_1, window_bounds = array<i64: 128, 128>}, {transform_indices = @transform_2, window_bounds = array<i64: 1, 128>}, {transform_indices = @transform_3, window_bounds = array<i64: 128, 128>}]} {
    %c0_i32 = arith.constant 0 : i32
    %0 = arith.cmpi eq, %arg2, %c0_i32 : i32
    %1 = arith.extui %0 : i1 to i32
    %c0_i32_0 = arith.constant 0 : i32
    %2 = arith.cmpi ne, %1, %c0_i32_0 : i32
    scf.if %2 {
      %cst_10 = arith.constant 0.000000e+00 : f32
      %12 = vector.broadcast %cst_10 : f32 to vector<128x128xf32>
      %c0_11 = arith.constant 0 : index
      %c0_12 = arith.constant 0 : index
      %13 = vector.load %arg7[%c0_11, %c0_12] : memref<128x128xf32, #tpu.memory_space<vmem>>, vector<128x128xf32>
      tpu.vector_store %arg7[%c0_11, %c0_12], %12 {strides = array<i32>} : memref<128x128xf32, #tpu.memory_space<vmem>>, vector<128x128xf32>,
    } else {
    }
    %c0 = arith.constant 0 : index
    %c0_1 = arith.constant 0 : index
    %3 = vector.load %arg7[%c0, %c0_1] : memref<128x128xf32, #tpu.memory_space<vmem>>, vector<128x128xf32>
    %c0_2 = arith.constant 0 : index
    %c0_3 = arith.constant 0 : index
    %4 = vector.load %arg3[%c0_2, %c0_3] : memref<128x128xbf16, #tpu.memory_space<vmem>>, vector<128x128xbf16>
    %c0_4 = arith.constant 0 : index
    %c0_5 = arith.constant 0 : index
    %5 = vector.load %arg4[%c0_4, %c0_5] : memref<128x128xbf16, #tpu.memory_space<vmem>>, vector<128x128xbf16>
    %cst = arith.constant dense<0.000000e+00> : vector<128x128xf32>
    %6 = tpu.matmul %4, %5, %cst {dimension_numbers = #tpu.dot_dimension_numbers<[1], [0], [0], [1], [0, 0, 1, 1], [], []>} : vector<128x128xbf16>, vector<128x128xbf16>, vector<128x128xf32> -> vector<128x128xf32>
    %7 = arith.addf %3, %6 : vector<128x128xf32>
    %c0_6 = arith.constant 0 : index
    %c0_7 = arith.constant 0 : index
    %8 = vector.load %arg7[%c0_6, %c0_7] : memref<128x128xf32, #tpu.memory_space<vmem>>, vector<128x128xf32>
    tpu.vector_store %arg7[%c0_6, %c0_7], %7 {strides = array<i32>} : memref<128x128xf32, #tpu.memory_space<vmem>>, vector<128x128xf32>,
    %c0_i32_8 = arith.constant 0 : i32
    %9 = arith.cmpi eq, %arg2, %c0_i32_8 : i32
    %10 = arith.extui %9 : i1 to i32
    %c0_i32_9 = arith.constant 0 : i32
    %11 = arith.cmpi ne, %10, %c0_i32_9 : i32
    scf.if %11 {
      %c0_10 = arith.constant 0 : index
      %c0_11 = arith.constant 0 : index
      %12 = vector.load %arg7[%c0_10, %c0_11] : memref<128x128xf32, #tpu.memory_space<vmem>>, vector<128x128xf32>
      %c0_12 = arith.constant 0 : index
      %c0_13 = arith.constant 0 : index
      %13 = vector.load %arg5[%c0_12, %c0_13] : memref<1x128xf32, #tpu.memory_space<vmem>>, vector<1x128xf32>
      %14 = vector.broadcast %13 : vector<1x128xf32> to vector<128x128xf32>
      %15 = arith.addf %12, %14 : vector<128x128xf32>
      %16 = math.tanh %15 : vector<128x128xf32>
      %c0_14 = arith.constant 0 : index
      %c0_15 = arith.constant 0 : index
      %17 = vector.load %arg6[%c0_14, %c0_15] : memref<128x128xf32, #tpu.memory_space<vmem>>, vector<128x128xf32>
      tpu.vector_store %arg6[%c0_14, %c0_15], %16 {strides = array<i32>} : memref<128x128xf32, #tpu.memory_space<vmem>>, vector<128x128xf32>,
    } else {
    }
    return
  }
  func.func @transform_0(%arg0: i32, %arg1: i32, %arg2: i32) -> (i32, i32) {
    %c0_i32 = arith.constant 0 : i32
    return %arg0, %arg2 : i32, i32
  }
  func.func @transform_1(%arg0: i32, %arg1: i32, %arg2: i32) -> (i32, i32) {
    %c0_i32 = arith.constant 0 : i32
    return %arg2, %arg1 : i32, i32
  }
  func.func @transform_2(%arg0: i32, %arg1: i32, %arg2: i32) -> (i32, i32) {
    %c0_i32 = arith.constant 0 : i32
    %c0_i32_0 = arith.constant 0 : i32
    return %c0_i32, %arg1 : i32, i32
  }
  func.func @transform_3(%arg0: i32, %arg1: i32, %arg2: i32) -> (i32, i32) {
    %c0_i32 = arith.constant 0 : i32
    return %arg0, %arg1 : i32, i32
  }
}

module attributes {stable_mosaic.version = 11 : i64} {
  func.func @_matmul_bias_act_kernel(%arg0: i32, %arg1: i32, %arg2: i32, %arg3: memref<256x128xbf16, #tpu.memory_space<vmem>>, %arg4: memref<128x128xbf16, #tpu.memory_space<vmem>>, %arg5: memref<1x128xf32, #tpu.memory_space<vmem>>, %arg6: memref<256x128xf32, #tpu.memory_space<vmem>>, %arg7: memref<256x128xf32, #tpu.memory_space<vmem>>) attributes {dimension_semantics = [#tpu.dimension_semantics<parallel>, #tpu.dimension_semantics<parallel>, #tpu.dimension_semantics<arbitrary>], iteration_bounds = array<i64: 1, 1, 1>, scalar_prefetch = 0 : i64, scratch_operands = 1 : i64, tpu.core_type = #tpu.core_type<tc>, window_params = [{transform_indices = @transform_0, window_bounds = array<i64: 256, 128>}, {transform_indices = @transform_1, window_bounds = array<i64: 128, 128>}, {transform_indices = @transform_2, window_bounds = array<i64: 1, 128>}, {transform_indices = @transform_3, window_bounds = array<i64: 256, 128>}]} {
    %c0_i32 = arith.constant 0 : i32
    %0 = arith.cmpi eq, %arg2, %c0_i32 : i32
    %1 = arith.extui %0 : i1 to i32
    %c0_i32_0 = arith.constant 0 : i32
    %2 = arith.cmpi ne, %1, %c0_i32_0 : i32
    scf.if %2 {
      %cst_10 = arith.constant 0.000000e+00 : f32
      %12 = vector.broadcast %cst_10 : f32 to vector<256x128xf32>
      %c0_11 = arith.constant 0 : index
      %c0_12 = arith.constant 0 : index
      %13 = vector.load %arg7[%c0_11, %c0_12] : memref<256x128xf32, #tpu.memory_space<vmem>>, vector<256x128xf32>
      tpu.vector_store %arg7[%c0_11, %c0_12], %12 {strides = array<i32>} : memref<256x128xf32, #tpu.memory_space<vmem>>, vector<256x128xf32>,
    } else {
    }
    %c0 = arith.constant 0 : index
    %c0_1 = arith.constant 0 : index
    %3 = vector.load %arg7[%c0, %c0_1] : memref<256x128xf32, #tpu.memory_space<vmem>>, vector<256x128xf32>
    %c0_2 = arith.constant 0 : index
    %c0_3 = arith.constant 0 : index
    %4 = vector.load %arg3[%c0_2, %c0_3] : memref<256x128xbf16, #tpu.memory_space<vmem>>, vector<256x128xbf16>
    %c0_4 = arith.constant 0 : index
    %c0_5 = arith.constant 0 : index
    %5 = vector.load %arg4[%c0_4, %c0_5] : memref<128x128xbf16, #tpu.memory_space<vmem>>, vector<128x128xbf16>
    %cst = arith.constant dense<0.000000e+00> : vector<256x128xf32>
    %6 = tpu.matmul %4, %5, %cst {dimension_numbers = #tpu.dot_dimension_numbers<[1], [0], [0], [1], [0, 0, 1, 1], [], []>} : vector<256x128xbf16>, vector<128x128xbf16>, vector<256x128xf32> -> vector<256x128xf32>
    %7 = arith.addf %3, %6 : vector<256x128xf32>
    %c0_6 = arith.constant 0 : index
    %c0_7 = arith.constant 0 : index
    %8 = vector.load %arg7[%c0_6, %c0_7] : memref<256x128xf32, #tpu.memory_space<vmem>>, vector<256x128xf32>
    tpu.vector_store %arg7[%c0_6, %c0_7], %7 {strides = array<i32>} : memref<256x128xf32, #tpu.memory_space<vmem>>, vector<256x128xf32>,
    %c0_i32_8 = arith.constant 0 : i32
    %9 = arith.cmpi eq, %arg2, %c0_i32_8 : i32
    %10 = arith.extui %9 : i1 to i32
    %c0_i32_9 = arith.constant 0 : i32
    %11 = arith.cmpi ne, %10, %c0_i32_9 : i32
    scf.if %11 {
      %c0_10 = arith.constant 0 : index
      %c0_11 = arith.constant 0 : index
      %12 = vector.load %arg7[%c0_10, %c0_11] : memref<256x128xf32, #tpu.memory_space<vmem>>, vector<256x128xf32>
      %c0_12 = arith.constant 0 : index
      %c0_13 = arith.constant 0 : index
      %13 = vector.load %arg5[%c0_12, %c0_13] : memref<1x128xf32, #tpu.memory_space<vmem>>, vector<1x128xf32>
      %14 = vector.broadcast %13 : vector<1x128xf32> to vector<256x128xf32>
      %15 = arith.addf %12, %14 : vector<256x128xf32>
      %cst_14 = arith.constant 0.000000e+00 : f32
      %16 = vector.broadcast %cst_14 : f32 to vector<256x128xf32>
      %17 = arith.cmpf ogt, %15, %16 : vector<256x128xf32>
      %cst_15 = arith.constant 2.000000e-01 : f32
      %18 = vector.broadcast %cst_15 : f32 to vector<256x128xf32>
      %19 = arith.mulf %18, %15 : vector<256x128xf32>
      %20 = arith.select %17, %15, %19 : vector<256x128xi1>, vector<256x128xf32>
      %c0_16 = arith.constant 0 : index
      %c0_17 = arith.constant 0 : index
      %21 = vector.load %arg6[%c0_16, %c0_17] : memref<256x128xf32, #tpu.memory_space<vmem>>, vector<256x128xf32>
      tpu.vector_store %arg6[%c0_16, %c0_17], %20 {strides = array<i32>} : memref<256x128xf32, #tpu.memory_space<vmem>>, vector<256x128xf32>,
    } else {
    }
    return
  }
  func.func @transform_0(%arg0: i32, %arg1: i32, %arg2: i32) -> (i32, i32) {
    %c0_i32 = arith.constant 0 : i32
    return %arg0, %arg2 : i32, i32
  }
  func.func @transform_1(%arg0: i32, %arg1: i32, %arg2: i32) -> (i32, i32) {
    %c0_i32 = arith.constant 0 : i32
    return %arg2, %arg1 : i32, i32
  }
  func.func @transform_2(%arg0: i32, %arg1: i32, %arg2: i32) -> (i32, i32) {
    %c0_i32 = arith.constant 0 : i32
    %c0_i32_0 = arith.constant 0 : i32
    return %c0_i32, %arg1 : i32, i32
  }
  func.func @transform_3(%arg0: i32, %arg1: i32, %arg2: i32) -> (i32, i32) {
    %c0_i32 = arith.constant 0 : i32
    return %arg0, %arg1 : i32, i32
  }
}

module attributes {stable_mosaic.version = 11 : i64} {
  func.func @_matmul_bias_act_kernel(%arg0: i32, %arg1: i32, %arg2: i32, %arg3: memref<64x128xbf16, #tpu.memory_space<vmem>>, %arg4: memref<128x128xbf16, #tpu.memory_space<vmem>>, %arg5: memref<1x128xf32, #tpu.memory_space<vmem>>, %arg6: memref<64x128xf32, #tpu.memory_space<vmem>>, %arg7: memref<64x128xf32, #tpu.memory_space<vmem>>) attributes {dimension_semantics = [#tpu.dimension_semantics<parallel>, #tpu.dimension_semantics<parallel>, #tpu.dimension_semantics<arbitrary>], iteration_bounds = array<i64: 1, 1, 1>, scalar_prefetch = 0 : i64, scratch_operands = 1 : i64, tpu.core_type = #tpu.core_type<tc>, window_params = [{transform_indices = @transform_0, window_bounds = array<i64: 64, 128>}, {transform_indices = @transform_1, window_bounds = array<i64: 128, 128>}, {transform_indices = @transform_2, window_bounds = array<i64: 1, 128>}, {transform_indices = @transform_3, window_bounds = array<i64: 64, 128>}]} {
    %c0_i32 = arith.constant 0 : i32
    %0 = arith.cmpi eq, %arg2, %c0_i32 : i32
    %1 = arith.extui %0 : i1 to i32
    %c0_i32_0 = arith.constant 0 : i32
    %2 = arith.cmpi ne, %1, %c0_i32_0 : i32
    scf.if %2 {
      %cst_10 = arith.constant 0.000000e+00 : f32
      %12 = vector.broadcast %cst_10 : f32 to vector<64x128xf32>
      %c0_11 = arith.constant 0 : index
      %c0_12 = arith.constant 0 : index
      %13 = vector.load %arg7[%c0_11, %c0_12] : memref<64x128xf32, #tpu.memory_space<vmem>>, vector<64x128xf32>
      tpu.vector_store %arg7[%c0_11, %c0_12], %12 {strides = array<i32>} : memref<64x128xf32, #tpu.memory_space<vmem>>, vector<64x128xf32>,
    } else {
    }
    %c0 = arith.constant 0 : index
    %c0_1 = arith.constant 0 : index
    %3 = vector.load %arg7[%c0, %c0_1] : memref<64x128xf32, #tpu.memory_space<vmem>>, vector<64x128xf32>
    %c0_2 = arith.constant 0 : index
    %c0_3 = arith.constant 0 : index
    %4 = vector.load %arg3[%c0_2, %c0_3] : memref<64x128xbf16, #tpu.memory_space<vmem>>, vector<64x128xbf16>
    %c0_4 = arith.constant 0 : index
    %c0_5 = arith.constant 0 : index
    %5 = vector.load %arg4[%c0_4, %c0_5] : memref<128x128xbf16, #tpu.memory_space<vmem>>, vector<128x128xbf16>
    %cst = arith.constant dense<0.000000e+00> : vector<64x128xf32>
    %6 = tpu.matmul %4, %5, %cst {dimension_numbers = #tpu.dot_dimension_numbers<[1], [0], [0], [1], [0, 0, 1, 1], [], []>} : vector<64x128xbf16>, vector<128x128xbf16>, vector<64x128xf32> -> vector<64x128xf32>
    %7 = arith.addf %3, %6 : vector<64x128xf32>
    %c0_6 = arith.constant 0 : index
    %c0_7 = arith.constant 0 : index
    %8 = vector.load %arg7[%c0_6, %c0_7] : memref<64x128xf32, #tpu.memory_space<vmem>>, vector<64x128xf32>
    tpu.vector_store %arg7[%c0_6, %c0_7], %7 {strides = array<i32>} : memref<64x128xf32, #tpu.memory_space<vmem>>, vector<64x128xf32>,
    %c0_i32_8 = arith.constant 0 : i32
    %9 = arith.cmpi eq, %arg2, %c0_i32_8 : i32
    %10 = arith.extui %9 : i1 to i32
    %c0_i32_9 = arith.constant 0 : i32
    %11 = arith.cmpi ne, %10, %c0_i32_9 : i32
    scf.if %11 {
      %c0_10 = arith.constant 0 : index
      %c0_11 = arith.constant 0 : index
      %12 = vector.load %arg7[%c0_10, %c0_11] : memref<64x128xf32, #tpu.memory_space<vmem>>, vector<64x128xf32>
      %c0_12 = arith.constant 0 : index
      %c0_13 = arith.constant 0 : index
      %13 = vector.load %arg5[%c0_12, %c0_13] : memref<1x128xf32, #tpu.memory_space<vmem>>, vector<1x128xf32>
      %14 = vector.broadcast %13 : vector<1x128xf32> to vector<64x128xf32>
      %15 = arith.addf %12, %14 : vector<64x128xf32>
      %cst_14 = arith.constant 0.000000e+00 : f32
      %16 = vector.broadcast %cst_14 : f32 to vector<64x128xf32>
      %17 = arith.cmpf ogt, %15, %16 : vector<64x128xf32>
      %cst_15 = arith.constant 2.000000e-01 : f32
      %18 = vector.broadcast %cst_15 : f32 to vector<64x128xf32>
      %19 = arith.mulf %18, %15 : vector<64x128xf32>
      %20 = arith.select %17, %15, %19 : vector<64x128xi1>, vector<64x128xf32>
      %c0_16 = arith.constant 0 : index
      %c0_17 = arith.constant 0 : index
      %21 = vector.load %arg6[%c0_16, %c0_17] : memref<64x128xf32, #tpu.memory_space<vmem>>, vector<64x128xf32>
      tpu.vector_store %arg6[%c0_16, %c0_17], %20 {strides = array<i32>} : memref<64x128xf32, #tpu.memory_space<vmem>>, vector<64x128xf32>,
    } else {
    }
    return
  }
  func.func @transform_0(%arg0: i32, %arg1: i32, %arg2: i32) -> (i32, i32) {
    %c0_i32 = arith.constant 0 : i32
    return %arg0, %arg2 : i32, i32
  }
  func.func @transform_1(%arg0: i32, %arg1: i32, %arg2: i32) -> (i32, i32) {
    %c0_i32 = arith.constant 0 : i32
    return %arg2, %arg1 : i32, i32
  }
  func.func @transform_2(%arg0: i32, %arg1: i32, %arg2: i32) -> (i32, i32) {
    %c0_i32 = arith.constant 0 : i32
    %c0_i32_0 = arith.constant 0 : i32
    return %c0_i32, %arg1 : i32, i32
  }
  func.func @transform_3(%arg0: i32, %arg1: i32, %arg2: i32) -> (i32, i32) {
    %c0_i32 = arith.constant 0 : i32
    return %arg0, %arg1 : i32, i32
  }
}

module attributes {stable_mosaic.version = 11 : i64} {
  func.func @_matmul_bias_act_kernel(%arg0: i32, %arg1: i32, %arg2: i32, %arg3: memref<16x128xbf16, #tpu.memory_space<vmem>>, %arg4: memref<128x128xbf16, #tpu.memory_space<vmem>>, %arg5: memref<1x128xf32, #tpu.memory_space<vmem>>, %arg6: memref<16x128xf32, #tpu.memory_space<vmem>>, %arg7: memref<16x128xf32, #tpu.memory_space<vmem>>) attributes {dimension_semantics = [#tpu.dimension_semantics<parallel>, #tpu.dimension_semantics<parallel>, #tpu.dimension_semantics<arbitrary>], iteration_bounds = array<i64: 1, 1, 1>, scalar_prefetch = 0 : i64, scratch_operands = 1 : i64, tpu.core_type = #tpu.core_type<tc>, window_params = [{transform_indices = @transform_0, window_bounds = array<i64: 16, 128>}, {transform_indices = @transform_1, window_bounds = array<i64: 128, 128>}, {transform_indices = @transform_2, window_bounds = array<i64: 1, 128>}, {transform_indices = @transform_3, window_bounds = array<i64: 16, 128>}]} {
    %c0_i32 = arith.constant 0 : i32
    %0 = arith.cmpi eq, %arg2, %c0_i32 : i32
    %1 = arith.extui %0 : i1 to i32
    %c0_i32_0 = arith.constant 0 : i32
    %2 = arith.cmpi ne, %1, %c0_i32_0 : i32
    scf.if %2 {
      %cst_10 = arith.constant 0.000000e+00 : f32
      %12 = vector.broadcast %cst_10 : f32 to vector<16x128xf32>
      %c0_11 = arith.constant 0 : index
      %c0_12 = arith.constant 0 : index
      %13 = vector.load %arg7[%c0_11, %c0_12] : memref<16x128xf32, #tpu.memory_space<vmem>>, vector<16x128xf32>
      tpu.vector_store %arg7[%c0_11, %c0_12], %12 {strides = array<i32>} : memref<16x128xf32, #tpu.memory_space<vmem>>, vector<16x128xf32>,
    } else {
    }
    %c0 = arith.constant 0 : index
    %c0_1 = arith.constant 0 : index
    %3 = vector.load %arg7[%c0, %c0_1] : memref<16x128xf32, #tpu.memory_space<vmem>>, vector<16x128xf32>
    %c0_2 = arith.constant 0 : index
    %c0_3 = arith.constant 0 : index
    %4 = vector.load %arg3[%c0_2, %c0_3] : memref<16x128xbf16, #tpu.memory_space<vmem>>, vector<16x128xbf16>
    %c0_4 = arith.constant 0 : index
    %c0_5 = arith.constant 0 : index
    %5 = vector.load %arg4[%c0_4, %c0_5] : memref<128x128xbf16, #tpu.memory_space<vmem>>, vector<128x128xbf16>
    %cst = arith.constant dense<0.000000e+00> : vector<16x128xf32>
    %6 = tpu.matmul %4, %5, %cst {dimension_numbers = #tpu.dot_dimension_numbers<[1], [0], [0], [1], [0, 0, 1, 1], [], []>} : vector<16x128xbf16>, vector<128x128xbf16>, vector<16x128xf32> -> vector<16x128xf32>
    %7 = arith.addf %3, %6 : vector<16x128xf32>
    %c0_6 = arith.constant 0 : index
    %c0_7 = arith.constant 0 : index
    %8 = vector.load %arg7[%c0_6, %c0_7] : memref<16x128xf32, #tpu.memory_space<vmem>>, vector<16x128xf32>
    tpu.vector_store %arg7[%c0_6, %c0_7], %7 {strides = array<i32>} : memref<16x128xf32, #tpu.memory_space<vmem>>, vector<16x128xf32>,
    %c0_i32_8 = arith.constant 0 : i32
    %9 = arith.cmpi eq, %arg2, %c0_i32_8 : i32
    %10 = arith.extui %9 : i1 to i32
    %c0_i32_9 = arith.constant 0 : i32
    %11 = arith.cmpi ne, %10, %c0_i32_9 : i32
    scf.if %11 {
      %c0_10 = arith.constant 0 : index
      %c0_11 = arith.constant 0 : index
      %12 = vector.load %arg7[%c0_10, %c0_11] : memref<16x128xf32, #tpu.memory_space<vmem>>, vector<16x128xf32>
      %c0_12 = arith.constant 0 : index
      %c0_13 = arith.constant 0 : index
      %13 = vector.load %arg5[%c0_12, %c0_13] : memref<1x128xf32, #tpu.memory_space<vmem>>, vector<1x128xf32>
      %14 = vector.broadcast %13 : vector<1x128xf32> to vector<16x128xf32>
      %15 = arith.addf %12, %14 : vector<16x128xf32>
      %cst_14 = arith.constant 0.000000e+00 : f32
      %16 = vector.broadcast %cst_14 : f32 to vector<16x128xf32>
      %17 = arith.cmpf ogt, %15, %16 : vector<16x128xf32>
      %cst_15 = arith.constant 2.000000e-01 : f32
      %18 = vector.broadcast %cst_15 : f32 to vector<16x128xf32>
      %19 = arith.mulf %18, %15 : vector<16x128xf32>
      %20 = arith.select %17, %15, %19 : vector<16x128xi1>, vector<16x128xf32>
      %c0_16 = arith.constant 0 : index
      %c0_17 = arith.constant 0 : index
      %21 = vector.load %arg6[%c0_16, %c0_17] : memref<16x128xf32, #tpu.memory_space<vmem>>, vector<16x128xf32>
      tpu.vector_store %arg6[%c0_16, %c0_17], %20 {strides = array<i32>} : memref<16x128xf32, #tpu.memory_space<vmem>>, vector<16x128xf32>,
    } else {
    }
    return
  }
  func.func @transform_0(%arg0: i32, %arg1: i32, %arg2: i32) -> (i32, i32) {
    %c0_i32 = arith.constant 0 : i32
    return %arg0, %arg2 : i32, i32
  }
  func.func @transform_1(%arg0: i32, %arg1: i32, %arg2: i32) -> (i32, i32) {
    %c0_i32 = arith.constant 0 : i32
    return %arg2, %arg1 : i32, i32
  }
  func.func @transform_2(%arg0: i32, %arg1: i32, %arg2: i32) -> (i32, i32) {
    %c0_i32 = arith.constant 0 : i32
    %c0_i32_0 = arith.constant 0 : i32
    return %c0_i32, %arg1 : i32, i32
  }
  func.func @transform_3(%arg0: i32, %arg1: i32, %arg2: i32) -> (i32, i32) {
    %c0_i32 = arith.constant 0 : i32
    return %arg0, %arg1 : i32, i32
  }
}

</mosaic_0001>

<llo_original>
// kernel: fanogan_forward.12
$region0: #{fanogan_forward.12}
  #allocation0 [shape = 'u32[]', space=smem, size = 0x4, offset = 0x4, fixed_abs, tag = 'smem constant byte address 0x4 - core index']
  #allocation1 [shape = 'u32[144,128]{1,0:T(1,128)}', space=vmem, size = 0x12000, scoped, tag = 'internal scratch']
  #allocation2 [shape = 'f32[32,128]{1,0:T(8,128)}', space=vmem, size = 0x4000, scoped, tag = 'scratch operand']
  %s0 = inlined_call_operand.vmem [shape: bf16[32,128], index: 0, kind: input, shape index: {}]
  %s1 = inlined_call_operand.vmem [shape: bf16[128,128], index: 1, kind: input, shape index: {}]
  %s2 = inlined_call_operand.vmem [shape: f32[1,128], index: 2, kind: input, shape index: {}]
  %s3 = inlined_call_operand.vmem [shape: f32[32,128], index: 3, kind: output, shape index: {}]
  %s4 = sld [smem:[#allocation0]]
  $region30: #{fanogan_forward.12} parent=0
    _
  %s6 = ssub.s32 1, %s4
  %s7 = scalar_select 0, %s6, %s4
  // Predicated region
  $region2: #{fanogan_forward.12} parent=0 // pred_check
    _
  $region3: #{fanogan_forward.12} parent=0 // pred_check_branch
    %9 = sbr.rel (0) target = $region5
  $region4: #{fanogan_forward.12} parent=0 // pred_region
    _
  $region5: #{fanogan_forward.12} parent=0 // pred_fallthru
    _
  // Predicated region
  $region6: #{fanogan_forward.12} parent=0 // pred_check
    _
  $region7: #{fanogan_forward.12} parent=0 // pred_check_branch
    %11 = sbr.rel (0) target = $region9
  $region8: #{fanogan_forward.12} parent=0 // pred_region
    _
  $region9: #{fanogan_forward.12} parent=0 // pred_fallthru
    _
  // Predicated region
  $region10: #{fanogan_forward.12} parent=0 // pred_check
    _
  $region11: #{fanogan_forward.12} parent=0 // pred_check_branch
    %13 = sbr.rel (0) target = $region13
  $region12: #{fanogan_forward.12} parent=0 // pred_region
    _
  $region13: #{fanogan_forward.12} parent=0 // pred_fallthru
    _
  %p15 = scmp.eq.s32.totalorder 0, 0
  // Predicated region
  $region14: #{fanogan_forward.12} parent=0 // pred_check
    %p16 = pneg %p15
  $region15: #{fanogan_forward.12} parent=0 // pred_check_branch
    %18 = sbr.rel (%p16) target = $region17
  $region16: #{fanogan_forward.12} parent=0 // pred_region
    %19 = vst [vmem:[#allocation2] sm:$0xff] 0.0
    %20 = vst [vmem:[#allocation2 + $0x8] sm:$0xff] 0.0
    %21 = vst [vmem:[#allocation2 + $0x10] sm:$0xff] 0.0
    %22 = vst [vmem:[#allocation2 + $0x18] sm:$0xff] 0.0
  $region17: #{fanogan_forward.12} parent=0 // pred_fallthru
    _
  %v23 = vld [vmem:[#allocation2] sm:$0xff]
  %v24 = vld [vmem:[#allocation2 + $0x8] sm:$0xff]
  %v25 = vld [vmem:[#allocation2 + $0x10] sm:$0xff]
  %v26 = vld [vmem:[#allocation2 + $0x18] sm:$0xff]
  %v27 = vld [vmem:[%s0] sm:$0xf]
  %v28 = vld [vmem:[%s0 + $0x4] sm:$0xf]
  %v29 = vld [vmem:[%s0 + $0x8] sm:$0xf]
  %v30 = vld [vmem:[%s0 + $0xc] sm:$0xf]
  %v31 = vld [vmem:[%s1] sm:$0xf]
  %v32 = vld [vmem:[%s1 + $0x4] sm:$0xf]
  %v33 = vld [vmem:[%s1 + $0x8] sm:$0xf]
  %v34 = vld [vmem:[%s1 + $0xc] sm:$0xf]
  %v35 = vld [vmem:[%s1 + $0x10] sm:$0xf]
  %v36 = vld [vmem:[%s1 + $0x14] sm:$0xf]
  %v37 = vld [vmem:[%s1 + $0x18] sm:$0xf]
  %v38 = vld [vmem:[%s1 + $0x1c] sm:$0xf]
  %v39 = vld [vmem:[%s1 + $0x20] sm:$0xf]
  %v40 = vld [vmem:[%s1 + $0x24] sm:$0xf]
  %v41 = vld [vmem:[%s1 + $0x28] sm:$0xf]
  %v42 = vld [vmem:[%s1 + $0x2c] sm:$0xf]
  %v43 = vld [vmem:[%s1 + $0x30] sm:$0xf]
  %v44 = vld [vmem:[%s1 + $0x34] sm:$0xf]
  %v45 = vld [vmem:[%s1 + $0x38] sm:$0xf]
  %v46 = vld [vmem:[%s1 + $0x3c] sm:$0xf]
  %v51 = vunpack.c.l.b16 %v27
  %v52 = vunpack.c.l.b16 %v28
  %v53 = vunpack.c.l.b16 %v29
  %v54 = vunpack.c.l.b16 %v30
  %v55 = vpack.c.b16 %v52, %v51
  %v56 = vpack.c.b16 %v54, %v53
  %v75 = vunpack.c.l.b16 %v31
  %v76 = vunpack.c.l.b16 %v32
  %v77 = vunpack.c.l.b16 %v33
  %v78 = vunpack.c.l.b16 %v34
  %v79 = vunpack.c.l.b16 %v35
  %v80 = vunpack.c.l.b16 %v36
  %v81 = vunpack.c.l.b16 %v37
  %v82 = vunpack.c.l.b16 %v38
  %v83 = vunpack.c.l.b16 %v39
  %v84 = vunpack.c.l.b16 %v40
  %v85 = vunpack.c.l.b16 %v41
  %v86 = vunpack.c.l.b16 %v42
  %v87 = vunpack.c.l.b16 %v43
  %v88 = vunpack.c.l.b16 %v44
  %v89 = vunpack.c.l.b16 %v45
  %v90 = vunpack.c.l.b16 %v46
  %v91 = vpack.c.b16 %v76, %v75
  %v92 = vpack.c.b16 %v78, %v77
  %v93 = vpack.c.b16 %v80, %v79
  %v94 = vpack.c.b16 %v82, %v81
  %v95 = vpack.c.b16 %v84, %v83
  %v96 = vpack.c.b16 %v86, %v85
  %v97 = vpack.c.b16 %v88, %v87
  %v98 = vpack.c.b16 %v90, %v89
  %107 = vmatprep.subr.bf16.mxu0 0
  %108 = vmatpush1.bf16.msra.mxu0 %v91
  %109 = vmatprep.subr.bf16.mxu0 0
  %110 = vmatpush1.bf16.msra.mxu0 %v92
  %111 = vmatprep.subr.bf16.mxu0 0
  %112 = vmatpush1.bf16.msra.mxu0 %v93
  %113 = vmatprep.subr.bf16.mxu0 0
  %114 = vmatpush1.bf16.msra.mxu0 %v94
  %115 = vmatprep.subr.bf16.mxu0 0
  %116 = vmatpush1.bf16.msra.mxu0 %v95
  %117 = vmatprep.subr.bf16.mxu0 0
  %118 = vmatpush1.bf16.msra.mxu0 %v96
  %119 = vmatprep.subr.bf16.mxu0 0
  %120 = vmatpush1.bf16.msra.mxu0 %v97
  %121 = vmatprep.subr.bf16.mxu0 0
  %122 = vmatpush1.bf16.msra.mxu0 %v98
  %123 = vmatprep.subr.bf16.mxu0 0
  %124 = vmatpush1.bf16.msra.mxu0 0
  %125 = vmatprep.subr.bf16.mxu0 0
  %126 = vmatpush1.bf16.msra.mxu0 0
  %127 = vmatprep.subr.bf16.mxu0 0
  %128 = vmatpush1.bf16.msra.mxu0 0
  %129 = vmatprep.subr.bf16.mxu0 0
  %130 = vmatpush1.bf16.msra.mxu0 0
  %131 = vmatprep.subr.bf16.mxu0 0
  %132 = vmatpush1.bf16.msra.mxu0 0
  %133 = vmatprep.subr.bf16.mxu0 0
  %134 = vmatpush1.bf16.msra.mxu0 0
  %135 = vmatprep.subr.bf16.mxu0 0
  %136 = vmatpush1.bf16.msra.mxu0 0
  %137 = vmatprep.subr.bf16.mxu0 0
  %138 = vmatpush1.bf16.msra.mxu0 0
  %139 = vmatprep.mubr.bf16.mxu0 0
  %140 = vmatmul.mubr.bf16.gmra.mrb[0].mxu0 %v55
  %v141 = vpop.f32.mrb[0].mxu0
  %v142 = vadd.f32 0.0, %v141
  %v143 = vpop.f32.mrb[0].mxu0
  %v144 = vpop.f32.mrb[0].mxu0
  %v145 = vadd.f32 0.0, %v144
  %v146 = vpop.f32.mrb[0].mxu0
  %147 = vmatprep.mubr.bf16.mxu0 0
  %148 = vmatmul.mubr.bf16.gmra.mrb[0].mxu0 %v56
  %v149 = vpop.f32.mrb[0].mxu0
  %v150 = vadd.f32 0.0, %v149
  %v151 = vpop.f32.mrb[0].mxu0
  %v152 = vpop.f32.mrb[0].mxu0
  %v153 = vadd.f32 0.0, %v152
  %v154 = vpop.f32.mrb[0].mxu0
  %155 = vdwg.mxu0
  %v156 = vadd.f32 %v23, %v142
  %v157 = vadd.f32 %v24, %v145
  %v158 = vadd.f32 %v25, %v150
  %v159 = vadd.f32 %v26, %v153
  %160 = vst [vmem:[#allocation2] sm:$0xff] %v156
  %161 = vst [vmem:[#allocation2 + $0x8] sm:$0xff] %v157
  %162 = vst [vmem:[#allocation2 + $0x10] sm:$0xff] %v158
  %163 = vst [vmem:[#allocation2 + $0x18] sm:$0xff] %v159
  // Predicated region
  $region18: #{fanogan_forward.12} parent=0 // pred_check
    %p164 = pneg %p15
  $region19: #{fanogan_forward.12} parent=0 // pred_check_branch
    %166 = sbr.rel (%p164) target = $region21
  $region20: #{fanogan_forward.12} parent=0 // pred_region
    %v167 = vld [vmem:[#allocation2] sm:$0xff]
    %v168 = vld [vmem:[#allocation2 + $0x8] sm:$0xff]
    %v169 = vld [vmem:[#allocation2 + $0x10] sm:$0xff]
    %v170 = vld [vmem:[#allocation2 + $0x18] sm:$0xff]
    %v171 = vld [vmem:[%s2] sm:$0x1]
    %v173 = vlaneseq
    %v174 = vshrl.u32 %v173, 7
    %v175 = vsub.s32 0, %v174
    %v176 = vrot.slane %v171, %v175
    %v178 = vadd.f32 %v167, %v176
    %v179 = vadd.f32 %v168, %v176
    %v180 = vadd.f32 %v169, %v176
    %v181 = vadd.f32 %v170, %v176
    %vm182 = vcmp.gt.f32.partialorder %v178, 0.0
    %vm183 = vcmp.gt.f32.partialorder %v179, 0.0
    %vm184 = vcmp.gt.f32.partialorder %v180, 0.0
    %vm185 = vcmp.gt.f32.partialorder %v181, 0.0
    %v186 = vmul.f32 %v178, 0.2
    %v187 = vmul.f32 %v179, 0.2
    %v188 = vmul.f32 %v180, 0.2
    %v189 = vmul.f32 %v181, 0.2
    %v190 = vsel %vm182, %v178, %v186
    %v191 = vsel %vm183, %v179, %v187
    %v192 = vsel %vm184, %v180, %v188
    %v193 = vsel %vm185, %v181, %v189
    %194 = vst [vmem:[%s3] sm:$0xff] %v190
    %195 = vst [vmem:[%s3 + $0x8] sm:$0xff] %v191
    %196 = vst [vmem:[%s3 + $0x10] sm:$0xff] %v192
    %197 = vst [vmem:[%s3 + $0x18] sm:$0xff] %v193
  $region21: #{fanogan_forward.12} parent=0 // pred_fallthru
    _
  // Predicated region
  $region22: #{fanogan_forward.12} parent=0 // pred_check
    _
  $region23: #{fanogan_forward.12} parent=0 // pred_check_branch
    %199 = sbr.rel (0) target = $region25
  $region24: #{fanogan_forward.12} parent=0 // pred_region
    _
  $region25: #{fanogan_forward.12} parent=0 // pred_fallthru
    _
  // Predicated region
  $region26: #{fanogan_forward.12} parent=0 // pred_check
    _
  $region27: #{fanogan_forward.12} parent=0 // pred_check_branch
    %201 = sbr.rel (0) target = $region29
  $region28: #{fanogan_forward.12} parent=0 // pred_region
    _
  $region29: #{fanogan_forward.12} parent=0 // pred_fallthru
    _

// kernel: fanogan_forward.11
$region0: #{fanogan_forward.11}
  #allocation0 [shape = 'u32[]', space=smem, size = 0x4, offset = 0x4, fixed_abs, tag = 'smem constant byte address 0x4 - core index']
  #allocation1 [shape = 'u32[144,128]{1,0:T(1,128)}', space=vmem, size = 0x12000, scoped, tag = 'internal scratch']
  #allocation2 [shape = 'f32[128,128]{1,0:T(8,128)}', space=vmem, size = 0x10000, scoped, tag = 'scratch operand']
  %s0 = inlined_call_operand.vmem [shape: bf16[128,128], index: 0, kind: input, shape index: {}]
  %s1 = inlined_call_operand.vmem [shape: bf16[128,128], index: 1, kind: input, shape index: {}]
  %s2 = inlined_call_operand.vmem [shape: f32[1,128], index: 2, kind: input, shape index: {}]
  %s3 = inlined_call_operand.vmem [shape: f32[128,128], index: 3, kind: output, shape index: {}]
  %s4 = sld [smem:[#allocation0]]
  $region30: #{fanogan_forward.11} parent=0
    _
  %s6 = ssub.s32 1, %s4
  %s7 = scalar_select 0, %s6, %s4
  // Predicated region
  $region2: #{fanogan_forward.11} parent=0 // pred_check
    _
  $region3: #{fanogan_forward.11} parent=0 // pred_check_branch
    %9 = sbr.rel (0) target = $region5
  $region4: #{fanogan_forward.11} parent=0 // pred_region
    _
  $region5: #{fanogan_forward.11} parent=0 // pred_fallthru
    _
  // Predicated region
  $region6: #{fanogan_forward.11} parent=0 // pred_check
    _
  $region7: #{fanogan_forward.11} parent=0 // pred_check_branch
    %11 = sbr.rel (0) target = $region9
  $region8: #{fanogan_forward.11} parent=0 // pred_region
    _
  $region9: #{fanogan_forward.11} parent=0 // pred_fallthru
    _
  // Predicated region
  $region10: #{fanogan_forward.11} parent=0 // pred_check
    _
  $region11: #{fanogan_forward.11} parent=0 // pred_check_branch
    %13 = sbr.rel (0) target = $region13
  $region12: #{fanogan_forward.11} parent=0 // pred_region
    _
  $region13: #{fanogan_forward.11} parent=0 // pred_fallthru
    _
  %p15 = scmp.eq.s32.totalorder 0, 0
  // Predicated region
  $region14: #{fanogan_forward.11} parent=0 // pred_check
    %p16 = pneg %p15
  $region15: #{fanogan_forward.11} parent=0 // pred_check_branch
    %18 = sbr.rel (%p16) target = $region17
  $region16: #{fanogan_forward.11} parent=0 // pred_region
    %19 = vst [vmem:[#allocation2] sm:$0xff] 0.0
    %20 = vst [vmem:[#allocation2 + $0x8] sm:$0xff] 0.0
    %21 = vst [vmem:[#allocation2 + $0x10] sm:$0xff] 0.0
    %22 = vst [vmem:[#allocation2 + $0x18] sm:$0xff] 0.0
    %23 = vst [vmem:[#allocation2 + $0x20] sm:$0xff] 0.0
    %24 = vst [vmem:[#allocation2 + $0x28] sm:$0xff] 0.0
    %25 = vst [vmem:[#allocation2 + $0x30] sm:$0xff] 0.0
    %26 = vst [vmem:[#allocation2 + $0x38] sm:$0xff] 0.0
    %27 = vst [vmem:[#allocation2 + $0x40] sm:$0xff] 0.0
    %28 = vst [vmem:[#allocation2 + $0x48] sm:$0xff] 0.0
    %29 = vst [vmem:[#allocation2 + $0x50] sm:$0xff] 0.0
    %30 = vst [vmem:[#allocation2 + $0x58] sm:$0xff] 0.0
    %31 = vst [vmem:[#allocation2 + $0x60] sm:$0xff] 0.0
    %32 = vst [vmem:[#allocation2 + $0x68] sm:$0xff] 0.0
    %33 = vst [vmem:[#allocation2 + $0x70] sm:$0xff] 0.0
    %34 = vst [vmem:[#allocation2 + $0x78] sm:$0xff] 0.0
  $region17: #{fanogan_forward.11} parent=0 // pred_fallthru
    _
  %v35 = vld [vmem:[#allocation2] sm:$0xff]
  %v36 = vld [vmem:[#allocation2 + $0x8] sm:$0xff]
  %v37 = vld [vmem:[#allocation2 + $0x10] sm:$0xff]
  %v38 = vld [vmem:[#allocation2 + $0x18] sm:$0xff]
  %v39 = vld [vmem:[#allocation2 + $0x20] sm:$0xff]
  %v40 = vld [vmem:[#allocation2 + $0x28] sm:$0xff]
  %v41 = vld [vmem:[#allocation2 + $0x30] sm:$0xff]
  %v42 = vld [vmem:[#allocation2 + $0x38] sm:$0xff]
  %v43 = vld [vmem:[#allocation2 + $0x40] sm:$0xff]
  %v44 = vld [vmem:[#allocation2 + $0x48] sm:$0xff]
  %v45 = vld [vmem:[#allocation2 + $0x50] sm:$0xff]
  %v46 = vld [vmem:[#allocation2 + $0x58] sm:$0xff]
  %v47 = vld [vmem:[#allocation2 + $0x60] sm:$0xff]
  %v48 = vld [vmem:[#allocation2 + $0x68] sm:$0xff]
  %v49 = vld [vmem:[#allocation2 + $0x70] sm:$0xff]
  %v50 = vld [vmem:[#allocation2 + $0x78] sm:$0xff]
  %v51 = vld [vmem:[%s0] sm:$0xf]
  %v52 = vld [vmem:[%s0 + $0x4] sm:$0xf]
  %v53 = vld [vmem:[%s0 + $0x8] sm:$0xf]
  %v54 = vld [vmem:[%s0 + $0xc] sm:$0xf]
  %v55 = vld [vmem:[%s0 + $0x10] sm:$0xf]
  %v56 = vld [vmem:[%s0 + $0x14] sm:$0xf]
  %v57 = vld [vmem:[%s0 + $0x18] sm:$0xf]
  %v58 = vld [vmem:[%s0 + $0x1c] sm:$0xf]
  %v59 = vld [vmem:[%s0 + $0x20] sm:$0xf]
  %v60 = vld [vmem:[%s0 + $0x24] sm:$0xf]
  %v61 = vld [vmem:[%s0 + $0x28] sm:$0xf]
  %v62 = vld [vmem:[%s0 + $0x2c] sm:$0xf]
  %v63 = vld [vmem:[%s0 + $0x30] sm:$0xf]
  %v64 = vld [vmem:[%s0 + $0x34] sm:$0xf]
  %v65 = vld [vmem:[%s0 + $0x38] sm:$0xf]
  %v66 = vld [vmem:[%s0 + $0x3c] sm:$0xf]
  %v67 = vld [vmem:[%s1] sm:$0xf]
  %v68 = vld [vmem:[%s1 + $0x4] sm:$0xf]
  %v69 = vld [vmem:[%s1 + $0x8] sm:$0xf]
  %v70 = vld [vmem:[%s1 + $0xc] sm:$0xf]
  %v71 = vld [vmem:[%s1 + $0x10] sm:$0xf]
  %v72 = vld [vmem:[%s1 + $0x14] sm:$0xf]
  %v73 = vld [vmem:[%s1 + $0x18] sm:$0xf]
  %v74 = vld [vmem:[%s1 + $0x1c] sm:$0xf]
  %v75 = vld [vmem:[%s1 + $0x20] sm:$0xf]
  %v76 = vld [vmem:[%s1 + $0x24] sm:$0xf]
  %v77 = vld [vmem:[%s1 + $0x28] sm:$0xf]
  %v78 = vld [vmem:[%s1 + $0x2c] sm:$0xf]
  %v79 = vld [vmem:[%s1 + $0x30] sm:$0xf]
  %v80 = vld [vmem:[%s1 + $0x34] sm:$0xf]
  %v81 = vld [vmem:[%s1 + $0x38] sm:$0xf]
  %v82 = vld [vmem:[%s1 + $0x3c] sm:$0xf]
  %v99 = vunpack.c.l.b16 %v51
  %v100 = vunpack.c.l.b16 %v52
  %v101 = vunpack.c.l.b16 %v53
  %v102 = vunpack.c.l.b16 %v54
  %v103 = vunpack.c.l.b16 %v55
  %v104 = vunpack.c.l.b16 %v56
  %v105 = vunpack.c.l.b16 %v57
  %v106 = vunpack.c.l.b16 %v58
  %v107 = vunpack.c.l.b16 %v59
  %v108 = vunpack.c.l.b16 %v60
  %v109 = vunpack.c.l.b16 %v61
  %v110 = vunpack.c.l.b16 %v62
  %v111 = vunpack.c.l.b16 %v63
  %v112 = vunpack.c.l.b16 %v64
  %v113 = vunpack.c.l.b16 %v65
  %v114 = vunpack.c.l.b16 %v66
  %v115 = vpack.c.b16 %v100, %v99
  %v116 = vpack.c.b16 %v102, %v101
  %v117 = vpack.c.b16 %v104, %v103
  %v118 = vpack.c.b16 %v106, %v105
  %v119 = vpack.c.b16 %v108, %v107
  %v120 = vpack.c.b16 %v110, %v109
  %v121 = vpack.c.b16 %v112, %v111
  %v122 = vpack.c.b16 %v114, %v113
  %v147 = vunpack.c.l.b16 %v67
  %v148 = vunpack.c.l.b16 %v68
  %v149 = vunpack.c.l.b16 %v69
  %v150 = vunpack.c.l.b16 %v70
  %v151 = vunpack.c.l.b16 %v71
  %v152 = vunpack.c.l.b16 %v72
  %v153 = vunpack.c.l.b16 %v73
  %v154 = vunpack.c.l.b16 %v74
  %v155 = vunpack.c.l.b16 %v75
  %v156 = vunpack.c.l.b16 %v76
  %v157 = vunpack.c.l.b16 %v77
  %v158 = vunpack.c.l.b16 %v78
  %v159 = vunpack.c.l.b16 %v79
  %v160 = vunpack.c.l.b16 %v80
  %v161 = vunpack.c.l.b16 %v81
  %v162 = vunpack.c.l.b16 %v82
  %v163 = vpack.c.b16 %v148, %v147
  %v164 = vpack.c.b16 %v150, %v149
  %v165 = vpack.c.b16 %v152, %v151
  %v166 = vpack.c.b16 %v154, %v153
  %v167 = vpack.c.b16 %v156, %v155
  %v168 = vpack.c.b16 %v158, %v157
  %v169 = vpack.c.b16 %v160, %v159
  %v170 = vpack.c.b16 %v162, %v161
  %179 = vmatprep.subr.bf16.mxu0 0
  %180 = vmatpush1.bf16.msra.mxu0 %v163
  %181 = vmatprep.subr.bf16.mxu0 0
  %182 = vmatpush1.bf16.msra.mxu0 %v164
  %183 = vmatprep.subr.bf16.mxu0 0
  %184 = vmatpush1.bf16.msra.mxu0 %v165
  %185 = vmatprep.subr.bf16.mxu0 0
  %186 = vmatpush1.bf16.msra.mxu0 %v166
  %187 = vmatprep.subr.bf16.mxu0 0
  %188 = vmatpush1.bf16.msra.mxu0 %v167
  %189 = vmatprep.subr.bf16.mxu0 0
  %190 = vmatpush1.bf16.msra.mxu0 %v168
  %191 = vmatprep.subr.bf16.mxu0 0
  %192 = vmatpush1.bf16.msra.mxu0 %v169
  %193 = vmatprep.subr.bf16.mxu0 0
  %194 = vmatpush1.bf16.msra.mxu0 %v170
  %195 = vmatprep.subr.bf16.mxu0 0
  %196 = vmatpush1.bf16.msra.mxu0 0
  %197 = vmatprep.subr.bf16.mxu0 0
  %198 = vmatpush1.bf16.msra.mxu0 0
  %199 = vmatprep.subr.bf16.mxu0 0
  %200 = vmatpush1.bf16.msra.mxu0 0
  %201 = vmatprep.subr.bf16.mxu0 0
  %202 = vmatpush1.bf16.msra.mxu0 0
  %203 = vmatprep.subr.bf16.mxu0 0
  %204 = vmatpush1.bf16.msra.mxu0 0
  %205 = vmatprep.subr.bf16.mxu0 0
  %206 = vmatpush1.bf16.msra.mxu0 0
  %207 = vmatprep.subr.bf16.mxu0 0
  %208 = vmatpush1.bf16.msra.mxu0 0
  %209 = vmatprep.subr.bf16.mxu0 0
  %210 = vmatpush1.bf16.msra.mxu0 0
  %211 = vmatprep.mubr.bf16.mxu0 0
  %212 = vmatmul.mubr.bf16.gmra.mrb[0].mxu0 %v115
  %v213 = vpop.f32.mrb[0].mxu0
  %v214 = vadd.f32 0.0, %v213
  %v215 = vpop.f32.mrb[0].mxu0
  %v216 = vpop.f32.mrb[0].mxu0
  %v217 = vadd.f32 0.0, %v216
  %v218 = vpop.f32.mrb[0].mxu0
  %219 = vmatprep.mubr.bf16.mxu0 0
  %220 = vmatmul.mubr.bf16.gmra.mrb[0].mxu0 %v116
  %v221 = vpop.f32.mrb[0].mxu0
  %v222 = vadd.f32 0.0, %v221
  %v223 = vpop.f32.mrb[0].mxu0
  %v224 = vpop.f32.mrb[0].mxu0
  %v225 = vadd.f32 0.0, %v224
  %v226 = vpop.f32.mrb[0].mxu0
  %227 = vmatprep.mubr.bf16.mxu0 0
  %228 = vmatmul.mubr.bf16.gmra.mrb[0].mxu0 %v117
  %v229 = vpop.f32.mrb[0].mxu0
  %v230 = vadd.f32 0.0, %v229
  %v231 = vpop.f32.mrb[0].mxu0
  %v232 = vpop.f32.mrb[0].mxu0
  %v233 = vadd.f32 0.0, %v232
  %v234 = vpop.f32.mrb[0].mxu0
  %235 = vmatprep.mubr.bf16.mxu0 0
  %236 = vmatmul.mubr.bf16.gmra.mrb[0].mxu0 %v118
  %v237 = vpop.f32.mrb[0].mxu0
  %v238 = vadd.f32 0.0, %v237
  %v239 = vpop.f32.mrb[0].mxu0
  %v240 = vpop.f32.mrb[0].mxu0
  %v241 = vadd.f32 0.0, %v240
  %v242 = vpop.f32.mrb[0].mxu0
  %243 = vmatprep.mubr.bf16.mxu0 0
  %244 = vmatmul.mubr.bf16.gmra.mrb[0].mxu0 %v119
  %v245 = vpop.f32.mrb[0].mxu0
  %v246 = vadd.f32 0.0, %v245
  %v247 = vpop.f32.mrb[0].mxu0
  %v248 = vpop.f32.mrb[0].mxu0
  %v249 = vadd.f32 0.0, %v248
  %v250 = vpop.f32.mrb[0].mxu0
  %251 = vmatprep.mubr.bf16.mxu0 0
  %252 = vmatmul.mubr.bf16.gmra.mrb[0].mxu0 %v120
  %v253 = vpop.f32.mrb[0].mxu0
  %v254 = vadd.f32 0.0, %v253
  %v255 = vpop.f32.mrb[0].mxu0
  %v256 = vpop.f32.mrb[0].mxu0
  %v257 = vadd.f32 0.0, %v256
  %v258 = vpop.f32.mrb[0].mxu0
  %259 = vmatprep.mubr.bf16.mxu0 0
  %260 = vmatmul.mubr.bf16.gmra.mrb[0].mxu0 %v121
  %v261 = vpop.f32.mrb[0].mxu0
  %v262 = vadd.f32 0.0, %v261
  %v263 = vpop.f32.mrb[0].mxu0
  %v264 = vpop.f32.mrb[0].mxu0
  %v265 = vadd.f32 0.0, %v264
  %v266 = vpop.f32.mrb[0].mxu0
  %267 = vmatprep.mubr.bf16.mxu0 0
  %268 = vmatmul.mubr.bf16.gmra.mrb[0].mxu0 %v122
  %v269 = vpop.f32.mrb[0].mxu0
  %v270 = vadd.f32 0.0, %v269
  %v271 = vpop.f32.mrb[0].mxu0
  %v272 = vpop.f32.mrb[0].mxu0
  %v273 = vadd.f32 0.0, %v272
  %v274 = vpop.f32.mrb[0].mxu0
  %275 = vdwg.mxu0
  %v276 = vadd.f32 %v35, %v214
  %v277 = vadd.f32 %v36, %v217
  %v278 = vadd.f32 %v37, %v222
  %v279 = vadd.f32 %v38, %v225
  %v280 = vadd.f32 %v39, %v230
  %v281 = vadd.f32 %v40, %v233
  %v282 = vadd.f32 %v41, %v238
  %v283 = vadd.f32 %v42, %v241
  %v284 = vadd.f32 %v43, %v246
  %v285 = vadd.f32 %v44, %v249
  %v286 = vadd.f32 %v45, %v254
  %v287 = vadd.f32 %v46, %v257
  %v288 = vadd.f32 %v47, %v262
  %v289 = vadd.f32 %v48, %v265
  %v290 = vadd.f32 %v49, %v270
  %v291 = vadd.f32 %v50, %v273
  %292 = vst [vmem:[#allocation2] sm:$0xff] %v276
  %293 = vst [vmem:[#allocation2 + $0x8] sm:$0xff] %v277
  %294 = vst [vmem:[#allocation2 + $0x10] sm:$0xff] %v278
  %295 = vst [vmem:[#allocation2 + $0x18] sm:$0xff] %v279
  %296 = vst [vmem:[#allocation2 + $0x20] sm:$0xff] %v280
  %297 = vst [vmem:[#allocation2 + $0x28] sm:$0xff] %v281
  %298 = vst [vmem:[#allocation2 + $0x30] sm:$0xff] %v282
  %299 = vst [vmem:[#allocation2 + $0x38] sm:$0xff] %v283
  %300 = vst [vmem:[#allocation2 + $0x40] sm:$0xff] %v284
  %301 = vst [vmem:[#allocation2 + $0x48] sm:$0xff] %v285
  %302 = vst [vmem:[#allocation2 + $0x50] sm:$0xff] %v286
  %303 = vst [vmem:[#allocation2 + $0x58] sm:$0xff] %v287
  %304 = vst [vmem:[#allocation2 + $0x60] sm:$0xff] %v288
  %305 = vst [vmem:[#allocation2 + $0x68] sm:$0xff] %v289
  %306 = vst [vmem:[#allocation2 + $0x70] sm:$0xff] %v290
  %307 = vst [vmem:[#allocation2 + $0x78] sm:$0xff] %v291
  // Predicated region
  $region18: #{fanogan_forward.11} parent=0 // pred_check
    %p308 = pneg %p15
  $region19: #{fanogan_forward.11} parent=0 // pred_check_branch
    %310 = sbr.rel (%p308) target = $region21
  $region20: #{fanogan_forward.11} parent=0 // pred_region
    %v311 = vld [vmem:[#allocation2] sm:$0xff]
    %v312 = vld [vmem:[#allocation2 + $0x8] sm:$0xff]
    %v313 = vld [vmem:[#allocation2 + $0x10] sm:$0xff]
    %v314 = vld [vmem:[#allocation2 + $0x18] sm:$0xff]
    %v315 = vld [vmem:[#allocation2 + $0x20] sm:$0xff]
    %v316 = vld [vmem:[#allocation2 + $0x28] sm:$0xff]
    %v317 = vld [vmem:[#allocation2 + $0x30] sm:$0xff]
    %v318 = vld [vmem:[#allocation2 + $0x38] sm:$0xff]
    %v319 = vld [vmem:[#allocation2 + $0x40] sm:$0xff]
    %v320 = vld [vmem:[#allocation2 + $0x48] sm:$0xff]
    %v321 = vld [vmem:[#allocation2 + $0x50] sm:$0xff]
    %v322 = vld [vmem:[#allocation2 + $0x58] sm:$0xff]
    %v323 = vld [vmem:[#allocation2 + $0x60] sm:$0xff]
    %v324 = vld [vmem:[#allocation2 + $0x68] sm:$0xff]
    %v325 = vld [vmem:[#allocation2 + $0x70] sm:$0xff]
    %v326 = vld [vmem:[#allocation2 + $0x78] sm:$0xff]
    %v327 = vld [vmem:[%s2] sm:$0x1]
    %v329 = vlaneseq
    %v330 = vshrl.u32 %v329, 7
    %v331 = vsub.s32 0, %v330
    %v332 = vrot.slane %v327, %v331
    %v334 = vadd.f32 %v311, %v332
    %v335 = vadd.f32 %v312, %v332
    %v336 = vadd.f32 %v313, %v332
    %v337 = vadd.f32 %v314, %v332
    %v338 = vadd.f32 %v315, %v332
    %v339 = vadd.f32 %v316, %v332
    %v340 = vadd.f32 %v317, %v332
    %v341 = vadd.f32 %v318, %v332
    %v342 = vadd.f32 %v319, %v332
    %v343 = vadd.f32 %v320, %v332
    %v344 = vadd.f32 %v321, %v332
    %v345 = vadd.f32 %v322, %v332
    %v346 = vadd.f32 %v323, %v332
    %v347 = vadd.f32 %v324, %v332
    %v348 = vadd.f32 %v325, %v332
    %v349 = vadd.f32 %v326, %v332
    %vm350 = vcmp.gt.f32.partialorder %v334, 0.0
    %vm351 = vcmp.gt.f32.partialorder %v335, 0.0
    %vm352 = vcmp.gt.f32.partialorder %v336, 0.0
    %vm353 = vcmp.gt.f32.partialorder %v337, 0.0
    %vm354 = vcmp.gt.f32.partialorder %v338, 0.0
    %vm355 = vcmp.gt.f32.partialorder %v339, 0.0
    %vm356 = vcmp.gt.f32.partialorder %v340, 0.0
    %vm357 = vcmp.gt.f32.partialorder %v341, 0.0
    %vm358 = vcmp.gt.f32.partialorder %v342, 0.0
    %vm359 = vcmp.gt.f32.partialorder %v343, 0.0
    %vm360 = vcmp.gt.f32.partialorder %v344, 0.0
    %vm361 = vcmp.gt.f32.partialorder %v345, 0.0
    %vm362 = vcmp.gt.f32.partialorder %v346, 0.0
    %vm363 = vcmp.gt.f32.partialorder %v347, 0.0
    %vm364 = vcmp.gt.f32.partialorder %v348, 0.0
    %vm365 = vcmp.gt.f32.partialorder %v349, 0.0
    %v366 = vmul.f32 %v334, 0.2
    %v367 = vmul.f32 %v335, 0.2
    %v368 = vmul.f32 %v336, 0.2
    %v369 = vmul.f32 %v337, 0.2
    %v370 = vmul.f32 %v338, 0.2
    %v371 = vmul.f32 %v339, 0.2
    %v372 = vmul.f32 %v340, 0.2
    %v373 = vmul.f32 %v341, 0.2
    %v374 = vmul.f32 %v342, 0.2
    %v375 = vmul.f32 %v343, 0.2
    %v376 = vmul.f32 %v344, 0.2
    %v377 = vmul.f32 %v345, 0.2
    %v378 = vmul.f32 %v346, 0.2
    %v379 = vmul.f32 %v347, 0.2
    %v380 = vmul.f32 %v348, 0.2
    %v381 = vmul.f32 %v349, 0.2
    %v382 = vsel %vm350, %v334, %v366
    %v383 = vsel %vm351, %v335, %v367
    %v384 = vsel %vm352, %v336, %v368
    %v385 = vsel %vm353, %v337, %v369
    %v386 = vsel %vm354, %v338, %v370
    %v387 = vsel %vm355, %v339, %v371
    %v388 = vsel %vm356, %v340, %v372
    %v389 = vsel %vm357, %v341, %v373
    %v390 = vsel %vm358, %v342, %v374
    %v391 = vsel %vm359, %v343, %v375
    %v392 = vsel %vm360, %v344, %v376
    %v393 = vsel %vm361, %v345, %v377
    %v394 = vsel %vm362, %v346, %v378
    %v395 = vsel %vm363, %v347, %v379
    %v396 = vsel %vm364, %v348, %v380
    %v397 = vsel %vm365, %v349, %v381
    %398 = vst [vmem:[%s3] sm:$0xff] %v382
    %399 = vst [vmem:[%s3 + $0x8] sm:$0xff] %v383
    %400 = vst [vmem:[%s3 + $0x10] sm:$0xff] %v384
    %401 = vst [vmem:[%s3 + $0x18] sm:$0xff] %v385
    %402 = vst [vmem:[%s3 + $0x20] sm:$0xff] %v386
    %403 = vst [vmem:[%s3 + $0x28] sm:$0xff] %v387
    %404 = vst [vmem:[%s3 + $0x30] sm:$0xff] %v388
    %405 = vst [vmem:[%s3 + $0x38] sm:$0xff] %v389
    %406 = vst [vmem:[%s3 + $0x40] sm:$0xff] %v390
    %407 = vst [vmem:[%s3 + $0x48] sm:$0xff] %v391
    %408 = vst [vmem:[%s3 + $0x50] sm:$0xff] %v392
    %409 = vst [vmem:[%s3 + $0x58] sm:$0xff] %v393
    %410 = vst [vmem:[%s3 + $0x60] sm:$0xff] %v394
    %411 = vst [vmem:[%s3 + $0x68] sm:$0xff] %v395
    %412 = vst [vmem:[%s3 + $0x70] sm:$0xff] %v396
    %413 = vst [vmem:[%s3 + $0x78] sm:$0xff] %v397
  $region21: #{fanogan_forward.11} parent=0 // pred_fallthru
    _
  // Predicated region
  $region22: #{fanogan_forward.11} parent=0 // pred_check
    _
  $region23: #{fanogan_forward.11} parent=0 // pred_check_branch
    %415 = sbr.rel (0) target = $region25
  $region24: #{fanogan_forward.11} parent=0 // pred_region
    _
  $region25: #{fanogan_forward.11} parent=0 // pred_fallthru
    _
  // Predicated region
  $region26: #{fanogan_forward.11} parent=0 // pred_check
    _
  $region27: #{fanogan_forward.11} parent=0 // pred_check_branch
    %417 = sbr.rel (0) target = $region29
  $region28: #{fanogan_forward.11} parent=0 // pred_region
    _
  $region29: #{fanogan_forward.11} parent=0 // pred_fallthru
    _

// kernel: fanogan_forward.13
$region0: #{fanogan_forward.13}
  #allocation0 [shape = 'u32[]', space=smem, size = 0x4, offset = 0x4, fixed_abs, tag = 'smem constant byte address 0x4 - core index']
  #allocation1 [shape = 'u32[144,128]{1,0:T(1,128)}', space=vmem, size = 0x12000, scoped, tag = 'internal scratch']
  #allocation2 [shape = 'f32[8,128]{1,0:T(8,128)}', space=vmem, size = 0x1000, scoped, tag = 'scratch operand']
  %s0 = inlined_call_operand.vmem [shape: bf16[8,128], index: 0, kind: input, shape index: {}]
  %s1 = inlined_call_operand.vmem [shape: bf16[128,128], index: 1, kind: input, shape index: {}]
  %s2 = inlined_call_operand.vmem [shape: f32[1,128], index: 2, kind: input, shape index: {}]
  %s3 = inlined_call_operand.vmem [shape: f32[8,128], index: 3, kind: output, shape index: {}]
  %s4 = sld [smem:[#allocation0]]
  $region30: #{fanogan_forward.13} parent=0
    _
  %s6 = ssub.s32 1, %s4
  %s7 = scalar_select 0, %s6, %s4
  // Predicated region
  $region2: #{fanogan_forward.13} parent=0 // pred_check
    _
  $region3: #{fanogan_forward.13} parent=0 // pred_check_branch
    %9 = sbr.rel (0) target = $region5
  $region4: #{fanogan_forward.13} parent=0 // pred_region
    _
  $region5: #{fanogan_forward.13} parent=0 // pred_fallthru
    _
  // Predicated region
  $region6: #{fanogan_forward.13} parent=0 // pred_check
    _
  $region7: #{fanogan_forward.13} parent=0 // pred_check_branch
    %11 = sbr.rel (0) target = $region9
  $region8: #{fanogan_forward.13} parent=0 // pred_region
    _
  $region9: #{fanogan_forward.13} parent=0 // pred_fallthru
    _
  // Predicated region
  $region10: #{fanogan_forward.13} parent=0 // pred_check
    _
  $region11: #{fanogan_forward.13} parent=0 // pred_check_branch
    %13 = sbr.rel (0) target = $region13
  $region12: #{fanogan_forward.13} parent=0 // pred_region
    _
  $region13: #{fanogan_forward.13} parent=0 // pred_fallthru
    _
  %p15 = scmp.eq.s32.totalorder 0, 0
  // Predicated region
  $region14: #{fanogan_forward.13} parent=0 // pred_check
    %p16 = pneg %p15
  $region15: #{fanogan_forward.13} parent=0 // pred_check_branch
    %18 = sbr.rel (%p16) target = $region17
  $region16: #{fanogan_forward.13} parent=0 // pred_region
    %19 = vst [vmem:[#allocation2] sm:$0xff] 0.0
  $region17: #{fanogan_forward.13} parent=0 // pred_fallthru
    _
  %v20 = vld [vmem:[#allocation2] sm:$0xff]
  %v21 = vld [vmem:[%s0] sm:$0xf]
  %v22 = vld [vmem:[%s1] sm:$0xf]
  %v23 = vld [vmem:[%s1 + $0x4] sm:$0xf]
  %v24 = vld [vmem:[%s1 + $0x8] sm:$0xf]
  %v25 = vld [vmem:[%s1 + $0xc] sm:$0xf]
  %v26 = vld [vmem:[%s1 + $0x10] sm:$0xf]
  %v27 = vld [vmem:[%s1 + $0x14] sm:$0xf]
  %v28 = vld [vmem:[%s1 + $0x18] sm:$0xf]
  %v29 = vld [vmem:[%s1 + $0x1c] sm:$0xf]
  %v30 = vld [vmem:[%s1 + $0x20] sm:$0xf]
  %v31 = vld [vmem:[%s1 + $0x24] sm:$0xf]
  %v32 = vld [vmem:[%s1 + $0x28] sm:$0xf]
  %v33 = vld [vmem:[%s1 + $0x2c] sm:$0xf]
  %v34 = vld [vmem:[%s1 + $0x30] sm:$0xf]
  %v35 = vld [vmem:[%s1 + $0x34] sm:$0xf]
  %v36 = vld [vmem:[%s1 + $0x38] sm:$0xf]
  %v37 = vld [vmem:[%s1 + $0x3c] sm:$0xf]
  %v54 = vunpack.c.l.b16 %v22
  %v55 = vunpack.c.l.b16 %v23
  %v56 = vunpack.c.l.b16 %v24
  %v57 = vunpack.c.l.b16 %v25
  %v58 = vunpack.c.l.b16 %v26
  %v59 = vunpack.c.l.b16 %v27
  %v60 = vunpack.c.l.b16 %v28
  %v61 = vunpack.c.l.b16 %v29
  %v62 = vunpack.c.l.b16 %v30
  %v63 = vunpack.c.l.b16 %v31
  %v64 = vunpack.c.l.b16 %v32
  %v65 = vunpack.c.l.b16 %v33
  %v66 = vunpack.c.l.b16 %v34
  %v67 = vunpack.c.l.b16 %v35
  %v68 = vunpack.c.l.b16 %v36
  %v69 = vunpack.c.l.b16 %v37
  %v70 = vpack.c.b16 %v55, %v54
  %v71 = vpack.c.b16 %v57, %v56
  %v72 = vpack.c.b16 %v59, %v58
  %v73 = vpack.c.b16 %v61, %v60
  %v74 = vpack.c.b16 %v63, %v62
  %v75 = vpack.c.b16 %v65, %v64
  %v76 = vpack.c.b16 %v67, %v66
  %v77 = vpack.c.b16 %v69, %v68
  %86 = vmatprep.subr.bf16.mxu0 0
  %87 = vmatpush1.bf16.msra.mxu0 %v70
  %88 = vmatprep.subr.bf16.mxu0 0
  %89 = vmatpush1.bf16.msra.mxu0 %v71
  %90 = vmatprep.subr.bf16.mxu0 0
  %91 = vmatpush1.bf16.msra.mxu0 %v72
  %92 = vmatprep.subr.bf16.mxu0 0
  %93 = vmatpush1.bf16.msra.mxu0 %v73
  %94 = vmatprep.subr.bf16.mxu0 0
  %95 = vmatpush1.bf16.msra.mxu0 %v74
  %96 = vmatprep.subr.bf16.mxu0 0
  %97 = vmatpush1.bf16.msra.mxu0 %v75
  %98 = vmatprep.subr.bf16.mxu0 0
  %99 = vmatpush1.bf16.msra.mxu0 %v76
  %100 = vmatprep.subr.bf16.mxu0 0
  %101 = vmatpush1.bf16.msra.mxu0 %v77
  %102 = vmatprep.subr.bf16.mxu0 0
  %103 = vmatpush1.bf16.msra.mxu0 0
  %104 = vmatprep.subr.bf16.mxu0 0
  %105 = vmatpush1.bf16.msra.mxu0 0
  %106 = vmatprep.subr.bf16.mxu0 0
  %107 = vmatpush1.bf16.msra.mxu0 0
  %108 = vmatprep.subr.bf16.mxu0 0
  %109 = vmatpush1.bf16.msra.mxu0 0
  %110 = vmatprep.subr.bf16.mxu0 0
  %111 = vmatpush1.bf16.msra.mxu0 0
  %112 = vmatprep.subr.bf16.mxu0 0
  %113 = vmatpush1.bf16.msra.mxu0 0
  %114 = vmatprep.subr.bf16.mxu0 0
  %115 = vmatpush1.bf16.msra.mxu0 0
  %116 = vmatprep.subr.bf16.mxu0 0
  %117 = vmatpush1.bf16.msra.mxu0 0
  %118 = vmatprep.mubr.bf16.mxu0 0
  %119 = vmatmul.mubr.bf16.gmra.mrb[0].mxu0 %v21
  %v120 = vpop.f32.mrb[0].mxu0
  %v121 = vadd.f32 0.0, %v120
  %v122 = vpop.f32.mrb[0].mxu0
  %v123 = vpop.f32.mrb[0].mxu0
  %v124 = vpop.f32.mrb[0].mxu0
  %125 = vdwg.mxu0
  %v126 = vadd.f32 %v20, %v121
  %127 = vst [vmem:[#allocation2] sm:$0xff] %v126
  // Predicated region
  $region18: #{fanogan_forward.13} parent=0 // pred_check
    %p128 = pneg %p15
  $region19: #{fanogan_forward.13} parent=0 // pred_check_branch
    %130 = sbr.rel (%p128) target = $region21
  $region20: #{fanogan_forward.13} parent=0 // pred_region
    %v131 = vld [vmem:[#allocation2] sm:$0xff]
    %v132 = vld [vmem:[%s2] sm:$0x1]
    %v134 = vlaneseq
    %v135 = vshrl.u32 %v134, 7
    %v136 = vsub.s32 0, %v135
    %v137 = vrot.slane %v132, %v136
    %v139 = vadd.f32 %v131, %v137
    %vm140 = vcmp.gt.f32.partialorder %v139, 0.0
    %v141 = vmul.f32 %v139, 0.2
    %v142 = vsel %vm140, %v139, %v141
    %143 = vst [vmem:[%s3] sm:$0xff] %v142
  $region21: #{fanogan_forward.13} parent=0 // pred_fallthru
    _
  // Predicated region
  $region22: #{fanogan_forward.13} parent=0 // pred_check
    _
  $region23: #{fanogan_forward.13} parent=0 // pred_check_branch
    %145 = sbr.rel (0) target = $region25
  $region24: #{fanogan_forward.13} parent=0 // pred_region
    _
  $region25: #{fanogan_forward.13} parent=0 // pred_fallthru
    _
  // Predicated region
  $region26: #{fanogan_forward.13} parent=0 // pred_check
    _
  $region27: #{fanogan_forward.13} parent=0 // pred_check_branch
    %147 = sbr.rel (0) target = $region29
  $region28: #{fanogan_forward.13} parent=0 // pred_region
    _
  $region29: #{fanogan_forward.13} parent=0 // pred_fallthru
    _

// kernel: fanogan_forward.14
$region0: #{fanogan_forward.14}
  #allocation0 [shape = 'u32[]', space=smem, size = 0x4, offset = 0x4, fixed_abs, tag = 'smem constant byte address 0x4 - core index']
  #allocation1 [shape = 'u32[144,128]{1,0:T(1,128)}', space=vmem, size = 0x12000, scoped, tag = 'internal scratch']
  #allocation2 [shape = 'f32[8,128]{1,0:T(8,128)}', space=vmem, size = 0x1000, scoped, tag = 'scratch operand']
  %s0 = inlined_call_operand.vmem [shape: bf16[8,128], index: 0, kind: input, shape index: {}]
  %s1 = inlined_call_operand.vmem [shape: bf16[128,128], index: 1, kind: input, shape index: {}]
  %s2 = inlined_call_operand.vmem [shape: f32[1,128], index: 2, kind: input, shape index: {}]
  %s3 = inlined_call_operand.vmem [shape: f32[8,128], index: 3, kind: output, shape index: {}]
  %s4 = sld [smem:[#allocation0]]
  $region30: #{fanogan_forward.14} parent=0
    _
  %s6 = ssub.s32 1, %s4
  %s7 = scalar_select 0, %s6, %s4
  // Predicated region
  $region2: #{fanogan_forward.14} parent=0 // pred_check
    _
  $region3: #{fanogan_forward.14} parent=0 // pred_check_branch
    %9 = sbr.rel (0) target = $region5
  $region4: #{fanogan_forward.14} parent=0 // pred_region
    _
  $region5: #{fanogan_forward.14} parent=0 // pred_fallthru
    _
  // Predicated region
  $region6: #{fanogan_forward.14} parent=0 // pred_check
    _
  $region7: #{fanogan_forward.14} parent=0 // pred_check_branch
    %11 = sbr.rel (0) target = $region9
  $region8: #{fanogan_forward.14} parent=0 // pred_region
    _
  $region9: #{fanogan_forward.14} parent=0 // pred_fallthru
    _
  // Predicated region
  $region10: #{fanogan_forward.14} parent=0 // pred_check
    _
  $region11: #{fanogan_forward.14} parent=0 // pred_check_branch
    %13 = sbr.rel (0) target = $region13
  $region12: #{fanogan_forward.14} parent=0 // pred_region
    _
  $region13: #{fanogan_forward.14} parent=0 // pred_fallthru
    _
  %p15 = scmp.eq.s32.totalorder 0, 0
  // Predicated region
  $region14: #{fanogan_forward.14} parent=0 // pred_check
    %p16 = pneg %p15
  $region15: #{fanogan_forward.14} parent=0 // pred_check_branch
    %18 = sbr.rel (%p16) target = $region17
  $region16: #{fanogan_forward.14} parent=0 // pred_region
    %19 = vst [vmem:[#allocation2] sm:$0xff] 0.0
  $region17: #{fanogan_forward.14} parent=0 // pred_fallthru
    _
  %v20 = vld [vmem:[#allocation2] sm:$0xff]
  %v21 = vld [vmem:[%s0] sm:$0xf]
  %v22 = vld [vmem:[%s1] sm:$0xf]
  %v23 = vld [vmem:[%s1 + $0x4] sm:$0xf]
  %v24 = vld [vmem:[%s1 + $0x8] sm:$0xf]
  %v25 = vld [vmem:[%s1 + $0xc] sm:$0xf]
  %v26 = vld [vmem:[%s1 + $0x10] sm:$0xf]
  %v27 = vld [vmem:[%s1 + $0x14] sm:$0xf]
  %v28 = vld [vmem:[%s1 + $0x18] sm:$0xf]
  %v29 = vld [vmem:[%s1 + $0x1c] sm:$0xf]
  %v30 = vld [vmem:[%s1 + $0x20] sm:$0xf]
  %v31 = vld [vmem:[%s1 + $0x24] sm:$0xf]
  %v32 = vld [vmem:[%s1 + $0x28] sm:$0xf]
  %v33 = vld [vmem:[%s1 + $0x2c] sm:$0xf]
  %v34 = vld [vmem:[%s1 + $0x30] sm:$0xf]
  %v35 = vld [vmem:[%s1 + $0x34] sm:$0xf]
  %v36 = vld [vmem:[%s1 + $0x38] sm:$0xf]
  %v37 = vld [vmem:[%s1 + $0x3c] sm:$0xf]
  %v54 = vunpack.c.l.b16 %v22
  %v55 = vunpack.c.l.b16 %v23
  %v56 = vunpack.c.l.b16 %v24
  %v57 = vunpack.c.l.b16 %v25
  %v58 = vunpack.c.l.b16 %v26
  %v59 = vunpack.c.l.b16 %v27
  %v60 = vunpack.c.l.b16 %v28
  %v61 = vunpack.c.l.b16 %v29
  %v62 = vunpack.c.l.b16 %v30
  %v63 = vunpack.c.l.b16 %v31
  %v64 = vunpack.c.l.b16 %v32
  %v65 = vunpack.c.l.b16 %v33
  %v66 = vunpack.c.l.b16 %v34
  %v67 = vunpack.c.l.b16 %v35
  %v68 = vunpack.c.l.b16 %v36
  %v69 = vunpack.c.l.b16 %v37
  %v70 = vpack.c.b16 %v55, %v54
  %v71 = vpack.c.b16 %v57, %v56
  %v72 = vpack.c.b16 %v59, %v58
  %v73 = vpack.c.b16 %v61, %v60
  %v74 = vpack.c.b16 %v63, %v62
  %v75 = vpack.c.b16 %v65, %v64
  %v76 = vpack.c.b16 %v67, %v66
  %v77 = vpack.c.b16 %v69, %v68
  %86 = vmatprep.subr.bf16.mxu0 0
  %87 = vmatpush1.bf16.msra.mxu0 %v70
  %88 = vmatprep.subr.bf16.mxu0 0
  %89 = vmatpush1.bf16.msra.mxu0 %v71
  %90 = vmatprep.subr.bf16.mxu0 0
  %91 = vmatpush1.bf16.msra.mxu0 %v72
  %92 = vmatprep.subr.bf16.mxu0 0
  %93 = vmatpush1.bf16.msra.mxu0 %v73
  %94 = vmatprep.subr.bf16.mxu0 0
  %95 = vmatpush1.bf16.msra.mxu0 %v74
  %96 = vmatprep.subr.bf16.mxu0 0
  %97 = vmatpush1.bf16.msra.mxu0 %v75
  %98 = vmatprep.subr.bf16.mxu0 0
  %99 = vmatpush1.bf16.msra.mxu0 %v76
  %100 = vmatprep.subr.bf16.mxu0 0
  %101 = vmatpush1.bf16.msra.mxu0 %v77
  %102 = vmatprep.subr.bf16.mxu0 0
  %103 = vmatpush1.bf16.msra.mxu0 0
  %104 = vmatprep.subr.bf16.mxu0 0
  %105 = vmatpush1.bf16.msra.mxu0 0
  %106 = vmatprep.subr.bf16.mxu0 0
  %107 = vmatpush1.bf16.msra.mxu0 0
  %108 = vmatprep.subr.bf16.mxu0 0
  %109 = vmatpush1.bf16.msra.mxu0 0
  %110 = vmatprep.subr.bf16.mxu0 0
  %111 = vmatpush1.bf16.msra.mxu0 0
  %112 = vmatprep.subr.bf16.mxu0 0
  %113 = vmatpush1.bf16.msra.mxu0 0
  %114 = vmatprep.subr.bf16.mxu0 0
  %115 = vmatpush1.bf16.msra.mxu0 0
  %116 = vmatprep.subr.bf16.mxu0 0
  %117 = vmatpush1.bf16.msra.mxu0 0
  %118 = vmatprep.mubr.bf16.mxu0 0
  %119 = vmatmul.mubr.bf16.gmra.mrb[0].mxu0 %v21
  %v120 = vpop.f32.mrb[0].mxu0
  %v121 = vadd.f32 0.0, %v120
  %v122 = vpop.f32.mrb[0].mxu0
  %v123 = vpop.f32.mrb[0].mxu0
  %v124 = vpop.f32.mrb[0].mxu0
  %125 = vdwg.mxu0
  %v126 = vadd.f32 %v20, %v121
  %127 = vst [vmem:[#allocation2] sm:$0xff] %v126
  // Predicated region
  $region18: #{fanogan_forward.14} parent=0 // pred_check
    %p128 = pneg %p15
  $region19: #{fanogan_forward.14} parent=0 // pred_check_branch
    %130 = sbr.rel (%p128) target = $region21
  $region20: #{fanogan_forward.14} parent=0 // pred_region
    %v131 = vld [vmem:[#allocation2] sm:$0xff]
    %v132 = vld [vmem:[%s2] sm:$0x1]
    %v134 = vlaneseq
    %v135 = vshrl.u32 %v134, 7
    %v136 = vsub.s32 0, %v135
    %v137 = vrot.slane %v132, %v136
    %v139 = vadd.f32 %v131, %v137
    %140 = vst [vmem:[%s3] sm:$0xff] %v139
  $region21: #{fanogan_forward.14} parent=0 // pred_fallthru
    _
  // Predicated region
  $region22: #{fanogan_forward.14} parent=0 // pred_check
    _
  $region23: #{fanogan_forward.14} parent=0 // pred_check_branch
    %142 = sbr.rel (0) target = $region25
  $region24: #{fanogan_forward.14} parent=0 // pred_region
    _
  $region25: #{fanogan_forward.14} parent=0 // pred_fallthru
    _
  // Predicated region
  $region26: #{fanogan_forward.14} parent=0 // pred_check
    _
  $region27: #{fanogan_forward.14} parent=0 // pred_check_branch
    %144 = sbr.rel (0) target = $region29
  $region28: #{fanogan_forward.14} parent=0 // pred_region
    _
  $region29: #{fanogan_forward.14} parent=0 // pred_fallthru
    _

// kernel: fanogan_forward.15
$region0: #{fanogan_forward.15}
  #allocation0 [shape = 'u32[]', space=smem, size = 0x4, offset = 0x4, fixed_abs, tag = 'smem constant byte address 0x4 - core index']
  #allocation1 [shape = 'u32[144,128]{1,0:T(1,128)}', space=vmem, size = 0x12000, scoped, tag = 'internal scratch']
  #allocation2 [shape = 'f32[8,128]{1,0:T(8,128)}', space=vmem, size = 0x1000, scoped, tag = 'scratch operand']
  %s0 = inlined_call_operand.vmem [shape: bf16[8,128], index: 0, kind: input, shape index: {}]
  %s1 = inlined_call_operand.vmem [shape: bf16[128,128], index: 1, kind: input, shape index: {}]
  %s2 = inlined_call_operand.vmem [shape: f32[1,128], index: 2, kind: input, shape index: {}]
  %s3 = inlined_call_operand.vmem [shape: f32[8,128], index: 3, kind: output, shape index: {}]
  %s4 = sld [smem:[#allocation0]]
  $region30: #{fanogan_forward.15} parent=0
    _
  %s6 = ssub.s32 1, %s4
  %s7 = scalar_select 0, %s6, %s4
  // Predicated region
  $region2: #{fanogan_forward.15} parent=0 // pred_check
    _
  $region3: #{fanogan_forward.15} parent=0 // pred_check_branch
    %9 = sbr.rel (0) target = $region5
  $region4: #{fanogan_forward.15} parent=0 // pred_region
    _
  $region5: #{fanogan_forward.15} parent=0 // pred_fallthru
    _
  // Predicated region
  $region6: #{fanogan_forward.15} parent=0 // pred_check
    _
  $region7: #{fanogan_forward.15} parent=0 // pred_check_branch
    %11 = sbr.rel (0) target = $region9
  $region8: #{fanogan_forward.15} parent=0 // pred_region
    _
  $region9: #{fanogan_forward.15} parent=0 // pred_fallthru
    _
  // Predicated region
  $region10: #{fanogan_forward.15} parent=0 // pred_check
    _
  $region11: #{fanogan_forward.15} parent=0 // pred_check_branch
    %13 = sbr.rel (0) target = $region13
  $region12: #{fanogan_forward.15} parent=0 // pred_region
    _
  $region13: #{fanogan_forward.15} parent=0 // pred_fallthru
    _
  %p15 = scmp.eq.s32.totalorder 0, 0
  // Predicated region
  $region14: #{fanogan_forward.15} parent=0 // pred_check
    %p16 = pneg %p15
  $region15: #{fanogan_forward.15} parent=0 // pred_check_branch
    %18 = sbr.rel (%p16) target = $region17
  $region16: #{fanogan_forward.15} parent=0 // pred_region
    %19 = vst [vmem:[#allocation2] sm:$0xff] 0.0
  $region17: #{fanogan_forward.15} parent=0 // pred_fallthru
    _
  %v20 = vld [vmem:[#allocation2] sm:$0xff]
  %v21 = vld [vmem:[%s0] sm:$0xf]
  %v22 = vld [vmem:[%s1] sm:$0xf]
  %v23 = vld [vmem:[%s1 + $0x4] sm:$0xf]
  %v24 = vld [vmem:[%s1 + $0x8] sm:$0xf]
  %v25 = vld [vmem:[%s1 + $0xc] sm:$0xf]
  %v26 = vld [vmem:[%s1 + $0x10] sm:$0xf]
  %v27 = vld [vmem:[%s1 + $0x14] sm:$0xf]
  %v28 = vld [vmem:[%s1 + $0x18] sm:$0xf]
  %v29 = vld [vmem:[%s1 + $0x1c] sm:$0xf]
  %v30 = vld [vmem:[%s1 + $0x20] sm:$0xf]
  %v31 = vld [vmem:[%s1 + $0x24] sm:$0xf]
  %v32 = vld [vmem:[%s1 + $0x28] sm:$0xf]
  %v33 = vld [vmem:[%s1 + $0x2c] sm:$0xf]
  %v34 = vld [vmem:[%s1 + $0x30] sm:$0xf]
  %v35 = vld [vmem:[%s1 + $0x34] sm:$0xf]
  %v36 = vld [vmem:[%s1 + $0x38] sm:$0xf]
  %v37 = vld [vmem:[%s1 + $0x3c] sm:$0xf]
  %v54 = vunpack.c.l.b16 %v22
  %v55 = vunpack.c.l.b16 %v23
  %v56 = vunpack.c.l.b16 %v24
  %v57 = vunpack.c.l.b16 %v25
  %v58 = vunpack.c.l.b16 %v26
  %v59 = vunpack.c.l.b16 %v27
  %v60 = vunpack.c.l.b16 %v28
  %v61 = vunpack.c.l.b16 %v29
  %v62 = vunpack.c.l.b16 %v30
  %v63 = vunpack.c.l.b16 %v31
  %v64 = vunpack.c.l.b16 %v32
  %v65 = vunpack.c.l.b16 %v33
  %v66 = vunpack.c.l.b16 %v34
  %v67 = vunpack.c.l.b16 %v35
  %v68 = vunpack.c.l.b16 %v36
  %v69 = vunpack.c.l.b16 %v37
  %v70 = vpack.c.b16 %v55, %v54
  %v71 = vpack.c.b16 %v57, %v56
  %v72 = vpack.c.b16 %v59, %v58
  %v73 = vpack.c.b16 %v61, %v60
  %v74 = vpack.c.b16 %v63, %v62
  %v75 = vpack.c.b16 %v65, %v64
  %v76 = vpack.c.b16 %v67, %v66
  %v77 = vpack.c.b16 %v69, %v68
  %86 = vmatprep.subr.bf16.mxu0 0
  %87 = vmatpush1.bf16.msra.mxu0 %v70
  %88 = vmatprep.subr.bf16.mxu0 0
  %89 = vmatpush1.bf16.msra.mxu0 %v71
  %90 = vmatprep.subr.bf16.mxu0 0
  %91 = vmatpush1.bf16.msra.mxu0 %v72
  %92 = vmatprep.subr.bf16.mxu0 0
  %93 = vmatpush1.bf16.msra.mxu0 %v73
  %94 = vmatprep.subr.bf16.mxu0 0
  %95 = vmatpush1.bf16.msra.mxu0 %v74
  %96 = vmatprep.subr.bf16.mxu0 0
  %97 = vmatpush1.bf16.msra.mxu0 %v75
  %98 = vmatprep.subr.bf16.mxu0 0
  %99 = vmatpush1.bf16.msra.mxu0 %v76
  %100 = vmatprep.subr.bf16.mxu0 0
  %101 = vmatpush1.bf16.msra.mxu0 %v77
  %102 = vmatprep.subr.bf16.mxu0 0
  %103 = vmatpush1.bf16.msra.mxu0 0
  %104 = vmatprep.subr.bf16.mxu0 0
  %105 = vmatpush1.bf16.msra.mxu0 0
  %106 = vmatprep.subr.bf16.mxu0 0
  %107 = vmatpush1.bf16.msra.mxu0 0
  %108 = vmatprep.subr.bf16.mxu0 0
  %109 = vmatpush1.bf16.msra.mxu0 0
  %110 = vmatprep.subr.bf16.mxu0 0
  %111 = vmatpush1.bf16.msra.mxu0 0
  %112 = vmatprep.subr.bf16.mxu0 0
  %113 = vmatpush1.bf16.msra.mxu0 0
  %114 = vmatprep.subr.bf16.mxu0 0
  %115 = vmatpush1.bf16.msra.mxu0 0
  %116 = vmatprep.subr.bf16.mxu0 0
  %117 = vmatpush1.bf16.msra.mxu0 0
  %118 = vmatprep.mubr.bf16.mxu0 0
  %119 = vmatmul.mubr.bf16.gmra.mrb[0].mxu0 %v21
  %v120 = vpop.f32.mrb[0].mxu0
  %v121 = vadd.f32 0.0, %v120
  %v122 = vpop.f32.mrb[0].mxu0
  %v123 = vpop.f32.mrb[0].mxu0
  %v124 = vpop.f32.mrb[0].mxu0
  %125 = vdwg.mxu0
  %v126 = vadd.f32 %v20, %v121
  %127 = vst [vmem:[#allocation2] sm:$0xff] %v126
  // Predicated region
  $region18: #{fanogan_forward.15} parent=0 // pred_check
    %p128 = pneg %p15
  $region19: #{fanogan_forward.15} parent=0 // pred_check_branch
    %130 = sbr.rel (%p128) target = $region21
  $region20: #{fanogan_forward.15} parent=0 // pred_region
    %v131 = vld [vmem:[#allocation2] sm:$0xff]
    %v132 = vld [vmem:[%s2] sm:$0x1]
    %v134 = vlaneseq
    %v135 = vshrl.u32 %v134, 7
    %v136 = vsub.s32 0, %v135
    %v137 = vrot.slane %v132, %v136
    %v139 = vadd.f32 %v131, %v137
    %v140 = vmax.f32 %v139, 0.0
    %141 = vst [vmem:[%s3] sm:$0xff] %v140
  $region21: #{fanogan_forward.15} parent=0 // pred_fallthru
    _
  // Predicated region
  $region22: #{fanogan_forward.15} parent=0 // pred_check
    _
  $region23: #{fanogan_forward.15} parent=0 // pred_check_branch
    %143 = sbr.rel (0) target = $region25
  $region24: #{fanogan_forward.15} parent=0 // pred_region
    _
  $region25: #{fanogan_forward.15} parent=0 // pred_fallthru
    _
  // Predicated region
  $region26: #{fanogan_forward.15} parent=0 // pred_check
    _
  $region27: #{fanogan_forward.15} parent=0 // pred_check_branch
    %145 = sbr.rel (0) target = $region29
  $region28: #{fanogan_forward.15} parent=0 // pred_region
    _
  $region29: #{fanogan_forward.15} parent=0 // pred_fallthru
    _

// kernel: fanogan_forward.17
$region0: #{fanogan_forward.17}
  #allocation0 [shape = 'u32[]', space=smem, size = 0x4, offset = 0x4, fixed_abs, tag = 'smem constant byte address 0x4 - core index']
  #allocation1 [shape = 'u32[144,128]{1,0:T(1,128)}', space=vmem, size = 0x12000, scoped, tag = 'internal scratch']
  #allocation2 [shape = 'f32[32,128]{1,0:T(8,128)}', space=vmem, size = 0x4000, scoped, tag = 'scratch operand']
  %s0 = inlined_call_operand.vmem [shape: bf16[32,128], index: 0, kind: input, shape index: {}]
  %s1 = inlined_call_operand.vmem [shape: bf16[128,128], index: 1, kind: input, shape index: {}]
  %s2 = inlined_call_operand.vmem [shape: f32[1,128], index: 2, kind: input, shape index: {}]
  %s3 = inlined_call_operand.vmem [shape: f32[32,128], index: 3, kind: output, shape index: {}]
  %s4 = sld [smem:[#allocation0]]
  $region30: #{fanogan_forward.17} parent=0
    _
  %s6 = ssub.s32 1, %s4
  %s7 = scalar_select 0, %s6, %s4
  // Predicated region
  $region2: #{fanogan_forward.17} parent=0 // pred_check
    _
  $region3: #{fanogan_forward.17} parent=0 // pred_check_branch
    %9 = sbr.rel (0) target = $region5
  $region4: #{fanogan_forward.17} parent=0 // pred_region
    _
  $region5: #{fanogan_forward.17} parent=0 // pred_fallthru
    _
  // Predicated region
  $region6: #{fanogan_forward.17} parent=0 // pred_check
    _
  $region7: #{fanogan_forward.17} parent=0 // pred_check_branch
    %11 = sbr.rel (0) target = $region9
  $region8: #{fanogan_forward.17} parent=0 // pred_region
    _
  $region9: #{fanogan_forward.17} parent=0 // pred_fallthru
    _
  // Predicated region
  $region10: #{fanogan_forward.17} parent=0 // pred_check
    _
  $region11: #{fanogan_forward.17} parent=0 // pred_check_branch
    %13 = sbr.rel (0) target = $region13
  $region12: #{fanogan_forward.17} parent=0 // pred_region
    _
  $region13: #{fanogan_forward.17} parent=0 // pred_fallthru
    _
  %p15 = scmp.eq.s32.totalorder 0, 0
  // Predicated region
  $region14: #{fanogan_forward.17} parent=0 // pred_check
    %p16 = pneg %p15
  $region15: #{fanogan_forward.17} parent=0 // pred_check_branch
    %18 = sbr.rel (%p16) target = $region17
  $region16: #{fanogan_forward.17} parent=0 // pred_region
    %19 = vst [vmem:[#allocation2] sm:$0xff] 0.0
    %20 = vst [vmem:[#allocation2 + $0x8] sm:$0xff] 0.0
    %21 = vst [vmem:[#allocation2 + $0x10] sm:$0xff] 0.0
    %22 = vst [vmem:[#allocation2 + $0x18] sm:$0xff] 0.0
  $region17: #{fanogan_forward.17} parent=0 // pred_fallthru
    _
  %v23 = vld [vmem:[#allocation2] sm:$0xff]
  %v24 = vld [vmem:[#allocation2 + $0x8] sm:$0xff]
  %v25 = vld [vmem:[#allocation2 + $0x10] sm:$0xff]
  %v26 = vld [vmem:[#allocation2 + $0x18] sm:$0xff]
  %v27 = vld [vmem:[%s0] sm:$0xf]
  %v28 = vld [vmem:[%s0 + $0x4] sm:$0xf]
  %v29 = vld [vmem:[%s0 + $0x8] sm:$0xf]
  %v30 = vld [vmem:[%s0 + $0xc] sm:$0xf]
  %v31 = vld [vmem:[%s1] sm:$0xf]
  %v32 = vld [vmem:[%s1 + $0x4] sm:$0xf]
  %v33 = vld [vmem:[%s1 + $0x8] sm:$0xf]
  %v34 = vld [vmem:[%s1 + $0xc] sm:$0xf]
  %v35 = vld [vmem:[%s1 + $0x10] sm:$0xf]
  %v36 = vld [vmem:[%s1 + $0x14] sm:$0xf]
  %v37 = vld [vmem:[%s1 + $0x18] sm:$0xf]
  %v38 = vld [vmem:[%s1 + $0x1c] sm:$0xf]
  %v39 = vld [vmem:[%s1 + $0x20] sm:$0xf]
  %v40 = vld [vmem:[%s1 + $0x24] sm:$0xf]
  %v41 = vld [vmem:[%s1 + $0x28] sm:$0xf]
  %v42 = vld [vmem:[%s1 + $0x2c] sm:$0xf]
  %v43 = vld [vmem:[%s1 + $0x30] sm:$0xf]
  %v44 = vld [vmem:[%s1 + $0x34] sm:$0xf]
  %v45 = vld [vmem:[%s1 + $0x38] sm:$0xf]
  %v46 = vld [vmem:[%s1 + $0x3c] sm:$0xf]
  %v51 = vunpack.c.l.b16 %v27
  %v52 = vunpack.c.l.b16 %v28
  %v53 = vunpack.c.l.b16 %v29
  %v54 = vunpack.c.l.b16 %v30
  %v55 = vpack.c.b16 %v52, %v51
  %v56 = vpack.c.b16 %v54, %v53
  %v75 = vunpack.c.l.b16 %v31
  %v76 = vunpack.c.l.b16 %v32
  %v77 = vunpack.c.l.b16 %v33
  %v78 = vunpack.c.l.b16 %v34
  %v79 = vunpack.c.l.b16 %v35
  %v80 = vunpack.c.l.b16 %v36
  %v81 = vunpack.c.l.b16 %v37
  %v82 = vunpack.c.l.b16 %v38
  %v83 = vunpack.c.l.b16 %v39
  %v84 = vunpack.c.l.b16 %v40
  %v85 = vunpack.c.l.b16 %v41
  %v86 = vunpack.c.l.b16 %v42
  %v87 = vunpack.c.l.b16 %v43
  %v88 = vunpack.c.l.b16 %v44
  %v89 = vunpack.c.l.b16 %v45
  %v90 = vunpack.c.l.b16 %v46
  %v91 = vpack.c.b16 %v76, %v75
  %v92 = vpack.c.b16 %v78, %v77
  %v93 = vpack.c.b16 %v80, %v79
  %v94 = vpack.c.b16 %v82, %v81
  %v95 = vpack.c.b16 %v84, %v83
  %v96 = vpack.c.b16 %v86, %v85
  %v97 = vpack.c.b16 %v88, %v87
  %v98 = vpack.c.b16 %v90, %v89
  %107 = vmatprep.subr.bf16.mxu0 0
  %108 = vmatpush1.bf16.msra.mxu0 %v91
  %109 = vmatprep.subr.bf16.mxu0 0
  %110 = vmatpush1.bf16.msra.mxu0 %v92
  %111 = vmatprep.subr.bf16.mxu0 0
  %112 = vmatpush1.bf16.msra.mxu0 %v93
  %113 = vmatprep.subr.bf16.mxu0 0
  %114 = vmatpush1.bf16.msra.mxu0 %v94
  %115 = vmatprep.subr.bf16.mxu0 0
  %116 = vmatpush1.bf16.msra.mxu0 %v95
  %117 = vmatprep.subr.bf16.mxu0 0
  %118 = vmatpush1.bf16.msra.mxu0 %v96
  %119 = vmatprep.subr.bf16.mxu0 0
  %120 = vmatpush1.bf16.msra.mxu0 %v97
  %121 = vmatprep.subr.bf16.mxu0 0
  %122 = vmatpush1.bf16.msra.mxu0 %v98
  %123 = vmatprep.subr.bf16.mxu0 0
  %124 = vmatpush1.bf16.msra.mxu0 0
  %125 = vmatprep.subr.bf16.mxu0 0
  %126 = vmatpush1.bf16.msra.mxu0 0
  %127 = vmatprep.subr.bf16.mxu0 0
  %128 = vmatpush1.bf16.msra.mxu0 0
  %129 = vmatprep.subr.bf16.mxu0 0
  %130 = vmatpush1.bf16.msra.mxu0 0
  %131 = vmatprep.subr.bf16.mxu0 0
  %132 = vmatpush1.bf16.msra.mxu0 0
  %133 = vmatprep.subr.bf16.mxu0 0
  %134 = vmatpush1.bf16.msra.mxu0 0
  %135 = vmatprep.subr.bf16.mxu0 0
  %136 = vmatpush1.bf16.msra.mxu0 0
  %137 = vmatprep.subr.bf16.mxu0 0
  %138 = vmatpush1.bf16.msra.mxu0 0
  %139 = vmatprep.mubr.bf16.mxu0 0
  %140 = vmatmul.mubr.bf16.gmra.mrb[0].mxu0 %v55
  %v141 = vpop.f32.mrb[0].mxu0
  %v142 = vadd.f32 0.0, %v141
  %v143 = vpop.f32.mrb[0].mxu0
  %v144 = vpop.f32.mrb[0].mxu0
  %v145 = vadd.f32 0.0, %v144
  %v146 = vpop.f32.mrb[0].mxu0
  %147 = vmatprep.mubr.bf16.mxu0 0
  %148 = vmatmul.mubr.bf16.gmra.mrb[0].mxu0 %v56
  %v149 = vpop.f32.mrb[0].mxu0
  %v150 = vadd.f32 0.0, %v149
  %v151 = vpop.f32.mrb[0].mxu0
  %v152 = vpop.f32.mrb[0].mxu0
  %v153 = vadd.f32 0.0, %v152
  %v154 = vpop.f32.mrb[0].mxu0
  %155 = vdwg.mxu0
  %v156 = vadd.f32 %v23, %v142
  %v157 = vadd.f32 %v24, %v145
  %v158 = vadd.f32 %v25, %v150
  %v159 = vadd.f32 %v26, %v153
  %160 = vst [vmem:[#allocation2] sm:$0xff] %v156
  %161 = vst [vmem:[#allocation2 + $0x8] sm:$0xff] %v157
  %162 = vst [vmem:[#allocation2 + $0x10] sm:$0xff] %v158
  %163 = vst [vmem:[#allocation2 + $0x18] sm:$0xff] %v159
  // Predicated region
  $region18: #{fanogan_forward.17} parent=0 // pred_check
    %p164 = pneg %p15
  $region19: #{fanogan_forward.17} parent=0 // pred_check_branch
    %166 = sbr.rel (%p164) target = $region21
  $region20: #{fanogan_forward.17} parent=0 // pred_region
    %v167 = vld [vmem:[#allocation2] sm:$0xff]
    %v168 = vld [vmem:[#allocation2 + $0x8] sm:$0xff]
    %v169 = vld [vmem:[#allocation2 + $0x10] sm:$0xff]
    %v170 = vld [vmem:[#allocation2 + $0x18] sm:$0xff]
    %v171 = vld [vmem:[%s2] sm:$0x1]
    %v173 = vlaneseq
    %v174 = vshrl.u32 %v173, 7
    %v175 = vsub.s32 0, %v174
    %v176 = vrot.slane %v171, %v175
    %v178 = vadd.f32 %v167, %v176
    %v179 = vadd.f32 %v168, %v176
    %v180 = vadd.f32 %v169, %v176
    %v181 = vadd.f32 %v170, %v176
    %v182 = vmax.f32 %v178, 0.0
    %v183 = vmax.f32 %v179, 0.0
    %v184 = vmax.f32 %v180, 0.0
    %v185 = vmax.f32 %v181, 0.0
    %186 = vst [vmem:[%s3] sm:$0xff] %v182
    %187 = vst [vmem:[%s3 + $0x8] sm:$0xff] %v183
    %188 = vst [vmem:[%s3 + $0x10] sm:$0xff] %v184
    %189 = vst [vmem:[%s3 + $0x18] sm:$0xff] %v185
  $region21: #{fanogan_forward.17} parent=0 // pred_fallthru
    _
  // Predicated region
  $region22: #{fanogan_forward.17} parent=0 // pred_check
    _
  $region23: #{fanogan_forward.17} parent=0 // pred_check_branch
    %191 = sbr.rel (0) target = $region25
  $region24: #{fanogan_forward.17} parent=0 // pred_region
    _
  $region25: #{fanogan_forward.17} parent=0 // pred_fallthru
    _
  // Predicated region
  $region26: #{fanogan_forward.17} parent=0 // pred_check
    _
  $region27: #{fanogan_forward.17} parent=0 // pred_check_branch
    %193 = sbr.rel (0) target = $region29
  $region28: #{fanogan_forward.17} parent=0 // pred_region
    _
  $region29: #{fanogan_forward.17} parent=0 // pred_fallthru
    _

// kernel: fanogan_forward.18
$region0: #{fanogan_forward.18}
  #allocation0 [shape = 'u32[]', space=smem, size = 0x4, offset = 0x4, fixed_abs, tag = 'smem constant byte address 0x4 - core index']
  #allocation1 [shape = 'u32[144,128]{1,0:T(1,128)}', space=vmem, size = 0x12000, scoped, tag = 'internal scratch']
  #allocation2 [shape = 'f32[128,128]{1,0:T(8,128)}', space=vmem, size = 0x10000, scoped, tag = 'scratch operand']
  %s0 = inlined_call_operand.vmem [shape: bf16[128,128], index: 0, kind: input, shape index: {}]
  %s1 = inlined_call_operand.vmem [shape: bf16[128,128], index: 1, kind: input, shape index: {}]
  %s2 = inlined_call_operand.vmem [shape: f32[1,128], index: 2, kind: input, shape index: {}]
  %s3 = inlined_call_operand.vmem [shape: f32[128,128], index: 3, kind: output, shape index: {}]
  %s4 = sld [smem:[#allocation0]]
  $region30: #{fanogan_forward.18} parent=0
    _
  %s6 = ssub.s32 1, %s4
  %s7 = scalar_select 0, %s6, %s4
  // Predicated region
  $region2: #{fanogan_forward.18} parent=0 // pred_check
    _
  $region3: #{fanogan_forward.18} parent=0 // pred_check_branch
    %9 = sbr.rel (0) target = $region5
  $region4: #{fanogan_forward.18} parent=0 // pred_region
    _
  $region5: #{fanogan_forward.18} parent=0 // pred_fallthru
    _
  // Predicated region
  $region6: #{fanogan_forward.18} parent=0 // pred_check
    _
  $region7: #{fanogan_forward.18} parent=0 // pred_check_branch
    %11 = sbr.rel (0) target = $region9
  $region8: #{fanogan_forward.18} parent=0 // pred_region
    _
  $region9: #{fanogan_forward.18} parent=0 // pred_fallthru
    _
  // Predicated region
  $region10: #{fanogan_forward.18} parent=0 // pred_check
    _
  $region11: #{fanogan_forward.18} parent=0 // pred_check_branch
    %13 = sbr.rel (0) target = $region13
  $region12: #{fanogan_forward.18} parent=0 // pred_region
    _
  $region13: #{fanogan_forward.18} parent=0 // pred_fallthru
    _
  %p15 = scmp.eq.s32.totalorder 0, 0
  // Predicated region
  $region14: #{fanogan_forward.18} parent=0 // pred_check
    %p16 = pneg %p15
  $region15: #{fanogan_forward.18} parent=0 // pred_check_branch
    %18 = sbr.rel (%p16) target = $region17
  $region16: #{fanogan_forward.18} parent=0 // pred_region
    %19 = vst [vmem:[#allocation2] sm:$0xff] 0.0
    %20 = vst [vmem:[#allocation2 + $0x8] sm:$0xff] 0.0
    %21 = vst [vmem:[#allocation2 + $0x10] sm:$0xff] 0.0
    %22 = vst [vmem:[#allocation2 + $0x18] sm:$0xff] 0.0
    %23 = vst [vmem:[#allocation2 + $0x20] sm:$0xff] 0.0
    %24 = vst [vmem:[#allocation2 + $0x28] sm:$0xff] 0.0
    %25 = vst [vmem:[#allocation2 + $0x30] sm:$0xff] 0.0
    %26 = vst [vmem:[#allocation2 + $0x38] sm:$0xff] 0.0
    %27 = vst [vmem:[#allocation2 + $0x40] sm:$0xff] 0.0
    %28 = vst [vmem:[#allocation2 + $0x48] sm:$0xff] 0.0
    %29 = vst [vmem:[#allocation2 + $0x50] sm:$0xff] 0.0
    %30 = vst [vmem:[#allocation2 + $0x58] sm:$0xff] 0.0
    %31 = vst [vmem:[#allocation2 + $0x60] sm:$0xff] 0.0
    %32 = vst [vmem:[#allocation2 + $0x68] sm:$0xff] 0.0
    %33 = vst [vmem:[#allocation2 + $0x70] sm:$0xff] 0.0
    %34 = vst [vmem:[#allocation2 + $0x78] sm:$0xff] 0.0
  $region17: #{fanogan_forward.18} parent=0 // pred_fallthru
    _
  %v35 = vld [vmem:[#allocation2] sm:$0xff]
  %v36 = vld [vmem:[#allocation2 + $0x8] sm:$0xff]
  %v37 = vld [vmem:[#allocation2 + $0x10] sm:$0xff]
  %v38 = vld [vmem:[#allocation2 + $0x18] sm:$0xff]
  %v39 = vld [vmem:[#allocation2 + $0x20] sm:$0xff]
  %v40 = vld [vmem:[#allocation2 + $0x28] sm:$0xff]
  %v41 = vld [vmem:[#allocation2 + $0x30] sm:$0xff]
  %v42 = vld [vmem:[#allocation2 + $0x38] sm:$0xff]
  %v43 = vld [vmem:[#allocation2 + $0x40] sm:$0xff]
  %v44 = vld [vmem:[#allocation2 + $0x48] sm:$0xff]
  %v45 = vld [vmem:[#allocation2 + $0x50] sm:$0xff]
  %v46 = vld [vmem:[#allocation2 + $0x58] sm:$0xff]
  %v47 = vld [vmem:[#allocation2 + $0x60] sm:$0xff]
  %v48 = vld [vmem:[#allocation2 + $0x68] sm:$0xff]
  %v49 = vld [vmem:[#allocation2 + $0x70] sm:$0xff]
  %v50 = vld [vmem:[#allocation2 + $0x78] sm:$0xff]
  %v51 = vld [vmem:[%s0] sm:$0xf]
  %v52 = vld [vmem:[%s0 + $0x4] sm:$0xf]
  %v53 = vld [vmem:[%s0 + $0x8] sm:$0xf]
  %v54 = vld [vmem:[%s0 + $0xc] sm:$0xf]
  %v55 = vld [vmem:[%s0 + $0x10] sm:$0xf]
  %v56 = vld [vmem:[%s0 + $0x14] sm:$0xf]
  %v57 = vld [vmem:[%s0 + $0x18] sm:$0xf]
  %v58 = vld [vmem:[%s0 + $0x1c] sm:$0xf]
  %v59 = vld [vmem:[%s0 + $0x20] sm:$0xf]
  %v60 = vld [vmem:[%s0 + $0x24] sm:$0xf]
  %v61 = vld [vmem:[%s0 + $0x28] sm:$0xf]
  %v62 = vld [vmem:[%s0 + $0x2c] sm:$0xf]
  %v63 = vld [vmem:[%s0 + $0x30] sm:$0xf]
  %v64 = vld [vmem:[%s0 + $0x34] sm:$0xf]
  %v65 = vld [vmem:[%s0 + $0x38] sm:$0xf]
  %v66 = vld [vmem:[%s0 + $0x3c] sm:$0xf]
  %v67 = vld [vmem:[%s1] sm:$0xf]
  %v68 = vld [vmem:[%s1 + $0x4] sm:$0xf]
  %v69 = vld [vmem:[%s1 + $0x8] sm:$0xf]
  %v70 = vld [vmem:[%s1 + $0xc] sm:$0xf]
  %v71 = vld [vmem:[%s1 + $0x10] sm:$0xf]
  %v72 = vld [vmem:[%s1 + $0x14] sm:$0xf]
  %v73 = vld [vmem:[%s1 + $0x18] sm:$0xf]
  %v74 = vld [vmem:[%s1 + $0x1c] sm:$0xf]
  %v75 = vld [vmem:[%s1 + $0x20] sm:$0xf]
  %v76 = vld [vmem:[%s1 + $0x24] sm:$0xf]
  %v77 = vld [vmem:[%s1 + $0x28] sm:$0xf]
  %v78 = vld [vmem:[%s1 + $0x2c] sm:$0xf]
  %v79 = vld [vmem:[%s1 + $0x30] sm:$0xf]
  %v80 = vld [vmem:[%s1 + $0x34] sm:$0xf]
  %v81 = vld [vmem:[%s1 + $0x38] sm:$0xf]
  %v82 = vld [vmem:[%s1 + $0x3c] sm:$0xf]
  %v99 = vunpack.c.l.b16 %v51
  %v100 = vunpack.c.l.b16 %v52
  %v101 = vunpack.c.l.b16 %v53
  %v102 = vunpack.c.l.b16 %v54
  %v103 = vunpack.c.l.b16 %v55
  %v104 = vunpack.c.l.b16 %v56
  %v105 = vunpack.c.l.b16 %v57
  %v106 = vunpack.c.l.b16 %v58
  %v107 = vunpack.c.l.b16 %v59
  %v108 = vunpack.c.l.b16 %v60
  %v109 = vunpack.c.l.b16 %v61
  %v110 = vunpack.c.l.b16 %v62
  %v111 = vunpack.c.l.b16 %v63
  %v112 = vunpack.c.l.b16 %v64
  %v113 = vunpack.c.l.b16 %v65
  %v114 = vunpack.c.l.b16 %v66
  %v115 = vpack.c.b16 %v100, %v99
  %v116 = vpack.c.b16 %v102, %v101
  %v117 = vpack.c.b16 %v104, %v103
  %v118 = vpack.c.b16 %v106, %v105
  %v119 = vpack.c.b16 %v108, %v107
  %v120 = vpack.c.b16 %v110, %v109
  %v121 = vpack.c.b16 %v112, %v111
  %v122 = vpack.c.b16 %v114, %v113
  %v147 = vunpack.c.l.b16 %v67
  %v148 = vunpack.c.l.b16 %v68
  %v149 = vunpack.c.l.b16 %v69
  %v150 = vunpack.c.l.b16 %v70
  %v151 = vunpack.c.l.b16 %v71
  %v152 = vunpack.c.l.b16 %v72
  %v153 = vunpack.c.l.b16 %v73
  %v154 = vunpack.c.l.b16 %v74
  %v155 = vunpack.c.l.b16 %v75
  %v156 = vunpack.c.l.b16 %v76
  %v157 = vunpack.c.l.b16 %v77
  %v158 = vunpack.c.l.b16 %v78
  %v159 = vunpack.c.l.b16 %v79
  %v160 = vunpack.c.l.b16 %v80
  %v161 = vunpack.c.l.b16 %v81
  %v162 = vunpack.c.l.b16 %v82
  %v163 = vpack.c.b16 %v148, %v147
  %v164 = vpack.c.b16 %v150, %v149
  %v165 = vpack.c.b16 %v152, %v151
  %v166 = vpack.c.b16 %v154, %v153
  %v167 = vpack.c.b16 %v156, %v155
  %v168 = vpack.c.b16 %v158, %v157
  %v169 = vpack.c.b16 %v160, %v159
  %v170 = vpack.c.b16 %v162, %v161
  %179 = vmatprep.subr.bf16.mxu0 0
  %180 = vmatpush1.bf16.msra.mxu0 %v163
  %181 = vmatprep.subr.bf16.mxu0 0
  %182 = vmatpush1.bf16.msra.mxu0 %v164
  %183 = vmatprep.subr.bf16.mxu0 0
  %184 = vmatpush1.bf16.msra.mxu0 %v165
  %185 = vmatprep.subr.bf16.mxu0 0
  %186 = vmatpush1.bf16.msra.mxu0 %v166
  %187 = vmatprep.subr.bf16.mxu0 0
  %188 = vmatpush1.bf16.msra.mxu0 %v167
  %189 = vmatprep.subr.bf16.mxu0 0
  %190 = vmatpush1.bf16.msra.mxu0 %v168
  %191 = vmatprep.subr.bf16.mxu0 0
  %192 = vmatpush1.bf16.msra.mxu0 %v169
  %193 = vmatprep.subr.bf16.mxu0 0
  %194 = vmatpush1.bf16.msra.mxu0 %v170
  %195 = vmatprep.subr.bf16.mxu0 0
  %196 = vmatpush1.bf16.msra.mxu0 0
  %197 = vmatprep.subr.bf16.mxu0 0
  %198 = vmatpush1.bf16.msra.mxu0 0
  %199 = vmatprep.subr.bf16.mxu0 0
  %200 = vmatpush1.bf16.msra.mxu0 0
  %201 = vmatprep.subr.bf16.mxu0 0
  %202 = vmatpush1.bf16.msra.mxu0 0
  %203 = vmatprep.subr.bf16.mxu0 0
  %204 = vmatpush1.bf16.msra.mxu0 0
  %205 = vmatprep.subr.bf16.mxu0 0
  %206 = vmatpush1.bf16.msra.mxu0 0
  %207 = vmatprep.subr.bf16.mxu0 0
  %208 = vmatpush1.bf16.msra.mxu0 0
  %209 = vmatprep.subr.bf16.mxu0 0
  %210 = vmatpush1.bf16.msra.mxu0 0
  %211 = vmatprep.mubr.bf16.mxu0 0
  %212 = vmatmul.mubr.bf16.gmra.mrb[0].mxu0 %v115
  %v213 = vpop.f32.mrb[0].mxu0
  %v214 = vadd.f32 0.0, %v213
  %v215 = vpop.f32.mrb[0].mxu0
  %v216 = vpop.f32.mrb[0].mxu0
  %v217 = vadd.f32 0.0, %v216
  %v218 = vpop.f32.mrb[0].mxu0
  %219 = vmatprep.mubr.bf16.mxu0 0
  %220 = vmatmul.mubr.bf16.gmra.mrb[0].mxu0 %v116
  %v221 = vpop.f32.mrb[0].mxu0
  %v222 = vadd.f32 0.0, %v221
  %v223 = vpop.f32.mrb[0].mxu0
  %v224 = vpop.f32.mrb[0].mxu0
  %v225 = vadd.f32 0.0, %v224
  %v226 = vpop.f32.mrb[0].mxu0
  %227 = vmatprep.mubr.bf16.mxu0 0
  %228 = vmatmul.mubr.bf16.gmra.mrb[0].mxu0 %v117
  %v229 = vpop.f32.mrb[0].mxu0
  %v230 = vadd.f32 0.0, %v229
  %v231 = vpop.f32.mrb[0].mxu0
  %v232 = vpop.f32.mrb[0].mxu0
  %v233 = vadd.f32 0.0, %v232
  %v234 = vpop.f32.mrb[0].mxu0
  %235 = vmatprep.mubr.bf16.mxu0 0
  %236 = vmatmul.mubr.bf16.gmra.mrb[0].mxu0 %v118
  %v237 = vpop.f32.mrb[0].mxu0
  %v238 = vadd.f32 0.0, %v237
  %v239 = vpop.f32.mrb[0].mxu0
  %v240 = vpop.f32.mrb[0].mxu0
  %v241 = vadd.f32 0.0, %v240
  %v242 = vpop.f32.mrb[0].mxu0
  %243 = vmatprep.mubr.bf16.mxu0 0
  %244 = vmatmul.mubr.bf16.gmra.mrb[0].mxu0 %v119
  %v245 = vpop.f32.mrb[0].mxu0
  %v246 = vadd.f32 0.0, %v245
  %v247 = vpop.f32.mrb[0].mxu0
  %v248 = vpop.f32.mrb[0].mxu0
  %v249 = vadd.f32 0.0, %v248
  %v250 = vpop.f32.mrb[0].mxu0
  %251 = vmatprep.mubr.bf16.mxu0 0
  %252 = vmatmul.mubr.bf16.gmra.mrb[0].mxu0 %v120
  %v253 = vpop.f32.mrb[0].mxu0
  %v254 = vadd.f32 0.0, %v253
  %v255 = vpop.f32.mrb[0].mxu0
  %v256 = vpop.f32.mrb[0].mxu0
  %v257 = vadd.f32 0.0, %v256
  %v258 = vpop.f32.mrb[0].mxu0
  %259 = vmatprep.mubr.bf16.mxu0 0
  %260 = vmatmul.mubr.bf16.gmra.mrb[0].mxu0 %v121
  %v261 = vpop.f32.mrb[0].mxu0
  %v262 = vadd.f32 0.0, %v261
  %v263 = vpop.f32.mrb[0].mxu0
  %v264 = vpop.f32.mrb[0].mxu0
  %v265 = vadd.f32 0.0, %v264
  %v266 = vpop.f32.mrb[0].mxu0
  %267 = vmatprep.mubr.bf16.mxu0 0
  %268 = vmatmul.mubr.bf16.gmra.mrb[0].mxu0 %v122
  %v269 = vpop.f32.mrb[0].mxu0
  %v270 = vadd.f32 0.0, %v269
  %v271 = vpop.f32.mrb[0].mxu0
  %v272 = vpop.f32.mrb[0].mxu0
  %v273 = vadd.f32 0.0, %v272
  %v274 = vpop.f32.mrb[0].mxu0
  %275 = vdwg.mxu0
  %v276 = vadd.f32 %v35, %v214
  %v277 = vadd.f32 %v36, %v217
  %v278 = vadd.f32 %v37, %v222
  %v279 = vadd.f32 %v38, %v225
  %v280 = vadd.f32 %v39, %v230
  %v281 = vadd.f32 %v40, %v233
  %v282 = vadd.f32 %v41, %v238
  %v283 = vadd.f32 %v42, %v241
  %v284 = vadd.f32 %v43, %v246
  %v285 = vadd.f32 %v44, %v249
  %v286 = vadd.f32 %v45, %v254
  %v287 = vadd.f32 %v46, %v257
  %v288 = vadd.f32 %v47, %v262
  %v289 = vadd.f32 %v48, %v265
  %v290 = vadd.f32 %v49, %v270
  %v291 = vadd.f32 %v50, %v273
  %292 = vst [vmem:[#allocation2] sm:$0xff] %v276
  %293 = vst [vmem:[#allocation2 + $0x8] sm:$0xff] %v277
  %294 = vst [vmem:[#allocation2 + $0x10] sm:$0xff] %v278
  %295 = vst [vmem:[#allocation2 + $0x18] sm:$0xff] %v279
  %296 = vst [vmem:[#allocation2 + $0x20] sm:$0xff] %v280
  %297 = vst [vmem:[#allocation2 + $0x28] sm:$0xff] %v281
  %298 = vst [vmem:[#allocation2 + $0x30] sm:$0xff] %v282
  %299 = vst [vmem:[#allocation2 + $0x38] sm:$0xff] %v283
  %300 = vst [vmem:[#allocation2 + $0x40] sm:$0xff] %v284
  %301 = vst [vmem:[#allocation2 + $0x48] sm:$0xff] %v285
  %302 = vst [vmem:[#allocation2 + $0x50] sm:$0xff] %v286
  %303 = vst [vmem:[#allocation2 + $0x58] sm:$0xff] %v287
  %304 = vst [vmem:[#allocation2 + $0x60] sm:$0xff] %v288
  %305 = vst [vmem:[#allocation2 + $0x68] sm:$0xff] %v289
  %306 = vst [vmem:[#allocation2 + $0x70] sm:$0xff] %v290
  %307 = vst [vmem:[#allocation2 + $0x78] sm:$0xff] %v291
  // Predicated region
  $region18: #{fanogan_forward.18} parent=0 // pred_check
    %p308 = pneg %p15
  $region19: #{fanogan_forward.18} parent=0 // pred_check_branch
    %310 = sbr.rel (%p308) target = $region21
  $region20: #{fanogan_forward.18} parent=0 // pred_region
    %v311 = vld [vmem:[#allocation2] sm:$0xff]
    %v312 = vld [vmem:[#allocation2 + $0x8] sm:$0xff]
    %v313 = vld [vmem:[#allocation2 + $0x10] sm:$0xff]
    %v314 = vld [vmem:[#allocation2 + $0x18] sm:$0xff]
    %v315 = vld [vmem:[#allocation2 + $0x20] sm:$0xff]
    %v316 = vld [vmem:[#allocation2 + $0x28] sm:$0xff]
    %v317 = vld [vmem:[#allocation2 + $0x30] sm:$0xff]
    %v318 = vld [vmem:[#allocation2 + $0x38] sm:$0xff]
    %v319 = vld [vmem:[#allocation2 + $0x40] sm:$0xff]
    %v320 = vld [vmem:[#allocation2 + $0x48] sm:$0xff]
    %v321 = vld [vmem:[#allocation2 + $0x50] sm:$0xff]
    %v322 = vld [vmem:[#allocation2 + $0x58] sm:$0xff]
    %v323 = vld [vmem:[#allocation2 + $0x60] sm:$0xff]
    %v324 = vld [vmem:[#allocation2 + $0x68] sm:$0xff]
    %v325 = vld [vmem:[#allocation2 + $0x70] sm:$0xff]
    %v326 = vld [vmem:[#allocation2 + $0x78] sm:$0xff]
    %v327 = vld [vmem:[%s2] sm:$0x1]
    %v329 = vlaneseq
    %v330 = vshrl.u32 %v329, 7
    %v331 = vsub.s32 0, %v330
    %v332 = vrot.slane %v327, %v331
    %v334 = vadd.f32 %v311, %v332
    %v335 = vadd.f32 %v312, %v332
    %v336 = vadd.f32 %v313, %v332
    %v337 = vadd.f32 %v314, %v332
    %v338 = vadd.f32 %v315, %v332
    %v339 = vadd.f32 %v316, %v332
    %v340 = vadd.f32 %v317, %v332
    %v341 = vadd.f32 %v318, %v332
    %v342 = vadd.f32 %v319, %v332
    %v343 = vadd.f32 %v320, %v332
    %v344 = vadd.f32 %v321, %v332
    %v345 = vadd.f32 %v322, %v332
    %v346 = vadd.f32 %v323, %v332
    %v347 = vadd.f32 %v324, %v332
    %v348 = vadd.f32 %v325, %v332
    %v349 = vadd.f32 %v326, %v332
    %v350 = vtanh.pop %v334
    %v351 = vtanh.pop %v335
    %v352 = vtanh.pop %v336
    %v353 = vtanh.pop %v337
    %v354 = vtanh.pop %v338
    %v355 = vtanh.pop %v339
    %v356 = vtanh.pop %v340
    %v357 = vtanh.pop %v341
    %v358 = vtanh.pop %v342
    %v359 = vtanh.pop %v343
    %v360 = vtanh.pop %v344
    %v361 = vtanh.pop %v345
    %v362 = vtanh.pop %v346
    %v363 = vtanh.pop %v347
    %v364 = vtanh.pop %v348
    %v365 = vtanh.pop %v349
    %366 = vst [vmem:[%s3] sm:$0xff] %v350
    %367 = vst [vmem:[%s3 + $0x8] sm:$0xff] %v351
    %368 = vst [vmem:[%s3 + $0x10] sm:$0xff] %v352
    %369 = vst [vmem:[%s3 + $0x18] sm:$0xff] %v353
    %370 = vst [vmem:[%s3 + $0x20] sm:$0xff] %v354
    %371 = vst [vmem:[%s3 + $0x28] sm:$0xff] %v355
    %372 = vst [vmem:[%s3 + $0x30] sm:$0xff] %v356
    %373 = vst [vmem:[%s3 + $0x38] sm:$0xff] %v357
    %374 = vst [vmem:[%s3 + $0x40] sm:$0xff] %v358
    %375 = vst [vmem:[%s3 + $0x48] sm:$0xff] %v359
    %376 = vst [vmem:[%s3 + $0x50] sm:$0xff] %v360
    %377 = vst [vmem:[%s3 + $0x58] sm:$0xff] %v361
    %378 = vst [vmem:[%s3 + $0x60] sm:$0xff] %v362
    %379 = vst [vmem:[%s3 + $0x68] sm:$0xff] %v363
    %380 = vst [vmem:[%s3 + $0x70] sm:$0xff] %v364
    %381 = vst [vmem:[%s3 + $0x78] sm:$0xff] %v365
  $region21: #{fanogan_forward.18} parent=0 // pred_fallthru
    _
  // Predicated region
  $region22: #{fanogan_forward.18} parent=0 // pred_check
    _
  $region23: #{fanogan_forward.18} parent=0 // pred_check_branch
    %383 = sbr.rel (0) target = $region25
  $region24: #{fanogan_forward.18} parent=0 // pred_region
    _
  $region25: #{fanogan_forward.18} parent=0 // pred_fallthru
    _
  // Predicated region
  $region26: #{fanogan_forward.18} parent=0 // pred_check
    _
  $region27: #{fanogan_forward.18} parent=0 // pred_check_branch
    %385 = sbr.rel (0) target = $region29
  $region28: #{fanogan_forward.18} parent=0 // pred_region
    _
  $region29: #{fanogan_forward.18} parent=0 // pred_fallthru
    _

// kernel: fanogan_forward.20
$region0: #{fanogan_forward.20}
  #allocation0 [shape = 'u32[]', space=smem, size = 0x4, offset = 0x4, fixed_abs, tag = 'smem constant byte address 0x4 - core index']
  #allocation1 [shape = 'u32[144,128]{1,0:T(1,128)}', space=vmem, size = 0x12000, scoped, tag = 'internal scratch']
  #allocation2 [shape = 'f32[64,128]{1,0:T(8,128)}', space=vmem, size = 0x8000, scoped, tag = 'scratch operand']
  %s0 = inlined_call_operand.vmem [shape: bf16[64,128], index: 0, kind: input, shape index: {}]
  %s1 = inlined_call_operand.vmem [shape: bf16[128,128], index: 1, kind: input, shape index: {}]
  %s2 = inlined_call_operand.vmem [shape: f32[1,128], index: 2, kind: input, shape index: {}]
  %s3 = inlined_call_operand.vmem [shape: f32[64,128], index: 3, kind: output, shape index: {}]
  %s4 = sld [smem:[#allocation0]]
  $region30: #{fanogan_forward.20} parent=0
    _
  %s6 = ssub.s32 1, %s4
  %s7 = scalar_select 0, %s6, %s4
  // Predicated region
  $region2: #{fanogan_forward.20} parent=0 // pred_check
    _
  $region3: #{fanogan_forward.20} parent=0 // pred_check_branch
    %9 = sbr.rel (0) target = $region5
  $region4: #{fanogan_forward.20} parent=0 // pred_region
    _
  $region5: #{fanogan_forward.20} parent=0 // pred_fallthru
    _
  // Predicated region
  $region6: #{fanogan_forward.20} parent=0 // pred_check
    _
  $region7: #{fanogan_forward.20} parent=0 // pred_check_branch
    %11 = sbr.rel (0) target = $region9
  $region8: #{fanogan_forward.20} parent=0 // pred_region
    _
  $region9: #{fanogan_forward.20} parent=0 // pred_fallthru
    _
  // Predicated region
  $region10: #{fanogan_forward.20} parent=0 // pred_check
    _
  $region11: #{fanogan_forward.20} parent=0 // pred_check_branch
    %13 = sbr.rel (0) target = $region13
  $region12: #{fanogan_forward.20} parent=0 // pred_region
    _
  $region13: #{fanogan_forward.20} parent=0 // pred_fallthru
    _
  %p15 = scmp.eq.s32.totalorder 0, 0
  // Predicated region
  $region14: #{fanogan_forward.20} parent=0 // pred_check
    %p16 = pneg %p15
  $region15: #{fanogan_forward.20} parent=0 // pred_check_branch
    %18 = sbr.rel (%p16) target = $region17
  $region16: #{fanogan_forward.20} parent=0 // pred_region
    %19 = vst [vmem:[#allocation2] sm:$0xff] 0.0
    %20 = vst [vmem:[#allocation2 + $0x8] sm:$0xff] 0.0
    %21 = vst [vmem:[#allocation2 + $0x10] sm:$0xff] 0.0
    %22 = vst [vmem:[#allocation2 + $0x18] sm:$0xff] 0.0
    %23 = vst [vmem:[#allocation2 + $0x20] sm:$0xff] 0.0
    %24 = vst [vmem:[#allocation2 + $0x28] sm:$0xff] 0.0
    %25 = vst [vmem:[#allocation2 + $0x30] sm:$0xff] 0.0
    %26 = vst [vmem:[#allocation2 + $0x38] sm:$0xff] 0.0
  $region17: #{fanogan_forward.20} parent=0 // pred_fallthru
    _
  %v27 = vld [vmem:[#allocation2] sm:$0xff]
  %v28 = vld [vmem:[#allocation2 + $0x8] sm:$0xff]
  %v29 = vld [vmem:[#allocation2 + $0x10] sm:$0xff]
  %v30 = vld [vmem:[#allocation2 + $0x18] sm:$0xff]
  %v31 = vld [vmem:[#allocation2 + $0x20] sm:$0xff]
  %v32 = vld [vmem:[#allocation2 + $0x28] sm:$0xff]
  %v33 = vld [vmem:[#allocation2 + $0x30] sm:$0xff]
  %v34 = vld [vmem:[#allocation2 + $0x38] sm:$0xff]
  %v35 = vld [vmem:[%s0] sm:$0xf]
  %v36 = vld [vmem:[%s0 + $0x4] sm:$0xf]
  %v37 = vld [vmem:[%s0 + $0x8] sm:$0xf]
  %v38 = vld [vmem:[%s0 + $0xc] sm:$0xf]
  %v39 = vld [vmem:[%s0 + $0x10] sm:$0xf]
  %v40 = vld [vmem:[%s0 + $0x14] sm:$0xf]
  %v41 = vld [vmem:[%s0 + $0x18] sm:$0xf]
  %v42 = vld [vmem:[%s0 + $0x1c] sm:$0xf]
  %v43 = vld [vmem:[%s1] sm:$0xf]
  %v44 = vld [vmem:[%s1 + $0x4] sm:$0xf]
  %v45 = vld [vmem:[%s1 + $0x8] sm:$0xf]
  %v46 = vld [vmem:[%s1 + $0xc] sm:$0xf]
  %v47 = vld [vmem:[%s1 + $0x10] sm:$0xf]
  %v48 = vld [vmem:[%s1 + $0x14] sm:$0xf]
  %v49 = vld [vmem:[%s1 + $0x18] sm:$0xf]
  %v50 = vld [vmem:[%s1 + $0x1c] sm:$0xf]
  %v51 = vld [vmem:[%s1 + $0x20] sm:$0xf]
  %v52 = vld [vmem:[%s1 + $0x24] sm:$0xf]
  %v53 = vld [vmem:[%s1 + $0x28] sm:$0xf]
  %v54 = vld [vmem:[%s1 + $0x2c] sm:$0xf]
  %v55 = vld [vmem:[%s1 + $0x30] sm:$0xf]
  %v56 = vld [vmem:[%s1 + $0x34] sm:$0xf]
  %v57 = vld [vmem:[%s1 + $0x38] sm:$0xf]
  %v58 = vld [vmem:[%s1 + $0x3c] sm:$0xf]
  %v67 = vunpack.c.l.b16 %v35
  %v68 = vunpack.c.l.b16 %v36
  %v69 = vunpack.c.l.b16 %v37
  %v70 = vunpack.c.l.b16 %v38
  %v71 = vunpack.c.l.b16 %v39
  %v72 = vunpack.c.l.b16 %v40
  %v73 = vunpack.c.l.b16 %v41
  %v74 = vunpack.c.l.b16 %v42
  %v75 = vpack.c.b16 %v68, %v67
  %v76 = vpack.c.b16 %v70, %v69
  %v77 = vpack.c.b16 %v72, %v71
  %v78 = vpack.c.b16 %v74, %v73
  %v99 = vunpack.c.l.b16 %v43
  %v100 = vunpack.c.l.b16 %v44
  %v101 = vunpack.c.l.b16 %v45
  %v102 = vunpack.c.l.b16 %v46
  %v103 = vunpack.c.l.b16 %v47
  %v104 = vunpack.c.l.b16 %v48
  %v105 = vunpack.c.l.b16 %v49
  %v106 = vunpack.c.l.b16 %v50
  %v107 = vunpack.c.l.b16 %v51
  %v108 = vunpack.c.l.b16 %v52
  %v109 = vunpack.c.l.b16 %v53
  %v110 = vunpack.c.l.b16 %v54
  %v111 = vunpack.c.l.b16 %v55
  %v112 = vunpack.c.l.b16 %v56
  %v113 = vunpack.c.l.b16 %v57
  %v114 = vunpack.c.l.b16 %v58
  %v115 = vpack.c.b16 %v100, %v99
  %v116 = vpack.c.b16 %v102, %v101
  %v117 = vpack.c.b16 %v104, %v103
  %v118 = vpack.c.b16 %v106, %v105
  %v119 = vpack.c.b16 %v108, %v107
  %v120 = vpack.c.b16 %v110, %v109
  %v121 = vpack.c.b16 %v112, %v111
  %v122 = vpack.c.b16 %v114, %v113
  %131 = vmatprep.subr.bf16.mxu0 0
  %132 = vmatpush1.bf16.msra.mxu0 %v115
  %133 = vmatprep.subr.bf16.mxu0 0
  %134 = vmatpush1.bf16.msra.mxu0 %v116
  %135 = vmatprep.subr.bf16.mxu0 0
  %136 = vmatpush1.bf16.msra.mxu0 %v117
  %137 = vmatprep.subr.bf16.mxu0 0
  %138 = vmatpush1.bf16.msra.mxu0 %v118
  %139 = vmatprep.subr.bf16.mxu0 0
  %140 = vmatpush1.bf16.msra.mxu0 %v119
  %141 = vmatprep.subr.bf16.mxu0 0
  %142 = vmatpush1.bf16.msra.mxu0 %v120
  %143 = vmatprep.subr.bf16.mxu0 0
  %144 = vmatpush1.bf16.msra.mxu0 %v121
  %145 = vmatprep.subr.bf16.mxu0 0
  %146 = vmatpush1.bf16.msra.mxu0 %v122
  %147 = vmatprep.subr.bf16.mxu0 0
  %148 = vmatpush1.bf16.msra.mxu0 0
  %149 = vmatprep.subr.bf16.mxu0 0
  %150 = vmatpush1.bf16.msra.mxu0 0
  %151 = vmatprep.subr.bf16.mxu0 0
  %152 = vmatpush1.bf16.msra.mxu0 0
  %153 = vmatprep.subr.bf16.mxu0 0
  %154 = vmatpush1.bf16.msra.mxu0 0
  %155 = vmatprep.subr.bf16.mxu0 0
  %156 = vmatpush1.bf16.msra.mxu0 0
  %157 = vmatprep.subr.bf16.mxu0 0
  %158 = vmatpush1.bf16.msra.mxu0 0
  %159 = vmatprep.subr.bf16.mxu0 0
  %160 = vmatpush1.bf16.msra.mxu0 0
  %161 = vmatprep.subr.bf16.mxu0 0
  %162 = vmatpush1.bf16.msra.mxu0 0
  %163 = vmatprep.mubr.bf16.mxu0 0
  %164 = vmatmul.mubr.bf16.gmra.mrb[0].mxu0 %v75
  %v165 = vpop.f32.mrb[0].mxu0
  %v166 = vadd.f32 0.0, %v165
  %v167 = vpop.f32.mrb[0].mxu0
  %v168 = vpop.f32.mrb[0].mxu0
  %v169 = vadd.f32 0.0, %v168
  %v170 = vpop.f32.mrb[0].mxu0
  %171 = vmatprep.mubr.bf16.mxu0 0
  %172 = vmatmul.mubr.bf16.gmra.mrb[0].mxu0 %v76
  %v173 = vpop.f32.mrb[0].mxu0
  %v174 = vadd.f32 0.0, %v173
  %v175 = vpop.f32.mrb[0].mxu0
  %v176 = vpop.f32.mrb[0].mxu0
  %v177 = vadd.f32 0.0, %v176
  %v178 = vpop.f32.mrb[0].mxu0
  %179 = vmatprep.mubr.bf16.mxu0 0
  %180 = vmatmul.mubr.bf16.gmra.mrb[0].mxu0 %v77
  %v181 = vpop.f32.mrb[0].mxu0
  %v182 = vadd.f32 0.0, %v181
  %v183 = vpop.f32.mrb[0].mxu0
  %v184 = vpop.f32.mrb[0].mxu0
  %v185 = vadd.f32 0.0, %v184
  %v186 = vpop.f32.mrb[0].mxu0
  %187 = vmatprep.mubr.bf16.mxu0 0
  %188 = vmatmul.mubr.bf16.gmra.mrb[0].mxu0 %v78
  %v189 = vpop.f32.mrb[0].mxu0
  %v190 = vadd.f32 0.0, %v189
  %v191 = vpop.f32.mrb[0].mxu0
  %v192 = vpop.f32.mrb[0].mxu0
  %v193 = vadd.f32 0.0, %v192
  %v194 = vpop.f32.mrb[0].mxu0
  %195 = vdwg.mxu0
  %v196 = vadd.f32 %v27, %v166
  %v197 = vadd.f32 %v28, %v169
  %v198 = vadd.f32 %v29, %v174
  %v199 = vadd.f32 %v30, %v177
  %v200 = vadd.f32 %v31, %v182
  %v201 = vadd.f32 %v32, %v185
  %v202 = vadd.f32 %v33, %v190
  %v203 = vadd.f32 %v34, %v193
  %204 = vst [vmem:[#allocation2] sm:$0xff] %v196
  %205 = vst [vmem:[#allocation2 + $0x8] sm:$0xff] %v197
  %206 = vst [vmem:[#allocation2 + $0x10] sm:$0xff] %v198
  %207 = vst [vmem:[#allocation2 + $0x18] sm:$0xff] %v199
  %208 = vst [vmem:[#allocation2 + $0x20] sm:$0xff] %v200
  %209 = vst [vmem:[#allocation2 + $0x28] sm:$0xff] %v201
  %210 = vst [vmem:[#allocation2 + $0x30] sm:$0xff] %v202
  %211 = vst [vmem:[#allocation2 + $0x38] sm:$0xff] %v203
  // Predicated region
  $region18: #{fanogan_forward.20} parent=0 // pred_check
    %p212 = pneg %p15
  $region19: #{fanogan_forward.20} parent=0 // pred_check_branch
    %214 = sbr.rel (%p212) target = $region21
  $region20: #{fanogan_forward.20} parent=0 // pred_region
    %v215 = vld [vmem:[#allocation2] sm:$0xff]
    %v216 = vld [vmem:[#allocation2 + $0x8] sm:$0xff]
    %v217 = vld [vmem:[#allocation2 + $0x10] sm:$0xff]
    %v218 = vld [vmem:[#allocation2 + $0x18] sm:$0xff]
    %v219 = vld [vmem:[#allocation2 + $0x20] sm:$0xff]
    %v220 = vld [vmem:[#allocation2 + $0x28] sm:$0xff]
    %v221 = vld [vmem:[#allocation2 + $0x30] sm:$0xff]
    %v222 = vld [vmem:[#allocation2 + $0x38] sm:$0xff]
    %v223 = vld [vmem:[%s2] sm:$0x1]
    %v225 = vlaneseq
    %v226 = vshrl.u32 %v225, 7
    %v227 = vsub.s32 0, %v226
    %v228 = vrot.slane %v223, %v227
    %v230 = vadd.f32 %v215, %v228
    %v231 = vadd.f32 %v216, %v228
    %v232 = vadd.f32 %v217, %v228
    %v233 = vadd.f32 %v218, %v228
    %v234 = vadd.f32 %v219, %v228
    %v235 = vadd.f32 %v220, %v228
    %v236 = vadd.f32 %v221, %v228
    %v237 = vadd.f32 %v222, %v228
    %vm238 = vcmp.gt.f32.partialorder %v230, 0.0
    %vm239 = vcmp.gt.f32.partialorder %v231, 0.0
    %vm240 = vcmp.gt.f32.partialorder %v232, 0.0
    %vm241 = vcmp.gt.f32.partialorder %v233, 0.0
    %vm242 = vcmp.gt.f32.partialorder %v234, 0.0
    %vm243 = vcmp.gt.f32.partialorder %v235, 0.0
    %vm244 = vcmp.gt.f32.partialorder %v236, 0.0
    %vm245 = vcmp.gt.f32.partialorder %v237, 0.0
    %v246 = vmul.f32 %v230, 0.2
    %v247 = vmul.f32 %v231, 0.2
    %v248 = vmul.f32 %v232, 0.2
    %v249 = vmul.f32 %v233, 0.2
    %v250 = vmul.f32 %v234, 0.2
    %v251 = vmul.f32 %v235, 0.2
    %v252 = vmul.f32 %v236, 0.2
    %v253 = vmul.f32 %v237, 0.2
    %v254 = vsel %vm238, %v230, %v246
    %v255 = vsel %vm239, %v231, %v247
    %v256 = vsel %vm240, %v232, %v248
    %v257 = vsel %vm241, %v233, %v249
    %v258 = vsel %vm242, %v234, %v250
    %v259 = vsel %vm243, %v235, %v251
    %v260 = vsel %vm244, %v236, %v252
    %v261 = vsel %vm245, %v237, %v253
    %262 = vst [vmem:[%s3] sm:$0xff] %v254
    %263 = vst [vmem:[%s3 + $0x8] sm:$0xff] %v255
    %264 = vst [vmem:[%s3 + $0x10] sm:$0xff] %v256
    %265 = vst [vmem:[%s3 + $0x18] sm:$0xff] %v257
    %266 = vst [vmem:[%s3 + $0x20] sm:$0xff] %v258
    %267 = vst [vmem:[%s3 + $0x28] sm:$0xff] %v259
    %268 = vst [vmem:[%s3 + $0x30] sm:$0xff] %v260
    %269 = vst [vmem:[%s3 + $0x38] sm:$0xff] %v261
  $region21: #{fanogan_forward.20} parent=0 // pred_fallthru
    _
  // Predicated region
  $region22: #{fanogan_forward.20} parent=0 // pred_check
    _
  $region23: #{fanogan_forward.20} parent=0 // pred_check_branch
    %271 = sbr.rel (0) target = $region25
  $region24: #{fanogan_forward.20} parent=0 // pred_region
    _
  $region25: #{fanogan_forward.20} parent=0 // pred_fallthru
    _
  // Predicated region
  $region26: #{fanogan_forward.20} parent=0 // pred_check
    _
  $region27: #{fanogan_forward.20} parent=0 // pred_check_branch
    %273 = sbr.rel (0) target = $region29
  $region28: #{fanogan_forward.20} parent=0 // pred_region
    _
  $region29: #{fanogan_forward.20} parent=0 // pred_fallthru
    _

// kernel: fanogan_forward.19
$region0: #{fanogan_forward.19}
  #allocation0 [shape = 'u32[]', space=smem, size = 0x4, offset = 0x4, fixed_abs, tag = 'smem constant byte address 0x4 - core index']
  #allocation1 [shape = 'u32[144,128]{1,0:T(1,128)}', space=vmem, size = 0x12000, scoped, tag = 'internal scratch']
  #allocation2 [shape = 'f32[256,128]{1,0:T(8,128)}', space=vmem, size = 0x20000, scoped, tag = 'scratch operand']
  %s0 = inlined_call_operand.vmem [shape: bf16[256,128], index: 0, kind: input, shape index: {}]
  %s1 = inlined_call_operand.vmem [shape: bf16[128,128], index: 1, kind: input, shape index: {}]
  %s2 = inlined_call_operand.vmem [shape: f32[1,128], index: 2, kind: input, shape index: {}]
  %s3 = inlined_call_operand.vmem [shape: f32[256,128], index: 3, kind: output, shape index: {}]
  %s4 = sld [smem:[#allocation0]]
  $region30: #{fanogan_forward.19} parent=0
    _
  %s6 = ssub.s32 1, %s4
  %s7 = scalar_select 0, %s6, %s4
  // Predicated region
  $region2: #{fanogan_forward.19} parent=0 // pred_check
    _
  $region3: #{fanogan_forward.19} parent=0 // pred_check_branch
    %9 = sbr.rel (0) target = $region5
  $region4: #{fanogan_forward.19} parent=0 // pred_region
    _
  $region5: #{fanogan_forward.19} parent=0 // pred_fallthru
    _
  // Predicated region
  $region6: #{fanogan_forward.19} parent=0 // pred_check
    _
  $region7: #{fanogan_forward.19} parent=0 // pred_check_branch
    %11 = sbr.rel (0) target = $region9
  $region8: #{fanogan_forward.19} parent=0 // pred_region
    _
  $region9: #{fanogan_forward.19} parent=0 // pred_fallthru
    _
  // Predicated region
  $region10: #{fanogan_forward.19} parent=0 // pred_check
    _
  $region11: #{fanogan_forward.19} parent=0 // pred_check_branch
    %13 = sbr.rel (0) target = $region13
  $region12: #{fanogan_forward.19} parent=0 // pred_region
    _
  $region13: #{fanogan_forward.19} parent=0 // pred_fallthru
    _
  %p15 = scmp.eq.s32.totalorder 0, 0
  // Predicated region
  $region14: #{fanogan_forward.19} parent=0 // pred_check
    %p16 = pneg %p15
  $region15: #{fanogan_forward.19} parent=0 // pred_check_branch
    %18 = sbr.rel (%p16) target = $region17
  $region16: #{fanogan_forward.19} parent=0 // pred_region
    %19 = vst [vmem:[#allocation2] sm:$0xff] 0.0
    %20 = vst [vmem:[#allocation2 + $0x8] sm:$0xff] 0.0
    %21 = vst [vmem:[#allocation2 + $0x10] sm:$0xff] 0.0
    %22 = vst [vmem:[#allocation2 + $0x18] sm:$0xff] 0.0
    %23 = vst [vmem:[#allocation2 + $0x20] sm:$0xff] 0.0
    %24 = vst [vmem:[#allocation2 + $0x28] sm:$0xff] 0.0
    %25 = vst [vmem:[#allocation2 + $0x30] sm:$0xff] 0.0
    %26 = vst [vmem:[#allocation2 + $0x38] sm:$0xff] 0.0
    %27 = vst [vmem:[#allocation2 + $0x40] sm:$0xff] 0.0
    %28 = vst [vmem:[#allocation2 + $0x48] sm:$0xff] 0.0
    %29 = vst [vmem:[#allocation2 + $0x50] sm:$0xff] 0.0
    %30 = vst [vmem:[#allocation2 + $0x58] sm:$0xff] 0.0
    %31 = vst [vmem:[#allocation2 + $0x60] sm:$0xff] 0.0
    %32 = vst [vmem:[#allocation2 + $0x68] sm:$0xff] 0.0
    %33 = vst [vmem:[#allocation2 + $0x70] sm:$0xff] 0.0
    %34 = vst [vmem:[#allocation2 + $0x78] sm:$0xff] 0.0
    %35 = vst [vmem:[#allocation2 + $0x80] sm:$0xff] 0.0
    %36 = vst [vmem:[#allocation2 + $0x88] sm:$0xff] 0.0
    %37 = vst [vmem:[#allocation2 + $0x90] sm:$0xff] 0.0
    %38 = vst [vmem:[#allocation2 + $0x98] sm:$0xff] 0.0
    %39 = vst [vmem:[#allocation2 + $0xa0] sm:$0xff] 0.0
    %40 = vst [vmem:[#allocation2 + $0xa8] sm:$0xff] 0.0
    %41 = vst [vmem:[#allocation2 + $0xb0] sm:$0xff] 0.0
    %42 = vst [vmem:[#allocation2 + $0xb8] sm:$0xff] 0.0
    %43 = vst [vmem:[#allocation2 + $0xc0] sm:$0xff] 0.0
    %44 = vst [vmem:[#allocation2 + $0xc8] sm:$0xff] 0.0
    %45 = vst [vmem:[#allocation2 + $0xd0] sm:$0xff] 0.0
    %46 = vst [vmem:[#allocation2 + $0xd8] sm:$0xff] 0.0
    %47 = vst [vmem:[#allocation2 + $0xe0] sm:$0xff] 0.0
    %48 = vst [vmem:[#allocation2 + $0xe8] sm:$0xff] 0.0
    %49 = vst [vmem:[#allocation2 + $0xf0] sm:$0xff] 0.0
    %50 = vst [vmem:[#allocation2 + $0xf8] sm:$0xff] 0.0
  $region17: #{fanogan_forward.19} parent=0 // pred_fallthru
    _
  %v51 = vld [vmem:[#allocation2] sm:$0xff]
  %v52 = vld [vmem:[#allocation2 + $0x8] sm:$0xff]
  %v53 = vld [vmem:[#allocation2 + $0x10] sm:$0xff]
  %v54 = vld [vmem:[#allocation2 + $0x18] sm:$0xff]
  %v55 = vld [vmem:[#allocation2 + $0x20] sm:$0xff]
  %v56 = vld [vmem:[#allocation2 + $0x28] sm:$0xff]
  %v57 = vld [vmem:[#allocation2 + $0x30] sm:$0xff]
  %v58 = vld [vmem:[#allocation2 + $0x38] sm:$0xff]
  %v59 = vld [vmem:[#allocation2 + $0x40] sm:$0xff]
  %v60 = vld [vmem:[#allocation2 + $0x48] sm:$0xff]
  %v61 = vld [vmem:[#allocation2 + $0x50] sm:$0xff]
  %v62 = vld [vmem:[#allocation2 + $0x58] sm:$0xff]
  %v63 = vld [vmem:[#allocation2 + $0x60] sm:$0xff]
  %v64 = vld [vmem:[#allocation2 + $0x68] sm:$0xff]
  %v65 = vld [vmem:[#allocation2 + $0x70] sm:$0xff]
  %v66 = vld [vmem:[#allocation2 + $0x78] sm:$0xff]
  %v67 = vld [vmem:[#allocation2 + $0x80] sm:$0xff]
  %v68 = vld [vmem:[#allocation2 + $0x88] sm:$0xff]
  %v69 = vld [vmem:[#allocation2 + $0x90] sm:$0xff]
  %v70 = vld [vmem:[#allocation2 + $0x98] sm:$0xff]
  %v71 = vld [vmem:[#allocation2 + $0xa0] sm:$0xff]
  %v72 = vld [vmem:[#allocation2 + $0xa8] sm:$0xff]
  %v73 = vld [vmem:[#allocation2 + $0xb0] sm:$0xff]
  %v74 = vld [vmem:[#allocation2 + $0xb8] sm:$0xff]
  %v75 = vld [vmem:[#allocation2 + $0xc0] sm:$0xff]
  %v76 = vld [vmem:[#allocation2 + $0xc8] sm:$0xff]
  %v77 = vld [vmem:[#allocation2 + $0xd0] sm:$0xff]
  %v78 = vld [vmem:[#allocation2 + $0xd8] sm:$0xff]
  %v79 = vld [vmem:[#allocation2 + $0xe0] sm:$0xff]
  %v80 = vld [vmem:[#allocation2 + $0xe8] sm:$0xff]
  %v81 = vld [vmem:[#allocation2 + $0xf0] sm:$0xff]
  %v82 = vld [vmem:[#allocation2 + $0xf8] sm:$0xff]
  %v83 = vld [vmem:[%s0] sm:$0xf]
  %v84 = vld [vmem:[%s0 + $0x4] sm:$0xf]
  %v85 = vld [vmem:[%s0 + $0x8] sm:$0xf]
  %v86 = vld [vmem:[%s0 + $0xc] sm:$0xf]
  %v87 = vld [vmem:[%s0 + $0x10] sm:$0xf]
  %v88 = vld [vmem:[%s0 + $0x14] sm:$0xf]
  %v89 = vld [vmem:[%s0 + $0x18] sm:$0xf]
  %v90 = vld [vmem:[%s0 + $0x1c] sm:$0xf]
  %v91 = vld [vmem:[%s0 + $0x20] sm:$0xf]
  %v92 = vld [vmem:[%s0 + $0x24] sm:$0xf]
  %v93 = vld [vmem:[%s0 + $0x28] sm:$0xf]
  %v94 = vld [vmem:[%s0 + $0x2c] sm:$0xf]
  %v95 = vld [vmem:[%s0 + $0x30] sm:$0xf]
  %v96 = vld [vmem:[%s0 + $0x34] sm:$0xf]
  %v97 = vld [vmem:[%s0 + $0x38] sm:$0xf]
  %v98 = vld [vmem:[%s0 + $0x3c] sm:$0xf]
  %v99 = vld [vmem:[%s0 + $0x40] sm:$0xf]
  %v100 = vld [vmem:[%s0 + $0x44] sm:$0xf]
  %v101 = vld [vmem:[%s0 + $0x48] sm:$0xf]
  %v102 = vld [vmem:[%s0 + $0x4c] sm:$0xf]
  %v103 = vld [vmem:[%s0 + $0x50] sm:$0xf]
  %v104 = vld [vmem:[%s0 + $0x54] sm:$0xf]
  %v105 = vld [vmem:[%s0 + $0x58] sm:$0xf]
  %v106 = vld [vmem:[%s0 + $0x5c] sm:$0xf]
  %v107 = vld [vmem:[%s0 + $0x60] sm:$0xf]
  %v108 = vld [vmem:[%s0 + $0x64] sm:$0xf]
  %v109 = vld [vmem:[%s0 + $0x68] sm:$0xf]
  %v110 = vld [vmem:[%s0 + $0x6c] sm:$0xf]
  %v111 = vld [vmem:[%s0 + $0x70] sm:$0xf]
  %v112 = vld [vmem:[%s0 + $0x74] sm:$0xf]
  %v113 = vld [vmem:[%s0 + $0x78] sm:$0xf]
  %v114 = vld [vmem:[%s0 + $0x7c] sm:$0xf]
  %v115 = vld [vmem:[%s1] sm:$0xf]
  %v116 = vld [vmem:[%s1 + $0x4] sm:$0xf]
  %v117 = vld [vmem:[%s1 + $0x8] sm:$0xf]
  %v118 = vld [vmem:[%s1 + $0xc] sm:$0xf]
  %v119 = vld [vmem:[%s1 + $0x10] sm:$0xf]
  %v120 = vld [vmem:[%s1 + $0x14] sm:$0xf]
  %v121 = vld [vmem:[%s1 + $0x18] sm:$0xf]
  %v122 = vld [vmem:[%s1 + $0x1c] sm:$0xf]
  %v123 = vld [vmem:[%s1 + $0x20] sm:$0xf]
  %v124 = vld [vmem:[%s1 + $0x24] sm:$0xf]
  %v125 = vld [vmem:[%s1 + $0x28] sm:$0xf]
  %v126 = vld [vmem:[%s1 + $0x2c] sm:$0xf]
  %v127 = vld [vmem:[%s1 + $0x30] sm:$0xf]
  %v128 = vld [vmem:[%s1 + $0x34] sm:$0xf]
  %v129 = vld [vmem:[%s1 + $0x38] sm:$0xf]
  %v130 = vld [vmem:[%s1 + $0x3c] sm:$0xf]
  %v163 = vunpack.c.l.b16 %v83
  %v164 = vunpack.c.l.b16 %v84
  %v165 = vunpack.c.l.b16 %v85
  %v166 = vunpack.c.l.b16 %v86
  %v167 = vunpack.c.l.b16 %v87
  %v168 = vunpack.c.l.b16 %v88
  %v169 = vunpack.c.l.b16 %v89
  %v170 = vunpack.c.l.b16 %v90
  %v171 = vunpack.c.l.b16 %v91
  %v172 = vunpack.c.l.b16 %v92
  %v173 = vunpack.c.l.b16 %v93
  %v174 = vunpack.c.l.b16 %v94
  %v175 = vunpack.c.l.b16 %v95
  %v176 = vunpack.c.l.b16 %v96
  %v177 = vunpack.c.l.b16 %v97
  %v178 = vunpack.c.l.b16 %v98
  %v179 = vunpack.c.l.b16 %v99
  %v180 = vunpack.c.l.b16 %v100
  %v181 = vunpack.c.l.b16 %v101
  %v182 = vunpack.c.l.b16 %v102
  %v183 = vunpack.c.l.b16 %v103
  %v184 = vunpack.c.l.b16 %v104
  %v185 = vunpack.c.l.b16 %v105
  %v186 = vunpack.c.l.b16 %v106
  %v187 = vunpack.c.l.b16 %v107
  %v188 = vunpack.c.l.b16 %v108
  %v189 = vunpack.c.l.b16 %v109
  %v190 = vunpack.c.l.b16 %v110
  %v191 = vunpack.c.l.b16 %v111
  %v192 = vunpack.c.l.b16 %v112
  %v193 = vunpack.c.l.b16 %v113
  %v194 = vunpack.c.l.b16 %v114
  %v195 = vpack.c.b16 %v164, %v163
  %v196 = vpack.c.b16 %v166, %v165
  %v197 = vpack.c.b16 %v168, %v167
  %v198 = vpack.c.b16 %v170, %v169
  %v199 = vpack.c.b16 %v172, %v171
  %v200 = vpack.c.b16 %v174, %v173
  %v201 = vpack.c.b16 %v176, %v175
  %v202 = vpack.c.b16 %v178, %v177
  %v203 = vpack.c.b16 %v180, %v179
  %v204 = vpack.c.b16 %v182, %v181
  %v205 = vpack.c.b16 %v184, %v183
  %v206 = vpack.c.b16 %v186, %v185
  %v207 = vpack.c.b16 %v188, %v187
  %v208 = vpack.c.b16 %v190, %v189
  %v209 = vpack.c.b16 %v192, %v191
  %v210 = vpack.c.b16 %v194, %v193
  %v243 = vunpack.c.l.b16 %v115
  %v244 = vunpack.c.l.b16 %v116
  %v245 = vunpack.c.l.b16 %v117
  %v246 = vunpack.c.l.b16 %v118
  %v247 = vunpack.c.l.b16 %v119
  %v248 = vunpack.c.l.b16 %v120
  %v249 = vunpack.c.l.b16 %v121
  %v250 = vunpack.c.l.b16 %v122
  %v251 = vunpack.c.l.b16 %v123
  %v252 = vunpack.c.l.b16 %v124
  %v253 = vunpack.c.l.b16 %v125
  %v254 = vunpack.c.l.b16 %v126
  %v255 = vunpack.c.l.b16 %v127
  %v256 = vunpack.c.l.b16 %v128
  %v257 = vunpack.c.l.b16 %v129
  %v258 = vunpack.c.l.b16 %v130
  %v259 = vpack.c.b16 %v244, %v243
  %v260 = vpack.c.b16 %v246, %v245
  %v261 = vpack.c.b16 %v248, %v247
  %v262 = vpack.c.b16 %v250, %v249
  %v263 = vpack.c.b16 %v252, %v251
  %v264 = vpack.c.b16 %v254, %v253
  %v265 = vpack.c.b16 %v256, %v255
  %v266 = vpack.c.b16 %v258, %v257
  %275 = vmatprep.subr.bf16.mxu0 0
  %276 = vmatpush1.bf16.msra.mxu0 %v259
  %277 = vmatprep.subr.bf16.mxu0 0
  %278 = vmatpush1.bf16.msra.mxu0 %v260
  %279 = vmatprep.subr.bf16.mxu0 0
  %280 = vmatpush1.bf16.msra.mxu0 %v261
  %281 = vmatprep.subr.bf16.mxu0 0
  %282 = vmatpush1.bf16.msra.mxu0 %v262
  %283 = vmatprep.subr.bf16.mxu0 0
  %284 = vmatpush1.bf16.msra.mxu0 %v263
  %285 = vmatprep.subr.bf16.mxu0 0
  %286 = vmatpush1.bf16.msra.mxu0 %v264
  %287 = vmatprep.subr.bf16.mxu0 0
  %288 = vmatpush1.bf16.msra.mxu0 %v265
  %289 = vmatprep.subr.bf16.mxu0 0
  %290 = vmatpush1.bf16.msra.mxu0 %v266
  %291 = vmatprep.subr.bf16.mxu0 0
  %292 = vmatpush1.bf16.msra.mxu0 0
  %293 = vmatprep.subr.bf16.mxu0 0
  %294 = vmatpush1.bf16.msra.mxu0 0
  %295 = vmatprep.subr.bf16.mxu0 0
  %296 = vmatpush1.bf16.msra.mxu0 0
  %297 = vmatprep.subr.bf16.mxu0 0
  %298 = vmatpush1.bf16.msra.mxu0 0
  %299 = vmatprep.subr.bf16.mxu0 0
  %300 = vmatpush1.bf16.msra.mxu0 0
  %301 = vmatprep.subr.bf16.mxu0 0
  %302 = vmatpush1.bf16.msra.mxu0 0
  %303 = vmatprep.subr.bf16.mxu0 0
  %304 = vmatpush1.bf16.msra.mxu0 0
  %305 = vmatprep.subr.bf16.mxu0 0
  %306 = vmatpush1.bf16.msra.mxu0 0
  %307 = vmatprep.mubr.bf16.mxu0 0
  %308 = vmatmul.mubr.bf16.gmra.mrb[0].mxu0 %v195
  %v309 = vpop.f32.mrb[0].mxu0
  %v310 = vadd.f32 0.0, %v309
  %v311 = vpop.f32.mrb[0].mxu0
  %v312 = vpop.f32.mrb[0].mxu0
  %v313 = vadd.f32 0.0, %v312
  %v314 = vpop.f32.mrb[0].mxu0
  %315 = vmatprep.mubr.bf16.mxu0 0
  %316 = vmatmul.mubr.bf16.gmra.mrb[0].mxu0 %v196
  %v317 = vpop.f32.mrb[0].mxu0
  %v318 = vadd.f32 0.0, %v317
  %v319 = vpop.f32.mrb[0].mxu0
  %v320 = vpop.f32.mrb[0].mxu0
  %v321 = vadd.f32 0.0, %v320
  %v322 = vpop.f32.mrb[0].mxu0
  %323 = vmatprep.mubr.bf16.mxu0 0
  %324 = vmatmul.mubr.bf16.gmra.mrb[0].mxu0 %v197
  %v325 = vpop.f32.mrb[0].mxu0
  %v326 = vadd.f32 0.0, %v325
  %v327 = vpop.f32.mrb[0].mxu0
  %v328 = vpop.f32.mrb[0].mxu0
  %v329 = vadd.f32 0.0, %v328
  %v330 = vpop.f32.mrb[0].mxu0
  %331 = vmatprep.mubr.bf16.mxu0 0
  %332 = vmatmul.mubr.bf16.gmra.mrb[0].mxu0 %v198
  %v333 = vpop.f32.mrb[0].mxu0
  %v334 = vadd.f32 0.0, %v333
  %v335 = vpop.f32.mrb[0].mxu0
  %v336 = vpop.f32.mrb[0].mxu0
  %v337 = vadd.f32 0.0, %v336
  %v338 = vpop.f32.mrb[0].mxu0
  %339 = vmatprep.mubr.bf16.mxu0 0
  %340 = vmatmul.mubr.bf16.gmra.mrb[0].mxu0 %v199
  %v341 = vpop.f32.mrb[0].mxu0
  %v342 = vadd.f32 0.0, %v341
  %v343 = vpop.f32.mrb[0].mxu0
  %v344 = vpop.f32.mrb[0].mxu0
  %v345 = vadd.f32 0.0, %v344
  %v346 = vpop.f32.mrb[0].mxu0
  %347 = vmatprep.mubr.bf16.mxu0 0
  %348 = vmatmul.mubr.bf16.gmra.mrb[0].mxu0 %v200
  %v349 = vpop.f32.mrb[0].mxu0
  %v350 = vadd.f32 0.0, %v349
  %v351 = vpop.f32.mrb[0].mxu0
  %v352 = vpop.f32.mrb[0].mxu0
  %v353 = vadd.f32 0.0, %v352
  %v354 = vpop.f32.mrb[0].mxu0
  %355 = vmatprep.mubr.bf16.mxu0 0
  %356 = vmatmul.mubr.bf16.gmra.mrb[0].mxu0 %v201
  %v357 = vpop.f32.mrb[0].mxu0
  %v358 = vadd.f32 0.0, %v357
  %v359 = vpop.f32.mrb[0].mxu0
  %v360 = vpop.f32.mrb[0].mxu0
  %v361 = vadd.f32 0.0, %v360
  %v362 = vpop.f32.mrb[0].mxu0
  %363 = vmatprep.mubr.bf16.mxu0 0
  %364 = vmatmul.mubr.bf16.gmra.mrb[0].mxu0 %v202
  %v365 = vpop.f32.mrb[0].mxu0
  %v366 = vadd.f32 0.0, %v365
  %v367 = vpop.f32.mrb[0].mxu0
  %v368 = vpop.f32.mrb[0].mxu0
  %v369 = vadd.f32 0.0, %v368
  %v370 = vpop.f32.mrb[0].mxu0
  %371 = vmatprep.mubr.bf16.mxu0 0
  %372 = vmatmul.mubr.bf16.gmra.mrb[0].mxu0 %v203
  %v373 = vpop.f32.mrb[0].mxu0
  %v374 = vadd.f32 0.0, %v373
  %v375 = vpop.f32.mrb[0].mxu0
  %v376 = vpop.f32.mrb[0].mxu0
  %v377 = vadd.f32 0.0, %v376
  %v378 = vpop.f32.mrb[0].mxu0
  %379 = vmatprep.mubr.bf16.mxu0 0
  %380 = vmatmul.mubr.bf16.gmra.mrb[0].mxu0 %v204
  %v381 = vpop.f32.mrb[0].mxu0
  %v382 = vadd.f32 0.0, %v381
  %v383 = vpop.f32.mrb[0].mxu0
  %v384 = vpop.f32.mrb[0].mxu0
  %v385 = vadd.f32 0.0, %v384
  %v386 = vpop.f32.mrb[0].mxu0
  %387 = vmatprep.mubr.bf16.mxu0 0
  %388 = vmatmul.mubr.bf16.gmra.mrb[0].mxu0 %v205
  %v389 = vpop.f32.mrb[0].mxu0
  %v390 = vadd.f32 0.0, %v389
  %v391 = vpop.f32.mrb[0].mxu0
  %v392 = vpop.f32.mrb[0].mxu0
  %v393 = vadd.f32 0.0, %v392
  %v394 = vpop.f32.mrb[0].mxu0
  %395 = vmatprep.mubr.bf16.mxu0 0
  %396 = vmatmul.mubr.bf16.gmra.mrb[0].mxu0 %v206
  %v397 = vpop.f32.mrb[0].mxu0
  %v398 = vadd.f32 0.0, %v397
  %v399 = vpop.f32.mrb[0].mxu0
  %v400 = vpop.f32.mrb[0].mxu0
  %v401 = vadd.f32 0.0, %v400
  %v402 = vpop.f32.mrb[0].mxu0
  %403 = vmatprep.mubr.bf16.mxu0 0
  %404 = vmatmul.mubr.bf16.gmra.mrb[0].mxu0 %v207
  %v405 = vpop.f32.mrb[0].mxu0
  %v406 = vadd.f32 0.0, %v405
  %v407 = vpop.f32.mrb[0].mxu0
  %v408 = vpop.f32.mrb[0].mxu0
  %v409 = vadd.f32 0.0, %v408
  %v410 = vpop.f32.mrb[0].mxu0
  %411 = vmatprep.mubr.bf16.mxu0 0
  %412 = vmatmul.mubr.bf16.gmra.mrb[0].mxu0 %v208
  %v413 = vpop.f32.mrb[0].mxu0
  %v414 = vadd.f32 0.0, %v413
  %v415 = vpop.f32.mrb[0].mxu0
  %v416 = vpop.f32.mrb[0].mxu0
  %v417 = vadd.f32 0.0, %v416
  %v418 = vpop.f32.mrb[0].mxu0
  %419 = vmatprep.mubr.bf16.mxu0 0
  %420 = vmatmul.mubr.bf16.gmra.mrb[0].mxu0 %v209
  %v421 = vpop.f32.mrb[0].mxu0
  %v422 = vadd.f32 0.0, %v421
  %v423 = vpop.f32.mrb[0].mxu0
  %v424 = vpop.f32.mrb[0].mxu0
  %v425 = vadd.f32 0.0, %v424
  %v426 = vpop.f32.mrb[0].mxu0
  %427 = vmatprep.mubr.bf16.mxu0 0
  %428 = vmatmul.mubr.bf16.gmra.mrb[0].mxu0 %v210
  %v429 = vpop.f32.mrb[0].mxu0
  %v430 = vadd.f32 0.0, %v429
  %v431 = vpop.f32.mrb[0].mxu0
  %v432 = vpop.f32.mrb[0].mxu0
  %v433 = vadd.f32 0.0, %v432
  %v434 = vpop.f32.mrb[0].mxu0
  %435 = vdwg.mxu0
  %v436 = vadd.f32 %v51, %v310
  %v437 = vadd.f32 %v52, %v313
  %v438 = vadd.f32 %v53, %v318
  %v439 = vadd.f32 %v54, %v321
  %v440 = vadd.f32 %v55, %v326
  %v441 = vadd.f32 %v56, %v329
  %v442 = vadd.f32 %v57, %v334
  %v443 = vadd.f32 %v58, %v337
  %v444 = vadd.f32 %v59, %v342
  %v445 = vadd.f32 %v60, %v345
  %v446 = vadd.f32 %v61, %v350
  %v447 = vadd.f32 %v62, %v353
  %v448 = vadd.f32 %v63, %v358
  %v449 = vadd.f32 %v64, %v361
  %v450 = vadd.f32 %v65, %v366
  %v451 = vadd.f32 %v66, %v369
  %v452 = vadd.f32 %v67, %v374
  %v453 = vadd.f32 %v68, %v377
  %v454 = vadd.f32 %v69, %v382
  %v455 = vadd.f32 %v70, %v385
  %v456 = vadd.f32 %v71, %v390
  %v457 = vadd.f32 %v72, %v393
  %v458 = vadd.f32 %v73, %v398
  %v459 = vadd.f32 %v74, %v401
  %v460 = vadd.f32 %v75, %v406
  %v461 = vadd.f32 %v76, %v409
  %v462 = vadd.f32 %v77, %v414
  %v463 = vadd.f32 %v78, %v417
  %v464 = vadd.f32 %v79, %v422
  %v465 = vadd.f32 %v80, %v425
  %v466 = vadd.f32 %v81, %v430
  %v467 = vadd.f32 %v82, %v433
  %468 = vst [vmem:[#allocation2] sm:$0xff] %v436
  %469 = vst [vmem:[#allocation2 + $0x8] sm:$0xff] %v437
  %470 = vst [vmem:[#allocation2 + $0x10] sm:$0xff] %v438
  %471 = vst [vmem:[#allocation2 + $0x18] sm:$0xff] %v439
  %472 = vst [vmem:[#allocation2 + $0x20] sm:$0xff] %v440
  %473 = vst [vmem:[#allocation2 + $0x28] sm:$0xff] %v441
  %474 = vst [vmem:[#allocation2 + $0x30] sm:$0xff] %v442
  %475 = vst [vmem:[#allocation2 + $0x38] sm:$0xff] %v443
  %476 = vst [vmem:[#allocation2 + $0x40] sm:$0xff] %v444
  %477 = vst [vmem:[#allocation2 + $0x48] sm:$0xff] %v445
  %478 = vst [vmem:[#allocation2 + $0x50] sm:$0xff] %v446
  %479 = vst [vmem:[#allocation2 + $0x58] sm:$0xff] %v447
  %480 = vst [vmem:[#allocation2 + $0x60] sm:$0xff] %v448
  %481 = vst [vmem:[#allocation2 + $0x68] sm:$0xff] %v449
  %482 = vst [vmem:[#allocation2 + $0x70] sm:$0xff] %v450
  %483 = vst [vmem:[#allocation2 + $0x78] sm:$0xff] %v451
  %484 = vst [vmem:[#allocation2 + $0x80] sm:$0xff] %v452
  %485 = vst [vmem:[#allocation2 + $0x88] sm:$0xff] %v453
  %486 = vst [vmem:[#allocation2 + $0x90] sm:$0xff] %v454
  %487 = vst [vmem:[#allocation2 + $0x98] sm:$0xff] %v455
  %488 = vst [vmem:[#allocation2 + $0xa0] sm:$0xff] %v456
  %489 = vst [vmem:[#allocation2 + $0xa8] sm:$0xff] %v457
  %490 = vst [vmem:[#allocation2 + $0xb0] sm:$0xff] %v458
  %491 = vst [vmem:[#allocation2 + $0xb8] sm:$0xff] %v459
  %492 = vst [vmem:[#allocation2 + $0xc0] sm:$0xff] %v460
  %493 = vst [vmem:[#allocation2 + $0xc8] sm:$0xff] %v461
  %494 = vst [vmem:[#allocation2 + $0xd0] sm:$0xff] %v462
  %495 = vst [vmem:[#allocation2 + $0xd8] sm:$0xff] %v463
  %496 = vst [vmem:[#allocation2 + $0xe0] sm:$0xff] %v464
  %497 = vst [vmem:[#allocation2 + $0xe8] sm:$0xff] %v465
  %498 = vst [vmem:[#allocation2 + $0xf0] sm:$0xff] %v466
  %499 = vst [vmem:[#allocation2 + $0xf8] sm:$0xff] %v467
  // Predicated region
  $region18: #{fanogan_forward.19} parent=0 // pred_check
    %p500 = pneg %p15
  $region19: #{fanogan_forward.19} parent=0 // pred_check_branch
    %502 = sbr.rel (%p500) target = $region21
  $region20: #{fanogan_forward.19} parent=0 // pred_region
    %v503 = vld [vmem:[#allocation2] sm:$0xff]
    %v504 = vld [vmem:[#allocation2 + $0x8] sm:$0xff]
    %v505 = vld [vmem:[#allocation2 + $0x10] sm:$0xff]
    %v506 = vld [vmem:[#allocation2 + $0x18] sm:$0xff]
    %v507 = vld [vmem:[#allocation2 + $0x20] sm:$0xff]
    %v508 = vld [vmem:[#allocation2 + $0x28] sm:$0xff]
    %v509 = vld [vmem:[#allocation2 + $0x30] sm:$0xff]
    %v510 = vld [vmem:[#allocation2 + $0x38] sm:$0xff]
    %v511 = vld [vmem:[#allocation2 + $0x40] sm:$0xff]
    %v512 = vld [vmem:[#allocation2 + $0x48] sm:$0xff]
    %v513 = vld [vmem:[#allocation2 + $0x50] sm:$0xff]
    %v514 = vld [vmem:[#allocation2 + $0x58] sm:$0xff]
    %v515 = vld [vmem:[#allocation2 + $0x60] sm:$0xff]
    %v516 = vld [vmem:[#allocation2 + $0x68] sm:$0xff]
    %v517 = vld [vmem:[#allocation2 + $0x70] sm:$0xff]
    %v518 = vld [vmem:[#allocation2 + $0x78] sm:$0xff]
    %v519 = vld [vmem:[#allocation2 + $0x80] sm:$0xff]
    %v520 = vld [vmem:[#allocation2 + $0x88] sm:$0xff]
    %v521 = vld [vmem:[#allocation2 + $0x90] sm:$0xff]
    %v522 = vld [vmem:[#allocation2 + $0x98] sm:$0xff]
    %v523 = vld [vmem:[#allocation2 + $0xa0] sm:$0xff]
    %v524 = vld [vmem:[#allocation2 + $0xa8] sm:$0xff]
    %v525 = vld [vmem:[#allocation2 + $0xb0] sm:$0xff]
    %v526 = vld [vmem:[#allocation2 + $0xb8] sm:$0xff]
    %v527 = vld [vmem:[#allocation2 + $0xc0] sm:$0xff]
    %v528 = vld [vmem:[#allocation2 + $0xc8] sm:$0xff]
    %v529 = vld [vmem:[#allocation2 + $0xd0] sm:$0xff]
    %v530 = vld [vmem:[#allocation2 + $0xd8] sm:$0xff]
    %v531 = vld [vmem:[#allocation2 + $0xe0] sm:$0xff]
    %v532 = vld [vmem:[#allocation2 + $0xe8] sm:$0xff]
    %v533 = vld [vmem:[#allocation2 + $0xf0] sm:$0xff]
    %v534 = vld [vmem:[#allocation2 + $0xf8] sm:$0xff]
    %v535 = vld [vmem:[%s2] sm:$0x1]
    %v537 = vlaneseq
    %v538 = vshrl.u32 %v537, 7
    %v539 = vsub.s32 0, %v538
    %v540 = vrot.slane %v535, %v539
    %v542 = vadd.f32 %v503, %v540
    %v543 = vadd.f32 %v504, %v540
    %v544 = vadd.f32 %v505, %v540
    %v545 = vadd.f32 %v506, %v540
    %v546 = vadd.f32 %v507, %v540
    %v547 = vadd.f32 %v508, %v540
    %v548 = vadd.f32 %v509, %v540
    %v549 = vadd.f32 %v510, %v540
    %v550 = vadd.f32 %v511, %v540
    %v551 = vadd.f32 %v512, %v540
    %v552 = vadd.f32 %v513, %v540
    %v553 = vadd.f32 %v514, %v540
    %v554 = vadd.f32 %v515, %v540
    %v555 = vadd.f32 %v516, %v540
    %v556 = vadd.f32 %v517, %v540
    %v557 = vadd.f32 %v518, %v540
    %v558 = vadd.f32 %v519, %v540
    %v559 = vadd.f32 %v520, %v540
    %v560 = vadd.f32 %v521, %v540
    %v561 = vadd.f32 %v522, %v540
    %v562 = vadd.f32 %v523, %v540
    %v563 = vadd.f32 %v524, %v540
    %v564 = vadd.f32 %v525, %v540
    %v565 = vadd.f32 %v526, %v540
    %v566 = vadd.f32 %v527, %v540
    %v567 = vadd.f32 %v528, %v540
    %v568 = vadd.f32 %v529, %v540
    %v569 = vadd.f32 %v530, %v540
    %v570 = vadd.f32 %v531, %v540
    %v571 = vadd.f32 %v532, %v540
    %v572 = vadd.f32 %v533, %v540
    %v573 = vadd.f32 %v534, %v540
    %vm574 = vcmp.gt.f32.partialorder %v542, 0.0
    %vm575 = vcmp.gt.f32.partialorder %v543, 0.0
    %vm576 = vcmp.gt.f32.partialorder %v544, 0.0
    %vm577 = vcmp.gt.f32.partialorder %v545, 0.0
    %vm578 = vcmp.gt.f32.partialorder %v546, 0.0
    %vm579 = vcmp.gt.f32.partialorder %v547, 0.0
    %vm580 = vcmp.gt.f32.partialorder %v548, 0.0
    %vm581 = vcmp.gt.f32.partialorder %v549, 0.0
    %vm582 = vcmp.gt.f32.partialorder %v550, 0.0
    %vm583 = vcmp.gt.f32.partialorder %v551, 0.0
    %vm584 = vcmp.gt.f32.partialorder %v552, 0.0
    %vm585 = vcmp.gt.f32.partialorder %v553, 0.0
    %vm586 = vcmp.gt.f32.partialorder %v554, 0.0
    %vm587 = vcmp.gt.f32.partialorder %v555, 0.0
    %vm588 = vcmp.gt.f32.partialorder %v556, 0.0
    %vm589 = vcmp.gt.f32.partialorder %v557, 0.0
    %vm590 = vcmp.gt.f32.partialorder %v558, 0.0
    %vm591 = vcmp.gt.f32.partialorder %v559, 0.0
    %vm592 = vcmp.gt.f32.partialorder %v560, 0.0
    %vm593 = vcmp.gt.f32.partialorder %v561, 0.0
    %vm594 = vcmp.gt.f32.partialorder %v562, 0.0
    %vm595 = vcmp.gt.f32.partialorder %v563, 0.0
    %vm596 = vcmp.gt.f32.partialorder %v564, 0.0
    %vm597 = vcmp.gt.f32.partialorder %v565, 0.0
    %vm598 = vcmp.gt.f32.partialorder %v566, 0.0
    %vm599 = vcmp.gt.f32.partialorder %v567, 0.0
    %vm600 = vcmp.gt.f32.partialorder %v568, 0.0
    %vm601 = vcmp.gt.f32.partialorder %v569, 0.0
    %vm602 = vcmp.gt.f32.partialorder %v570, 0.0
    %vm603 = vcmp.gt.f32.partialorder %v571, 0.0
    %vm604 = vcmp.gt.f32.partialorder %v572, 0.0
    %vm605 = vcmp.gt.f32.partialorder %v573, 0.0
    %v606 = vmul.f32 %v542, 0.2
    %v607 = vmul.f32 %v543, 0.2
    %v608 = vmul.f32 %v544, 0.2
    %v609 = vmul.f32 %v545, 0.2
    %v610 = vmul.f32 %v546, 0.2
    %v611 = vmul.f32 %v547, 0.2
    %v612 = vmul.f32 %v548, 0.2
    %v613 = vmul.f32 %v549, 0.2
    %v614 = vmul.f32 %v550, 0.2
    %v615 = vmul.f32 %v551, 0.2
    %v616 = vmul.f32 %v552, 0.2
    %v617 = vmul.f32 %v553, 0.2
    %v618 = vmul.f32 %v554, 0.2
    %v619 = vmul.f32 %v555, 0.2
    %v620 = vmul.f32 %v556, 0.2
    %v621 = vmul.f32 %v557, 0.2
    %v622 = vmul.f32 %v558, 0.2
    %v623 = vmul.f32 %v559, 0.2
    %v624 = vmul.f32 %v560, 0.2
    %v625 = vmul.f32 %v561, 0.2
    %v626 = vmul.f32 %v562, 0.2
    %v627 = vmul.f32 %v563, 0.2
    %v628 = vmul.f32 %v564, 0.2
    %v629 = vmul.f32 %v565, 0.2
    %v630 = vmul.f32 %v566, 0.2
    %v631 = vmul.f32 %v567, 0.2
    %v632 = vmul.f32 %v568, 0.2
    %v633 = vmul.f32 %v569, 0.2
    %v634 = vmul.f32 %v570, 0.2
    %v635 = vmul.f32 %v571, 0.2
    %v636 = vmul.f32 %v572, 0.2
    %v637 = vmul.f32 %v573, 0.2
    %v638 = vsel %vm574, %v542, %v606
    %v639 = vsel %vm575, %v543, %v607
    %v640 = vsel %vm576, %v544, %v608
    %v641 = vsel %vm577, %v545, %v609
    %v642 = vsel %vm578, %v546, %v610
    %v643 = vsel %vm579, %v547, %v611
    %v644 = vsel %vm580, %v548, %v612
    %v645 = vsel %vm581, %v549, %v613
    %v646 = vsel %vm582, %v550, %v614
    %v647 = vsel %vm583, %v551, %v615
    %v648 = vsel %vm584, %v552, %v616
    %v649 = vsel %vm585, %v553, %v617
    %v650 = vsel %vm586, %v554, %v618
    %v651 = vsel %vm587, %v555, %v619
    %v652 = vsel %vm588, %v556, %v620
    %v653 = vsel %vm589, %v557, %v621
    %v654 = vsel %vm590, %v558, %v622
    %v655 = vsel %vm591, %v559, %v623
    %v656 = vsel %vm592, %v560, %v624
    %v657 = vsel %vm593, %v561, %v625
    %v658 = vsel %vm594, %v562, %v626
    %v659 = vsel %vm595, %v563, %v627
    %v660 = vsel %vm596, %v564, %v628
    %v661 = vsel %vm597, %v565, %v629
    %v662 = vsel %vm598, %v566, %v630
    %v663 = vsel %vm599, %v567, %v631
    %v664 = vsel %vm600, %v568, %v632
    %v665 = vsel %vm601, %v569, %v633
    %v666 = vsel %vm602, %v570, %v634
    %v667 = vsel %vm603, %v571, %v635
    %v668 = vsel %vm604, %v572, %v636
    %v669 = vsel %vm605, %v573, %v637
    %670 = vst [vmem:[%s3] sm:$0xff] %v638
    %671 = vst [vmem:[%s3 + $0x8] sm:$0xff] %v639
    %672 = vst [vmem:[%s3 + $0x10] sm:$0xff] %v640
    %673 = vst [vmem:[%s3 + $0x18] sm:$0xff] %v641
    %674 = vst [vmem:[%s3 + $0x20] sm:$0xff] %v642
    %675 = vst [vmem:[%s3 + $0x28] sm:$0xff] %v643
    %676 = vst [vmem:[%s3 + $0x30] sm:$0xff] %v644
    %677 = vst [vmem:[%s3 + $0x38] sm:$0xff] %v645
    %678 = vst [vmem:[%s3 + $0x40] sm:$0xff] %v646
    %679 = vst [vmem:[%s3 + $0x48] sm:$0xff] %v647
    %680 = vst [vmem:[%s3 + $0x50] sm:$0xff] %v648
    %681 = vst [vmem:[%s3 + $0x58] sm:$0xff] %v649
    %682 = vst [vmem:[%s3 + $0x60] sm:$0xff] %v650
    %683 = vst [vmem:[%s3 + $0x68] sm:$0xff] %v651
    %684 = vst [vmem:[%s3 + $0x70] sm:$0xff] %v652
    %685 = vst [vmem:[%s3 + $0x78] sm:$0xff] %v653
    %686 = vst [vmem:[%s3 + $0x80] sm:$0xff] %v654
    %687 = vst [vmem:[%s3 + $0x88] sm:$0xff] %v655
    %688 = vst [vmem:[%s3 + $0x90] sm:$0xff] %v656
    %689 = vst [vmem:[%s3 + $0x98] sm:$0xff] %v657
    %690 = vst [vmem:[%s3 + $0xa0] sm:$0xff] %v658
    %691 = vst [vmem:[%s3 + $0xa8] sm:$0xff] %v659
    %692 = vst [vmem:[%s3 + $0xb0] sm:$0xff] %v660
    %693 = vst [vmem:[%s3 + $0xb8] sm:$0xff] %v661
    %694 = vst [vmem:[%s3 + $0xc0] sm:$0xff] %v662
    %695 = vst [vmem:[%s3 + $0xc8] sm:$0xff] %v663
    %696 = vst [vmem:[%s3 + $0xd0] sm:$0xff] %v664
    %697 = vst [vmem:[%s3 + $0xd8] sm:$0xff] %v665
    %698 = vst [vmem:[%s3 + $0xe0] sm:$0xff] %v666
    %699 = vst [vmem:[%s3 + $0xe8] sm:$0xff] %v667
    %700 = vst [vmem:[%s3 + $0xf0] sm:$0xff] %v668
    %701 = vst [vmem:[%s3 + $0xf8] sm:$0xff] %v669
  $region21: #{fanogan_forward.19} parent=0 // pred_fallthru
    _
  // Predicated region
  $region22: #{fanogan_forward.19} parent=0 // pred_check
    _
  $region23: #{fanogan_forward.19} parent=0 // pred_check_branch
    %703 = sbr.rel (0) target = $region25
  $region24: #{fanogan_forward.19} parent=0 // pred_region
    _
  $region25: #{fanogan_forward.19} parent=0 // pred_fallthru
    _
  // Predicated region
  $region26: #{fanogan_forward.19} parent=0 // pred_check
    _
  $region27: #{fanogan_forward.19} parent=0 // pred_check_branch
    %705 = sbr.rel (0) target = $region29
  $region28: #{fanogan_forward.19} parent=0 // pred_region
    _
  $region29: #{fanogan_forward.19} parent=0 // pred_fallthru
    _

// kernel: fanogan_forward.21
$region0: #{fanogan_forward.21}
  #allocation0 [shape = 'u32[]', space=smem, size = 0x4, offset = 0x4, fixed_abs, tag = 'smem constant byte address 0x4 - core index']
  #allocation1 [shape = 'u32[144,128]{1,0:T(1,128)}', space=vmem, size = 0x12000, scoped, tag = 'internal scratch']
  #allocation2 [shape = 'f32[16,128]{1,0:T(8,128)}', space=vmem, size = 0x2000, scoped, tag = 'scratch operand']
  %s0 = inlined_call_operand.vmem [shape: bf16[16,128], index: 0, kind: input, shape index: {}]
  %s1 = inlined_call_operand.vmem [shape: bf16[128,128], index: 1, kind: input, shape index: {}]
  %s2 = inlined_call_operand.vmem [shape: f32[1,128], index: 2, kind: input, shape index: {}]
  %s3 = inlined_call_operand.vmem [shape: f32[16,128], index: 3, kind: output, shape index: {}]
  %s4 = sld [smem:[#allocation0]]
  $region30: #{fanogan_forward.21} parent=0
    _
  %s6 = ssub.s32 1, %s4
  %s7 = scalar_select 0, %s6, %s4
  // Predicated region
  $region2: #{fanogan_forward.21} parent=0 // pred_check
    _
  $region3: #{fanogan_forward.21} parent=0 // pred_check_branch
    %9 = sbr.rel (0) target = $region5
  $region4: #{fanogan_forward.21} parent=0 // pred_region
    _
  $region5: #{fanogan_forward.21} parent=0 // pred_fallthru
    _
  // Predicated region
  $region6: #{fanogan_forward.21} parent=0 // pred_check
    _
  $region7: #{fanogan_forward.21} parent=0 // pred_check_branch
    %11 = sbr.rel (0) target = $region9
  $region8: #{fanogan_forward.21} parent=0 // pred_region
    _
  $region9: #{fanogan_forward.21} parent=0 // pred_fallthru
    _
  // Predicated region
  $region10: #{fanogan_forward.21} parent=0 // pred_check
    _
  $region11: #{fanogan_forward.21} parent=0 // pred_check_branch
    %13 = sbr.rel (0) target = $region13
  $region12: #{fanogan_forward.21} parent=0 // pred_region
    _
  $region13: #{fanogan_forward.21} parent=0 // pred_fallthru
    _
  %p15 = scmp.eq.s32.totalorder 0, 0
  // Predicated region
  $region14: #{fanogan_forward.21} parent=0 // pred_check
    %p16 = pneg %p15
  $region15: #{fanogan_forward.21} parent=0 // pred_check_branch
    %18 = sbr.rel (%p16) target = $region17
  $region16: #{fanogan_forward.21} parent=0 // pred_region
    %19 = vst [vmem:[#allocation2] sm:$0xff] 0.0
    %20 = vst [vmem:[#allocation2 + $0x8] sm:$0xff] 0.0
  $region17: #{fanogan_forward.21} parent=0 // pred_fallthru
    _
  %v21 = vld [vmem:[#allocation2] sm:$0xff]
  %v22 = vld [vmem:[#allocation2 + $0x8] sm:$0xff]
  %v23 = vld [vmem:[%s0] sm:$0xf]
  %v24 = vld [vmem:[%s0 + $0x4] sm:$0xf]
  %v25 = vld [vmem:[%s1] sm:$0xf]
  %v26 = vld [vmem:[%s1 + $0x4] sm:$0xf]
  %v27 = vld [vmem:[%s1 + $0x8] sm:$0xf]
  %v28 = vld [vmem:[%s1 + $0xc] sm:$0xf]
  %v29 = vld [vmem:[%s1 + $0x10] sm:$0xf]
  %v30 = vld [vmem:[%s1 + $0x14] sm:$0xf]
  %v31 = vld [vmem:[%s1 + $0x18] sm:$0xf]
  %v32 = vld [vmem:[%s1 + $0x1c] sm:$0xf]
  %v33 = vld [vmem:[%s1 + $0x20] sm:$0xf]
  %v34 = vld [vmem:[%s1 + $0x24] sm:$0xf]
  %v35 = vld [vmem:[%s1 + $0x28] sm:$0xf]
  %v36 = vld [vmem:[%s1 + $0x2c] sm:$0xf]
  %v37 = vld [vmem:[%s1 + $0x30] sm:$0xf]
  %v38 = vld [vmem:[%s1 + $0x34] sm:$0xf]
  %v39 = vld [vmem:[%s1 + $0x38] sm:$0xf]
  %v40 = vld [vmem:[%s1 + $0x3c] sm:$0xf]
  %v43 = vunpack.c.l.b16 %v23
  %v44 = vunpack.c.l.b16 %v24
  %v45 = vpack.c.b16 %v44, %v43
  %v63 = vunpack.c.l.b16 %v25
  %v64 = vunpack.c.l.b16 %v26
  %v65 = vunpack.c.l.b16 %v27
  %v66 = vunpack.c.l.b16 %v28
  %v67 = vunpack.c.l.b16 %v29
  %v68 = vunpack.c.l.b16 %v30
  %v69 = vunpack.c.l.b16 %v31
  %v70 = vunpack.c.l.b16 %v32
  %v71 = vunpack.c.l.b16 %v33
  %v72 = vunpack.c.l.b16 %v34
  %v73 = vunpack.c.l.b16 %v35
  %v74 = vunpack.c.l.b16 %v36
  %v75 = vunpack.c.l.b16 %v37
  %v76 = vunpack.c.l.b16 %v38
  %v77 = vunpack.c.l.b16 %v39
  %v78 = vunpack.c.l.b16 %v40
  %v79 = vpack.c.b16 %v64, %v63
  %v80 = vpack.c.b16 %v66, %v65
  %v81 = vpack.c.b16 %v68, %v67
  %v82 = vpack.c.b16 %v70, %v69
  %v83 = vpack.c.b16 %v72, %v71
  %v84 = vpack.c.b16 %v74, %v73
  %v85 = vpack.c.b16 %v76, %v75
  %v86 = vpack.c.b16 %v78, %v77
  %95 = vmatprep.subr.bf16.mxu0 0
  %96 = vmatpush1.bf16.msra.mxu0 %v79
  %97 = vmatprep.subr.bf16.mxu0 0
  %98 = vmatpush1.bf16.msra.mxu0 %v80
  %99 = vmatprep.subr.bf16.mxu0 0
  %100 = vmatpush1.bf16.msra.mxu0 %v81
  %101 = vmatprep.subr.bf16.mxu0 0
  %102 = vmatpush1.bf16.msra.mxu0 %v82
  %103 = vmatprep.subr.bf16.mxu0 0
  %104 = vmatpush1.bf16.msra.mxu0 %v83
  %105 = vmatprep.subr.bf16.mxu0 0
  %106 = vmatpush1.bf16.msra.mxu0 %v84
  %107 = vmatprep.subr.bf16.mxu0 0
  %108 = vmatpush1.bf16.msra.mxu0 %v85
  %109 = vmatprep.subr.bf16.mxu0 0
  %110 = vmatpush1.bf16.msra.mxu0 %v86
  %111 = vmatprep.subr.bf16.mxu0 0
  %112 = vmatpush1.bf16.msra.mxu0 0
  %113 = vmatprep.subr.bf16.mxu0 0
  %114 = vmatpush1.bf16.msra.mxu0 0
  %115 = vmatprep.subr.bf16.mxu0 0
  %116 = vmatpush1.bf16.msra.mxu0 0
  %117 = vmatprep.subr.bf16.mxu0 0
  %118 = vmatpush1.bf16.msra.mxu0 0
  %119 = vmatprep.subr.bf16.mxu0 0
  %120 = vmatpush1.bf16.msra.mxu0 0
  %121 = vmatprep.subr.bf16.mxu0 0
  %122 = vmatpush1.bf16.msra.mxu0 0
  %123 = vmatprep.subr.bf16.mxu0 0
  %124 = vmatpush1.bf16.msra.mxu0 0
  %125 = vmatprep.subr.bf16.mxu0 0
  %126 = vmatpush1.bf16.msra.mxu0 0
  %127 = vmatprep.mubr.bf16.mxu0 0
  %128 = vmatmul.mubr.bf16.gmra.mrb[0].mxu0 %v45
  %v129 = vpop.f32.mrb[0].mxu0
  %v130 = vadd.f32 0.0, %v129
  %v131 = vpop.f32.mrb[0].mxu0
  %v132 = vpop.f32.mrb[0].mxu0
  %v133 = vadd.f32 0.0, %v132
  %v134 = vpop.f32.mrb[0].mxu0
  %135 = vdwg.mxu0
  %v136 = vadd.f32 %v21, %v130
  %v137 = vadd.f32 %v22, %v133
  %138 = vst [vmem:[#allocation2] sm:$0xff] %v136
  %139 = vst [vmem:[#allocation2 + $0x8] sm:$0xff] %v137
  // Predicated region
  $region18: #{fanogan_forward.21} parent=0 // pred_check
    %p140 = pneg %p15
  $region19: #{fanogan_forward.21} parent=0 // pred_check_branch
    %142 = sbr.rel (%p140) target = $region21
  $region20: #{fanogan_forward.21} parent=0 // pred_region
    %v143 = vld [vmem:[#allocation2] sm:$0xff]
    %v144 = vld [vmem:[#allocation2 + $0x8] sm:$0xff]
    %v145 = vld [vmem:[%s2] sm:$0x1]
    %v147 = vlaneseq
    %v148 = vshrl.u32 %v147, 7
    %v149 = vsub.s32 0, %v148
    %v150 = vrot.slane %v145, %v149
    %v152 = vadd.f32 %v143, %v150
    %v153 = vadd.f32 %v144, %v150
    %vm154 = vcmp.gt.f32.partialorder %v152, 0.0
    %vm155 = vcmp.gt.f32.partialorder %v153, 0.0
    %v156 = vmul.f32 %v152, 0.2
    %v157 = vmul.f32 %v153, 0.2
    %v158 = vsel %vm154, %v152, %v156
    %v159 = vsel %vm155, %v153, %v157
    %160 = vst [vmem:[%s3] sm:$0xff] %v158
    %161 = vst [vmem:[%s3 + $0x8] sm:$0xff] %v159
  $region21: #{fanogan_forward.21} parent=0 // pred_fallthru
    _
  // Predicated region
  $region22: #{fanogan_forward.21} parent=0 // pred_check
    _
  $region23: #{fanogan_forward.21} parent=0 // pred_check_branch
    %163 = sbr.rel (0) target = $region25
  $region24: #{fanogan_forward.21} parent=0 // pred_region
    _
  $region25: #{fanogan_forward.21} parent=0 // pred_fallthru
    _
  // Predicated region
  $region26: #{fanogan_forward.21} parent=0 // pred_check
    _
  $region27: #{fanogan_forward.21} parent=0 // pred_check_branch
    %165 = sbr.rel (0) target = $region29
  $region28: #{fanogan_forward.21} parent=0 // pred_region
    _
  $region29: #{fanogan_forward.21} parent=0 // pred_fallthru
    _

</llo_original>
